<compile_context>
chip_gen: v7x
topology: tpu7x:2x2x1
jax: 0.10.0
libtpu: 0.0.40
codegen_flags: <defaults>
</compile_context>

<pallas_src>
import numpy as np

import jax
import jax.numpy as jnp
from jax.experimental import pallas as pl
from jax.experimental.pallas import tpu as pltpu


# ---------------------------------------------------------------------------
# One-time weight preparation (outside jit): fold conv weights into per-row
# "filter" matmul matrices, build 0/1 pooling selectors, pre-permute FC weights.
# ---------------------------------------------------------------------------
def _conv_row_filter(w, w_in):
    """w: [OC, C, KH, KW] -> R: [KH, C*w_in, OC*ow] with ow = w_in - KW + 1.

    conv_out[i, oc*ow + j] = sum_ki slab_ki @ R[ki], where
    slab_ki[i, c*w_in + col] = x[c, i + ki, col]  (valid conv, stride 1).
    """
    oc, cin, kh, kw = w.shape
    ow = w_in - kw + 1
    r = np.zeros((kh, cin * w_in, oc * ow), np.float32)
    for ki in range(kh):
        for c in range(cin):
            for kj in range(kw):
                for j in range(ow):
                    r[ki, c * w_in + j + kj, j::ow] = w[:, c, ki, kj]
    return r


def _pool_row_selectors(h):
    oh = h // 2
    r0 = np.zeros((oh, h), np.float32)
    r1 = np.zeros((oh, h), np.float32)
    r0[np.arange(oh), 2 * np.arange(oh)] = 1.0
    r1[np.arange(oh), 2 * np.arange(oh) + 1] = 1.0
    return r0, r1


def _pool_col_selectors(c, w):
    ow = w // 2
    c0 = np.zeros((c * w, c * ow), np.float32)
    c1 = np.zeros((c * w, c * ow), np.float32)
    for ch in range(c):
        c0[ch * w + 2 * np.arange(ow), ch * ow + np.arange(ow)] = 1.0
        c1[ch * w + 2 * np.arange(ow) + 1, ch * ow + np.arange(ow)] = 1.0
    return c0, c1


_CONST_ORDER = (
    "r1", "b1row", "p1_r0", "p1_r1", "p1_c0", "p1_c1",
    "r2", "b2row", "p2_r0", "p2_r1", "p2_c0", "p2_c1",
    "w1s", "bf1", "w2t", "bf2", "w3t", "bf3",
)


def prepare_params(params):
    """Convert PyTorch-layout parameters into kernel-ready constant matrices."""
    g = lambda k: np.asarray(jax.device_get(params[k]), np.float32)
    c1w, c1b = g("conv1_w"), g("conv1_b")   # [6,3,5,5], [6]
    c2w, c2b = g("conv2_w"), g("conv2_b")   # [16,6,5,5], [16]
    f1w, f1b = g("fc1_w"), g("fc1_b")       # [120,400], [120]
    f2w, f2b = g("fc2_w"), g("fc2_b")       # [84,120], [84]
    f3w, f3b = g("fc3_w"), g("fc3_b")       # [NC,84], [NC]

    w_img = 32                               # pinned by fc1 = 16*5*5 (3x32x32 input)
    oc1, cin, kh, kwid = c1w.shape           # 6, 3, 5, 5
    oh1 = ow1 = w_img - kwid + 1             # 28
    pw1 = oh1 // 2                           # 14
    oc2 = c2w.shape[0]                       # 16
    oh2 = ow2 = pw1 - kwid + 1               # 10
    ph2 = pw2 = oh2 // 2                     # 5

    r1 = _conv_row_filter(c1w, w_img).reshape(kh, cin, w_img, oc1 * ow1)  # [5,3,32,168]
    r2 = _conv_row_filter(c2w, pw1)                                       # [5,84,160]
    p1_r0, p1_r1 = _pool_row_selectors(oh1)                               # [14,28]
    p1_c0, p1_c1 = _pool_col_selectors(oc1, ow1)                          # [168,84]
    p2_r0, p2_r1 = _pool_row_selectors(oh2)                               # [5,10]
    p2_c0, p2_c1 = _pool_col_selectors(oc2, ow2)                          # [160,80]

    # fc1 consumes pooled activations laid out as [h, c*w]; fold PyTorch's (C,H,W)
    # flatten order into a [ph2, oc2*pw2, 120] weight stack.
    w1s = (f1w.reshape(-1, oc2, ph2, pw2)
              .transpose(2, 1, 3, 0)
              .reshape(ph2, oc2 * pw2, -1))                               # [5,80,120]

    prep = {
        "r1": r1,
        "b1row": np.repeat(c1b, ow1)[None, :],                            # [1,168]
        "p1_r0": p1_r0, "p1_r1": p1_r1, "p1_c0": p1_c0, "p1_c1": p1_c1,
        "r2": r2,
        "b2row": np.repeat(c2b, ow2)[None, :],                            # [1,160]
        "p2_r0": p2_r0, "p2_r1": p2_r1, "p2_c0": p2_c0, "p2_c1": p2_c1,
        "w1s": w1s, "bf1": f1b[None, :],
        "w2t": f2w.T.copy(), "bf2": f2b[None, :],
        "w3t": f3w.T.copy(), "bf3": f3b[None, :],
    }
    return {k: jnp.asarray(v, jnp.float32) for k, v in prep.items()}


# ---------------------------------------------------------------------------
# Fused Pallas kernel: one grid step == one image, everything stays in VMEM.
# ---------------------------------------------------------------------------
def _cnn_cifar_kernel(
    x_ref,                                   # [1, 3, 32, 32] one image (NCHW)
    r1_ref, b1_ref,                          # conv1 row filters / bias row
    p1r0_ref, p1r1_ref, p1c0_ref, p1c1_ref,  # pool1 selectors
    r2_ref, b2_ref,                          # conv2 row filters / bias row
    p2r0_ref, p2r1_ref, p2c0_ref, p2c1_ref,  # pool2 selectors
    w1_ref, bf1_ref, w2_ref, bf2_ref, w3_ref, bf3_ref,
    o_ref,                                   # [1, 1, num_classes]
    p1_scr, p2_scr,                          # VMEM scratch for pooled activations
):
    f32 = jnp.float32
    kh, cin, _, n1 = r1_ref.shape
    oh1 = x_ref.shape[2] - kh + 1            # 28

    # conv1 + bias + ReLU  ->  [28, 6*28]  (lane-dense: channels on columns)
    acc1 = jnp.zeros((oh1, n1), f32)
    for ki in range(kh):
        for c in range(cin):
            acc1 = acc1 + jnp.dot(x_ref[0, c, ki:ki + oh1, :], r1_ref[ki, c],
                                  preferred_element_type=f32)
    h1 = jnp.maximum(acc1 + b1_ref[...], 0.0)

    # maxpool 2x2  ->  [14, 6*14]
    m1 = jnp.maximum(jnp.dot(p1r0_ref[...], h1, preferred_element_type=f32),
                     jnp.dot(p1r1_ref[...], h1, preferred_element_type=f32))
    p1_scr[...] = jnp.maximum(
        jnp.dot(m1, p1c0_ref[...], preferred_element_type=f32),
        jnp.dot(m1, p1c1_ref[...], preferred_element_type=f32))

    # conv2 + bias + ReLU  ->  [10, 16*10]
    kh2, _, n2 = r2_ref.shape
    oh2 = p1_scr.shape[0] - kh2 + 1          # 10
    acc2 = jnp.zeros((oh2, n2), f32)
    for ki in range(kh2):
        acc2 = acc2 + jnp.dot(p1_scr[ki:ki + oh2, :], r2_ref[ki],
                              preferred_element_type=f32)
    h2 = jnp.maximum(acc2 + b2_ref[...], 0.0)

    # maxpool 2x2  ->  [5, 16*5]
    m2 = jnp.maximum(jnp.dot(p2r0_ref[...], h2, preferred_element_type=f32),
                     jnp.dot(p2r1_ref[...], h2, preferred_element_type=f32))
    p2_scr[...] = jnp.maximum(
        jnp.dot(m2, p2c0_ref[...], preferred_element_type=f32),
        jnp.dot(m2, p2c1_ref[...], preferred_element_type=f32))

    # fc1 + ReLU: contract (h, c*w) as ph2 row-matmuls (PyTorch flatten order is
    # already folded into w1_ref), then fc2 + ReLU, fc3.
    ph2 = w1_ref.shape[0]
    f1 = jnp.zeros((1, w1_ref.shape[2]), f32)
    for hh in range(ph2):
        f1 = f1 + jnp.dot(p2_scr[hh:hh + 1, :], w1_ref[hh],
                          preferred_element_type=f32)
    f1 = jnp.maximum(f1 + bf1_ref[...], 0.0)
    f2 = jnp.maximum(jnp.dot(f1, w2_ref[...], preferred_element_type=f32)
                     + bf2_ref[...], 0.0)
    o_ref[0] = (jnp.dot(f2, w3_ref[...], preferred_element_type=f32)
                + bf3_ref[...]).astype(o_ref.dtype)


def cnn_cifar_forward(prep, x):
    """x: [B, 3, 32, 32] float32 -> logits [B, num_classes]."""
    b = x.shape[0]
    nc = prep["bf3"].shape[1]
    consts = [prep[k] for k in _CONST_ORDER]

    def _const_spec(a):
        ndim = a.ndim

        def index_map(i):
            return (0,) * ndim

        return pl.BlockSpec(a.shape, index_map)

    in_specs = [pl.BlockSpec((1,) + tuple(x.shape[1:]), lambda i: (i, 0, 0, 0))]
    in_specs += [_const_spec(a) for a in consts]

    out = pl.pallas_call(
        _cnn_cifar_kernel,
        out_shape=jax.ShapeDtypeStruct((b, 1, nc), jnp.float32),
        grid_spec=pltpu.PrefetchScalarGridSpec(
            num_scalar_prefetch=0,
            grid=(b,),
            in_specs=in_specs,
            out_specs=pl.BlockSpec((1, 1, nc), lambda i: (i, 0, 0)),
            scratch_shapes=[
                pltpu.VMEM((prep["p1_r0"].shape[0], prep["p1_c0"].shape[1]),
                           jnp.float32),
                pltpu.VMEM((prep["p2_r0"].shape[0], prep["p2_c0"].shape[1]),
                           jnp.float32),
            ],
        ),
        compiler_params=pltpu.CompilerParams(
            dimension_semantics=("parallel",)),
    )(x, *consts)
    return out.reshape(b, nc)


# ---------------------------------------------------------------------------
# Params, pure-JAX reference, and self-test.
# ---------------------------------------------------------------------------
def init_params(key, num_classes=10):
    ks = jax.random.split(key, 10)
    s = 0.05
    return {
        "conv1_w": s * jax.random.normal(ks[0], (6, 3, 5, 5), jnp.float32),
        "conv1_b": s * jax.random.normal(ks[1], (6,), jnp.float32),
        "conv2_w": s * jax.random.normal(ks[2], (16, 6, 5, 5), jnp.float32),
        "conv2_b": s * jax.random.normal(ks[3], (16,), jnp.float32),
        "fc1_w": s * jax.random.normal(ks[4], (120, 16 * 5 * 5), jnp.float32),
        "fc1_b": s * jax.random.normal(ks[5], (120,), jnp.float32),
        "fc2_w": s * jax.random.normal(ks[6], (84, 120), jnp.float32),
        "fc2_b": s * jax.random.normal(ks[7], (84,), jnp.float32),
        "fc3_w": s * jax.random.normal(ks[8], (num_classes, 84), jnp.float32),
        "fc3_b": s * jax.random.normal(ks[9], (num_classes,), jnp.float32),
    }


def reference_forward(params, x):
    """Pure-JAX (XLA) reference matching the PyTorch CNNCifar module."""
    def conv_relu(h, w, b):
        y = jax.lax.conv_general_dilated(
            h, w, window_strides=(1, 1), padding="VALID",
            dimension_numbers=("NCHW", "OIHW", "NCHW"))
        return jax.nn.relu(y + b[None, :, None, None])

    def pool(h):
        return jax.lax.reduce_window(h, -jnp.inf, jax.lax.max,
                                     (1, 1, 2, 2), (1, 1, 2, 2), "VALID")

    h = pool(conv_relu(x, params["conv1_w"], params["conv1_b"]))
    h = pool(conv_relu(h, params["conv2_w"], params["conv2_b"]))
    h = h.reshape(h.shape[0], -1)
    h = jax.nn.relu(h @ params["fc1_w"].T + params["fc1_b"])
    h = jax.nn.relu(h @ params["fc2_w"].T + params["fc2_b"])
    return h @ params["fc3_w"].T + params["fc3_b"]


if __name__ == "__main__":
    key = jax.random.PRNGKey(0)
    k_x, k_p = jax.random.split(key)
    # fc1 = 16*5*5 pins the input to 3x32x32 CIFAR images; batch = 2.
    x = jax.random.normal(k_x, (2, 3, 32, 32), jnp.float32)
    params = init_params(k_p, num_classes=10)

    prep = prepare_params(params)           # one-time weight prep, outside jit
    fwd = jax.jit(cnn_cifar_forward)
    out = jax.block_until_ready(fwd(prep, x))
    assert out.shape == (2, 10), out.shape

    ref = jax.block_until_ready(reference_forward(params, x))
    np.testing.assert_allclose(np.asarray(out), np.asarray(ref),
                               rtol=2e-2, atol=2e-2)
    print("KERNEL_OK")
</pallas_src>

<mosaic_0001>
module attributes {stable_mosaic.version = 11 : i64} {
  func.func @_cnn_cifar_kernel(%arg0: i32, %arg1: memref<1x3x32x32xf32, #tpu.memory_space<vmem>>, %arg2: memref<5x3x32x168xf32, #tpu.memory_space<vmem>>, %arg3: memref<1x168xf32, #tpu.memory_space<vmem>>, %arg4: memref<14x28xf32, #tpu.memory_space<vmem>>, %arg5: memref<14x28xf32, #tpu.memory_space<vmem>>, %arg6: memref<168x84xf32, #tpu.memory_space<vmem>>, %arg7: memref<168x84xf32, #tpu.memory_space<vmem>>, %arg8: memref<5x84x160xf32, #tpu.memory_space<vmem>>, %arg9: memref<1x160xf32, #tpu.memory_space<vmem>>, %arg10: memref<5x10xf32, #tpu.memory_space<vmem>>, %arg11: memref<5x10xf32, #tpu.memory_space<vmem>>, %arg12: memref<160x80xf32, #tpu.memory_space<vmem>>, %arg13: memref<160x80xf32, #tpu.memory_space<vmem>>, %arg14: memref<5x80x120xf32, #tpu.memory_space<vmem>>, %arg15: memref<1x120xf32, #tpu.memory_space<vmem>>, %arg16: memref<120x84xf32, #tpu.memory_space<vmem>>, %arg17: memref<1x84xf32, #tpu.memory_space<vmem>>, %arg18: memref<84x10xf32, #tpu.memory_space<vmem>>, %arg19: memref<1x10xf32, #tpu.memory_space<vmem>>, %arg20: memref<1x1x10xf32, #tpu.memory_space<vmem>>, %arg21: memref<14x84xf32, #tpu.memory_space<vmem>>, %arg22: memref<5x80xf32, #tpu.memory_space<vmem>>) attributes {dimension_semantics = [#tpu.dimension_semantics<parallel>], iteration_bounds = array<i64: 2>, scalar_prefetch = 0 : i64, scratch_operands = 2 : i64, tpu.core_type = #tpu.core_type<tc>, window_params = [{transform_indices = @transform_0, window_bounds = array<i64: 1, 3, 32, 32>}, {pipeline_mode = #tpu.pipeline_mode<synchronous>, transform_indices = @transform_1, window_bounds = array<i64: 5, 3, 32, 168>}, {pipeline_mode = #tpu.pipeline_mode<synchronous>, transform_indices = @transform_2, window_bounds = array<i64: 1, 168>}, {pipeline_mode = #tpu.pipeline_mode<synchronous>, transform_indices = @transform_3, window_bounds = array<i64: 14, 28>}, {pipeline_mode = #tpu.pipeline_mode<synchronous>, transform_indices = @transform_4, window_bounds = array<i64: 14, 28>}, {pipeline_mode = #tpu.pipeline_mode<synchronous>, transform_indices = @transform_5, window_bounds = array<i64: 168, 84>}, {pipeline_mode = #tpu.pipeline_mode<synchronous>, transform_indices = @transform_6, window_bounds = array<i64: 168, 84>}, {pipeline_mode = #tpu.pipeline_mode<synchronous>, transform_indices = @transform_7, window_bounds = array<i64: 5, 84, 160>}, {pipeline_mode = #tpu.pipeline_mode<synchronous>, transform_indices = @transform_8, window_bounds = array<i64: 1, 160>}, {pipeline_mode = #tpu.pipeline_mode<synchronous>, transform_indices = @transform_9, window_bounds = array<i64: 5, 10>}, {pipeline_mode = #tpu.pipeline_mode<synchronous>, transform_indices = @transform_10, window_bounds = array<i64: 5, 10>}, {pipeline_mode = #tpu.pipeline_mode<synchronous>, transform_indices = @transform_11, window_bounds = array<i64: 160, 80>}, {pipeline_mode = #tpu.pipeline_mode<synchronous>, transform_indices = @transform_12, window_bounds = array<i64: 160, 80>}, {pipeline_mode = #tpu.pipeline_mode<synchronous>, transform_indices = @transform_13, window_bounds = array<i64: 5, 80, 120>}, {pipeline_mode = #tpu.pipeline_mode<synchronous>, transform_indices = @transform_14, window_bounds = array<i64: 1, 120>}, {pipeline_mode = #tpu.pipeline_mode<synchronous>, transform_indices = @transform_15, window_bounds = array<i64: 120, 84>}, {pipeline_mode = #tpu.pipeline_mode<synchronous>, transform_indices = @transform_16, window_bounds = array<i64: 1, 84>}, {pipeline_mode = #tpu.pipeline_mode<synchronous>, transform_indices = @transform_17, window_bounds = array<i64: 84, 10>}, {pipeline_mode = #tpu.pipeline_mode<synchronous>, transform_indices = @transform_18, window_bounds = array<i64: 1, 10>}, {transform_indices = @transform_19, window_bounds = array<i64: 1, 1, 10>}]} {
    %cst = arith.constant 0.000000e+00 : f32
    %0 = vector.broadcast %cst : f32 to vector<28x168xf32>
    %c0 = arith.constant 0 : index
    %c0_0 = arith.constant 0 : index
    %c0_1 = arith.constant 0 : index
    %c0_2 = arith.constant 0 : index
    %1 = vector.load %arg1[%c0, %c0_0, %c0_1, %c0_2] : memref<1x3x32x32xf32, #tpu.memory_space<vmem>>, vector<1x1x28x32xf32>
    %2 = vector.shape_cast %1 : vector<1x1x28x32xf32> to vector<28x32xf32>
    %c0_3 = arith.constant 0 : index
    %c0_4 = arith.constant 0 : index
    %c0_5 = arith.constant 0 : index
    %c0_6 = arith.constant 0 : index
    %3 = vector.load %arg2[%c0_3, %c0_4, %c0_5, %c0_6] : memref<5x3x32x168xf32, #tpu.memory_space<vmem>>, vector<1x1x32x168xf32>
    %4 = vector.shape_cast %3 : vector<1x1x32x168xf32> to vector<32x168xf32>
    %cst_7 = arith.constant dense<0.000000e+00> : vector<28x168xf32>
    %5 = tpu.matmul %2, %4, %cst_7 {dimension_numbers = #tpu.dot_dimension_numbers<[1], [0], [0], [1], [0, 0, 1, 1], [], []>} : vector<28x32xf32>, vector<32x168xf32>, vector<28x168xf32> -> vector<28x168xf32>
    %6 = arith.addf %0, %5 : vector<28x168xf32>
    %c0_8 = arith.constant 0 : index
    %c1 = arith.constant 1 : index
    %c0_9 = arith.constant 0 : index
    %c0_10 = arith.constant 0 : index
    %7 = vector.load %arg1[%c0_8, %c1, %c0_9, %c0_10] : memref<1x3x32x32xf32, #tpu.memory_space<vmem>>, vector<1x1x28x32xf32>
    %8 = vector.shape_cast %7 : vector<1x1x28x32xf32> to vector<28x32xf32>
    %c0_11 = arith.constant 0 : index
    %c1_12 = arith.constant 1 : index
    %c0_13 = arith.constant 0 : index
    %c0_14 = arith.constant 0 : index
    %9 = vector.load %arg2[%c0_11, %c1_12, %c0_13, %c0_14] : memref<5x3x32x168xf32, #tpu.memory_space<vmem>>, vector<1x1x32x168xf32>
    %10 = vector.shape_cast %9 : vector<1x1x32x168xf32> to vector<32x168xf32>
    %cst_15 = arith.constant dense<0.000000e+00> : vector<28x168xf32>
    %11 = tpu.matmul %8, %10, %cst_15 {dimension_numbers = #tpu.dot_dimension_numbers<[1], [0], [0], [1], [0, 0, 1, 1], [], []>} : vector<28x32xf32>, vector<32x168xf32>, vector<28x168xf32> -> vector<28x168xf32>
    %12 = arith.addf %6, %11 : vector<28x168xf32>
    %c0_16 = arith.constant 0 : index
    %c2 = arith.constant 2 : index
    %c0_17 = arith.constant 0 : index
    %c0_18 = arith.constant 0 : index
    %13 = vector.load %arg1[%c0_16, %c2, %c0_17, %c0_18] : memref<1x3x32x32xf32, #tpu.memory_space<vmem>>, vector<1x1x28x32xf32>
    %14 = vector.shape_cast %13 : vector<1x1x28x32xf32> to vector<28x32xf32>
    %c0_19 = arith.constant 0 : index
    %c2_20 = arith.constant 2 : index
    %c0_21 = arith.constant 0 : index
    %c0_22 = arith.constant 0 : index
    %15 = vector.load %arg2[%c0_19, %c2_20, %c0_21, %c0_22] : memref<5x3x32x168xf32, #tpu.memory_space<vmem>>, vector<1x1x32x168xf32>
    %16 = vector.shape_cast %15 : vector<1x1x32x168xf32> to vector<32x168xf32>
    %cst_23 = arith.constant dense<0.000000e+00> : vector<28x168xf32>
    %17 = tpu.matmul %14, %16, %cst_23 {dimension_numbers = #tpu.dot_dimension_numbers<[1], [0], [0], [1], [0, 0, 1, 1], [], []>} : vector<28x32xf32>, vector<32x168xf32>, vector<28x168xf32> -> vector<28x168xf32>
    %18 = arith.addf %12, %17 : vector<28x168xf32>
    %c0_24 = arith.constant 0 : index
    %c0_25 = arith.constant 0 : index
    %c1_26 = arith.constant 1 : index
    %c0_27 = arith.constant 0 : index
    %19 = vector.load %arg1[%c0_24, %c0_25, %c1_26, %c0_27] : memref<1x3x32x32xf32, #tpu.memory_space<vmem>>, vector<1x1x28x32xf32>
    %20 = vector.shape_cast %19 : vector<1x1x28x32xf32> to vector<28x32xf32>
    %c1_28 = arith.constant 1 : index
    %c0_29 = arith.constant 0 : index
    %c0_30 = arith.constant 0 : index
    %c0_31 = arith.constant 0 : index
    %21 = vector.load %arg2[%c1_28, %c0_29, %c0_30, %c0_31] : memref<5x3x32x168xf32, #tpu.memory_space<vmem>>, vector<1x1x32x168xf32>
    %22 = vector.shape_cast %21 : vector<1x1x32x168xf32> to vector<32x168xf32>
    %cst_32 = arith.constant dense<0.000000e+00> : vector<28x168xf32>
    %23 = tpu.matmul %20, %22, %cst_32 {dimension_numbers = #tpu.dot_dimension_numbers<[1], [0], [0], [1], [0, 0, 1, 1], [], []>} : vector<28x32xf32>, vector<32x168xf32>, vector<28x168xf32> -> vector<28x168xf32>
    %24 = arith.addf %18, %23 : vector<28x168xf32>
    %c0_33 = arith.constant 0 : index
    %c1_34 = arith.constant 1 : index
    %c1_35 = arith.constant 1 : index
    %c0_36 = arith.constant 0 : index
    %25 = vector.load %arg1[%c0_33, %c1_34, %c1_35, %c0_36] : memref<1x3x32x32xf32, #tpu.memory_space<vmem>>, vector<1x1x28x32xf32>
    %26 = vector.shape_cast %25 : vector<1x1x28x32xf32> to vector<28x32xf32>
    %c1_37 = arith.constant 1 : index
    %c1_38 = arith.constant 1 : index
    %c0_39 = arith.constant 0 : index
    %c0_40 = arith.constant 0 : index
    %27 = vector.load %arg2[%c1_37, %c1_38, %c0_39, %c0_40] : memref<5x3x32x168xf32, #tpu.memory_space<vmem>>, vector<1x1x32x168xf32>
    %28 = vector.shape_cast %27 : vector<1x1x32x168xf32> to vector<32x168xf32>
    %cst_41 = arith.constant dense<0.000000e+00> : vector<28x168xf32>
    %29 = tpu.matmul %26, %28, %cst_41 {dimension_numbers = #tpu.dot_dimension_numbers<[1], [0], [0], [1], [0, 0, 1, 1], [], []>} : vector<28x32xf32>, vector<32x168xf32>, vector<28x168xf32> -> vector<28x168xf32>
    %30 = arith.addf %24, %29 : vector<28x168xf32>
    %c0_42 = arith.constant 0 : index
    %c2_43 = arith.constant 2 : index
    %c1_44 = arith.constant 1 : index
    %c0_45 = arith.constant 0 : index
    %31 = vector.load %arg1[%c0_42, %c2_43, %c1_44, %c0_45] : memref<1x3x32x32xf32, #tpu.memory_space<vmem>>, vector<1x1x28x32xf32>
    %32 = vector.shape_cast %31 : vector<1x1x28x32xf32> to vector<28x32xf32>
    %c1_46 = arith.constant 1 : index
    %c2_47 = arith.constant 2 : index
    %c0_48 = arith.constant 0 : index
    %c0_49 = arith.constant 0 : index
    %33 = vector.load %arg2[%c1_46, %c2_47, %c0_48, %c0_49] : memref<5x3x32x168xf32, #tpu.memory_space<vmem>>, vector<1x1x32x168xf32>
    %34 = vector.shape_cast %33 : vector<1x1x32x168xf32> to vector<32x168xf32>
    %cst_50 = arith.constant dense<0.000000e+00> : vector<28x168xf32>
    %35 = tpu.matmul %32, %34, %cst_50 {dimension_numbers = #tpu.dot_dimension_numbers<[1], [0], [0], [1], [0, 0, 1, 1], [], []>} : vector<28x32xf32>, vector<32x168xf32>, vector<28x168xf32> -> vector<28x168xf32>
    %36 = arith.addf %30, %35 : vector<28x168xf32>
    %c0_51 = arith.constant 0 : index
    %c0_52 = arith.constant 0 : index
    %c2_53 = arith.constant 2 : index
    %c0_54 = arith.constant 0 : index
    %37 = vector.load %arg1[%c0_51, %c0_52, %c2_53, %c0_54] : memref<1x3x32x32xf32, #tpu.memory_space<vmem>>, vector<1x1x28x32xf32>
    %38 = vector.shape_cast %37 : vector<1x1x28x32xf32> to vector<28x32xf32>
    %c2_55 = arith.constant 2 : index
    %c0_56 = arith.constant 0 : index
    %c0_57 = arith.constant 0 : index
    %c0_58 = arith.constant 0 : index
    %39 = vector.load %arg2[%c2_55, %c0_56, %c0_57, %c0_58] : memref<5x3x32x168xf32, #tpu.memory_space<vmem>>, vector<1x1x32x168xf32>
    %40 = vector.shape_cast %39 : vector<1x1x32x168xf32> to vector<32x168xf32>
    %cst_59 = arith.constant dense<0.000000e+00> : vector<28x168xf32>
    %41 = tpu.matmul %38, %40, %cst_59 {dimension_numbers = #tpu.dot_dimension_numbers<[1], [0], [0], [1], [0, 0, 1, 1], [], []>} : vector<28x32xf32>, vector<32x168xf32>, vector<28x168xf32> -> vector<28x168xf32>
    %42 = arith.addf %36, %41 : vector<28x168xf32>
    %c0_60 = arith.constant 0 : index
    %c1_61 = arith.constant 1 : index
    %c2_62 = arith.constant 2 : index
    %c0_63 = arith.constant 0 : index
    %43 = vector.load %arg1[%c0_60, %c1_61, %c2_62, %c0_63] : memref<1x3x32x32xf32, #tpu.memory_space<vmem>>, vector<1x1x28x32xf32>
    %44 = vector.shape_cast %43 : vector<1x1x28x32xf32> to vector<28x32xf32>
    %c2_64 = arith.constant 2 : index
    %c1_65 = arith.constant 1 : index
    %c0_66 = arith.constant 0 : index
    %c0_67 = arith.constant 0 : index
    %45 = vector.load %arg2[%c2_64, %c1_65, %c0_66, %c0_67] : memref<5x3x32x168xf32, #tpu.memory_space<vmem>>, vector<1x1x32x168xf32>
    %46 = vector.shape_cast %45 : vector<1x1x32x168xf32> to vector<32x168xf32>
    %cst_68 = arith.constant dense<0.000000e+00> : vector<28x168xf32>
    %47 = tpu.matmul %44, %46, %cst_68 {dimension_numbers = #tpu.dot_dimension_numbers<[1], [0], [0], [1], [0, 0, 1, 1], [], []>} : vector<28x32xf32>, vector<32x168xf32>, vector<28x168xf32> -> vector<28x168xf32>
    %48 = arith.addf %42, %47 : vector<28x168xf32>
    %c0_69 = arith.constant 0 : index
    %c2_70 = arith.constant 2 : index
    %c2_71 = arith.constant 2 : index
    %c0_72 = arith.constant 0 : index
    %49 = vector.load %arg1[%c0_69, %c2_70, %c2_71, %c0_72] : memref<1x3x32x32xf32, #tpu.memory_space<vmem>>, vector<1x1x28x32xf32>
    %50 = vector.shape_cast %49 : vector<1x1x28x32xf32> to vector<28x32xf32>
    %c2_73 = arith.constant 2 : index
    %c2_74 = arith.constant 2 : index
    %c0_75 = arith.constant 0 : index
    %c0_76 = arith.constant 0 : index
    %51 = vector.load %arg2[%c2_73, %c2_74, %c0_75, %c0_76] : memref<5x3x32x168xf32, #tpu.memory_space<vmem>>, vector<1x1x32x168xf32>
    %52 = vector.shape_cast %51 : vector<1x1x32x168xf32> to vector<32x168xf32>
    %cst_77 = arith.constant dense<0.000000e+00> : vector<28x168xf32>
    %53 = tpu.matmul %50, %52, %cst_77 {dimension_numbers = #tpu.dot_dimension_numbers<[1], [0], [0], [1], [0, 0, 1, 1], [], []>} : vector<28x32xf32>, vector<32x168xf32>, vector<28x168xf32> -> vector<28x168xf32>
    %54 = arith.addf %48, %53 : vector<28x168xf32>
    %c0_78 = arith.constant 0 : index
    %c0_79 = arith.constant 0 : index
    %c3 = arith.constant 3 : index
    %c0_80 = arith.constant 0 : index
    %55 = vector.load %arg1[%c0_78, %c0_79, %c3, %c0_80] : memref<1x3x32x32xf32, #tpu.memory_space<vmem>>, vector<1x1x28x32xf32>
    %56 = vector.shape_cast %55 : vector<1x1x28x32xf32> to vector<28x32xf32>
    %c3_81 = arith.constant 3 : index
    %c0_82 = arith.constant 0 : index
    %c0_83 = arith.constant 0 : index
    %c0_84 = arith.constant 0 : index
    %57 = vector.load %arg2[%c3_81, %c0_82, %c0_83, %c0_84] : memref<5x3x32x168xf32, #tpu.memory_space<vmem>>, vector<1x1x32x168xf32>
    %58 = vector.shape_cast %57 : vector<1x1x32x168xf32> to vector<32x168xf32>
    %cst_85 = arith.constant dense<0.000000e+00> : vector<28x168xf32>
    %59 = tpu.matmul %56, %58, %cst_85 {dimension_numbers = #tpu.dot_dimension_numbers<[1], [0], [0], [1], [0, 0, 1, 1], [], []>} : vector<28x32xf32>, vector<32x168xf32>, vector<28x168xf32> -> vector<28x168xf32>
    %60 = arith.addf %54, %59 : vector<28x168xf32>
    %c0_86 = arith.constant 0 : index
    %c1_87 = arith.constant 1 : index
    %c3_88 = arith.constant 3 : index
    %c0_89 = arith.constant 0 : index
    %61 = vector.load %arg1[%c0_86, %c1_87, %c3_88, %c0_89] : memref<1x3x32x32xf32, #tpu.memory_space<vmem>>, vector<1x1x28x32xf32>
    %62 = vector.shape_cast %61 : vector<1x1x28x32xf32> to vector<28x32xf32>
    %c3_90 = arith.constant 3 : index
    %c1_91 = arith.constant 1 : index
    %c0_92 = arith.constant 0 : index
    %c0_93 = arith.constant 0 : index
    %63 = vector.load %arg2[%c3_90, %c1_91, %c0_92, %c0_93] : memref<5x3x32x168xf32, #tpu.memory_space<vmem>>, vector<1x1x32x168xf32>
    %64 = vector.shape_cast %63 : vector<1x1x32x168xf32> to vector<32x168xf32>
    %cst_94 = arith.constant dense<0.000000e+00> : vector<28x168xf32>
    %65 = tpu.matmul %62, %64, %cst_94 {dimension_numbers = #tpu.dot_dimension_numbers<[1], [0], [0], [1], [0, 0, 1, 1], [], []>} : vector<28x32xf32>, vector<32x168xf32>, vector<28x168xf32> -> vector<28x168xf32>
    %66 = arith.addf %60, %65 : vector<28x168xf32>
    %c0_95 = arith.constant 0 : index
    %c2_96 = arith.constant 2 : index
    %c3_97 = arith.constant 3 : index
    %c0_98 = arith.constant 0 : index
    %67 = vector.load %arg1[%c0_95, %c2_96, %c3_97, %c0_98] : memref<1x3x32x32xf32, #tpu.memory_space<vmem>>, vector<1x1x28x32xf32>
    %68 = vector.shape_cast %67 : vector<1x1x28x32xf32> to vector<28x32xf32>
    %c3_99 = arith.constant 3 : index
    %c2_100 = arith.constant 2 : index
    %c0_101 = arith.constant 0 : index
    %c0_102 = arith.constant 0 : index
    %69 = vector.load %arg2[%c3_99, %c2_100, %c0_101, %c0_102] : memref<5x3x32x168xf32, #tpu.memory_space<vmem>>, vector<1x1x32x168xf32>
    %70 = vector.shape_cast %69 : vector<1x1x32x168xf32> to vector<32x168xf32>
    %cst_103 = arith.constant dense<0.000000e+00> : vector<28x168xf32>
    %71 = tpu.matmul %68, %70, %cst_103 {dimension_numbers = #tpu.dot_dimension_numbers<[1], [0], [0], [1], [0, 0, 1, 1], [], []>} : vector<28x32xf32>, vector<32x168xf32>, vector<28x168xf32> -> vector<28x168xf32>
    %72 = arith.addf %66, %71 : vector<28x168xf32>
    %c0_104 = arith.constant 0 : index
    %c0_105 = arith.constant 0 : index
    %c4 = arith.constant 4 : index
    %c0_106 = arith.constant 0 : index
    %73 = vector.load %arg1[%c0_104, %c0_105, %c4, %c0_106] : memref<1x3x32x32xf32, #tpu.memory_space<vmem>>, vector<1x1x28x32xf32>
    %74 = vector.shape_cast %73 : vector<1x1x28x32xf32> to vector<28x32xf32>
    %c4_107 = arith.constant 4 : index
    %c0_108 = arith.constant 0 : index
    %c0_109 = arith.constant 0 : index
    %c0_110 = arith.constant 0 : index
    %75 = vector.load %arg2[%c4_107, %c0_108, %c0_109, %c0_110] : memref<5x3x32x168xf32, #tpu.memory_space<vmem>>, vector<1x1x32x168xf32>
    %76 = vector.shape_cast %75 : vector<1x1x32x168xf32> to vector<32x168xf32>
    %cst_111 = arith.constant dense<0.000000e+00> : vector<28x168xf32>
    %77 = tpu.matmul %74, %76, %cst_111 {dimension_numbers = #tpu.dot_dimension_numbers<[1], [0], [0], [1], [0, 0, 1, 1], [], []>} : vector<28x32xf32>, vector<32x168xf32>, vector<28x168xf32> -> vector<28x168xf32>
    %78 = arith.addf %72, %77 : vector<28x168xf32>
    %c0_112 = arith.constant 0 : index
    %c1_113 = arith.constant 1 : index
    %c4_114 = arith.constant 4 : index
    %c0_115 = arith.constant 0 : index
    %79 = vector.load %arg1[%c0_112, %c1_113, %c4_114, %c0_115] : memref<1x3x32x32xf32, #tpu.memory_space<vmem>>, vector<1x1x28x32xf32>
    %80 = vector.shape_cast %79 : vector<1x1x28x32xf32> to vector<28x32xf32>
    %c4_116 = arith.constant 4 : index
    %c1_117 = arith.constant 1 : index
    %c0_118 = arith.constant 0 : index
    %c0_119 = arith.constant 0 : index
    %81 = vector.load %arg2[%c4_116, %c1_117, %c0_118, %c0_119] : memref<5x3x32x168xf32, #tpu.memory_space<vmem>>, vector<1x1x32x168xf32>
    %82 = vector.shape_cast %81 : vector<1x1x32x168xf32> to vector<32x168xf32>
    %cst_120 = arith.constant dense<0.000000e+00> : vector<28x168xf32>
    %83 = tpu.matmul %80, %82, %cst_120 {dimension_numbers = #tpu.dot_dimension_numbers<[1], [0], [0], [1], [0, 0, 1, 1], [], []>} : vector<28x32xf32>, vector<32x168xf32>, vector<28x168xf32> -> vector<28x168xf32>
    %84 = arith.addf %78, %83 : vector<28x168xf32>
    %c0_121 = arith.constant 0 : index
    %c2_122 = arith.constant 2 : index
    %c4_123 = arith.constant 4 : index
    %c0_124 = arith.constant 0 : index
    %85 = vector.load %arg1[%c0_121, %c2_122, %c4_123, %c0_124] : memref<1x3x32x32xf32, #tpu.memory_space<vmem>>, vector<1x1x28x32xf32>
    %86 = vector.shape_cast %85 : vector<1x1x28x32xf32> to vector<28x32xf32>
    %c4_125 = arith.constant 4 : index
    %c2_126 = arith.constant 2 : index
    %c0_127 = arith.constant 0 : index
    %c0_128 = arith.constant 0 : index
    %87 = vector.load %arg2[%c4_125, %c2_126, %c0_127, %c0_128] : memref<5x3x32x168xf32, #tpu.memory_space<vmem>>, vector<1x1x32x168xf32>
    %88 = vector.shape_cast %87 : vector<1x1x32x168xf32> to vector<32x168xf32>
    %cst_129 = arith.constant dense<0.000000e+00> : vector<28x168xf32>
    %89 = tpu.matmul %86, %88, %cst_129 {dimension_numbers = #tpu.dot_dimension_numbers<[1], [0], [0], [1], [0, 0, 1, 1], [], []>} : vector<28x32xf32>, vector<32x168xf32>, vector<28x168xf32> -> vector<28x168xf32>
    %90 = arith.addf %84, %89 : vector<28x168xf32>
    %c0_130 = arith.constant 0 : index
    %c0_131 = arith.constant 0 : index
    %91 = vector.load %arg3[%c0_130, %c0_131] : memref<1x168xf32, #tpu.memory_space<vmem>>, vector<1x168xf32>
    %92 = vector.broadcast %91 : vector<1x168xf32> to vector<28x168xf32>
    %93 = arith.addf %90, %92 : vector<28x168xf32>
    %cst_132 = arith.constant 0.000000e+00 : f32
    %94 = vector.broadcast %cst_132 : f32 to vector<28x168xf32>
    %95 = arith.maximumf %93, %94 : vector<28x168xf32>
    %c0_133 = arith.constant 0 : index
    %c0_134 = arith.constant 0 : index
    %96 = vector.load %arg4[%c0_133, %c0_134] : memref<14x28xf32, #tpu.memory_space<vmem>>, vector<14x28xf32>
    %cst_135 = arith.constant dense<0.000000e+00> : vector<14x168xf32>
    %97 = tpu.matmul %96, %95, %cst_135 {dimension_numbers = #tpu.dot_dimension_numbers<[1], [0], [0], [1], [0, 0, 1, 1], [], []>} : vector<14x28xf32>, vector<28x168xf32>, vector<14x168xf32> -> vector<14x168xf32>
    %c0_136 = arith.constant 0 : index
    %c0_137 = arith.constant 0 : index
    %98 = vector.load %arg5[%c0_136, %c0_137] : memref<14x28xf32, #tpu.memory_space<vmem>>, vector<14x28xf32>
    %cst_138 = arith.constant dense<0.000000e+00> : vector<14x168xf32>
    %99 = tpu.matmul %98, %95, %cst_138 {dimension_numbers = #tpu.dot_dimension_numbers<[1], [0], [0], [1], [0, 0, 1, 1], [], []>} : vector<14x28xf32>, vector<28x168xf32>, vector<14x168xf32> -> vector<14x168xf32>
    %100 = arith.maximumf %97, %99 : vector<14x168xf32>
    %c0_139 = arith.constant 0 : index
    %c0_140 = arith.constant 0 : index
    %101 = vector.load %arg6[%c0_139, %c0_140] : memref<168x84xf32, #tpu.memory_space<vmem>>, vector<168x84xf32>
    %cst_141 = arith.constant dense<0.000000e+00> : vector<14x84xf32>
    %102 = tpu.matmul %100, %101, %cst_141 {dimension_numbers = #tpu.dot_dimension_numbers<[1], [0], [0], [1], [0, 0, 1, 1], [], []>} : vector<14x168xf32>, vector<168x84xf32>, vector<14x84xf32> -> vector<14x84xf32>
    %c0_142 = arith.constant 0 : index
    %c0_143 = arith.constant 0 : index
    %103 = vector.load %arg7[%c0_142, %c0_143] : memref<168x84xf32, #tpu.memory_space<vmem>>, vector<168x84xf32>
    %cst_144 = arith.constant dense<0.000000e+00> : vector<14x84xf32>
    %104 = tpu.matmul %100, %103, %cst_144 {dimension_numbers = #tpu.dot_dimension_numbers<[1], [0], [0], [1], [0, 0, 1, 1], [], []>} : vector<14x168xf32>, vector<168x84xf32>, vector<14x84xf32> -> vector<14x84xf32>
    %105 = arith.maximumf %102, %104 : vector<14x84xf32>
    %c0_145 = arith.constant 0 : index
    %c0_146 = arith.constant 0 : index
    %106 = vector.load %arg21[%c0_145, %c0_146] : memref<14x84xf32, #tpu.memory_space<vmem>>, vector<14x84xf32>
    tpu.vector_store %arg21[%c0_145, %c0_146], %105 {strides = array<i32>} : memref<14x84xf32, #tpu.memory_space<vmem>>, vector<14x84xf32>,
    %cst_147 = arith.constant 0.000000e+00 : f32
    %107 = vector.broadcast %cst_147 : f32 to vector<10x160xf32>
    %c0_148 = arith.constant 0 : index
    %c0_149 = arith.constant 0 : index
    %108 = vector.load %arg21[%c0_148, %c0_149] : memref<14x84xf32, #tpu.memory_space<vmem>>, vector<10x84xf32>
    %c0_150 = arith.constant 0 : index
    %c0_151 = arith.constant 0 : index
    %c0_152 = arith.constant 0 : index
    %109 = vector.load %arg8[%c0_150, %c0_151, %c0_152] : memref<5x84x160xf32, #tpu.memory_space<vmem>>, vector<1x84x160xf32>
    %110 = vector.shape_cast %109 : vector<1x84x160xf32> to vector<84x160xf32>
    %cst_153 = arith.constant dense<0.000000e+00> : vector<10x160xf32>
    %111 = tpu.matmul %108, %110, %cst_153 {dimension_numbers = #tpu.dot_dimension_numbers<[1], [0], [0], [1], [0, 0, 1, 1], [], []>} : vector<10x84xf32>, vector<84x160xf32>, vector<10x160xf32> -> vector<10x160xf32>
    %112 = arith.addf %107, %111 : vector<10x160xf32>
    %c1_154 = arith.constant 1 : index
    %c0_155 = arith.constant 0 : index
    %113 = vector.load %arg21[%c1_154, %c0_155] : memref<14x84xf32, #tpu.memory_space<vmem>>, vector<10x84xf32>
    %c1_156 = arith.constant 1 : index
    %c0_157 = arith.constant 0 : index
    %c0_158 = arith.constant 0 : index
    %114 = vector.load %arg8[%c1_156, %c0_157, %c0_158] : memref<5x84x160xf32, #tpu.memory_space<vmem>>, vector<1x84x160xf32>
    %115 = vector.shape_cast %114 : vector<1x84x160xf32> to vector<84x160xf32>
    %cst_159 = arith.constant dense<0.000000e+00> : vector<10x160xf32>
    %116 = tpu.matmul %113, %115, %cst_159 {dimension_numbers = #tpu.dot_dimension_numbers<[1], [0], [0], [1], [0, 0, 1, 1], [], []>} : vector<10x84xf32>, vector<84x160xf32>, vector<10x160xf32> -> vector<10x160xf32>
    %117 = arith.addf %112, %116 : vector<10x160xf32>
    %c2_160 = arith.constant 2 : index
    %c0_161 = arith.constant 0 : index
    %118 = vector.load %arg21[%c2_160, %c0_161] : memref<14x84xf32, #tpu.memory_space<vmem>>, vector<10x84xf32>
    %c2_162 = arith.constant 2 : index
    %c0_163 = arith.constant 0 : index
    %c0_164 = arith.constant 0 : index
    %119 = vector.load %arg8[%c2_162, %c0_163, %c0_164] : memref<5x84x160xf32, #tpu.memory_space<vmem>>, vector<1x84x160xf32>
    %120 = vector.shape_cast %119 : vector<1x84x160xf32> to vector<84x160xf32>
    %cst_165 = arith.constant dense<0.000000e+00> : vector<10x160xf32>
    %121 = tpu.matmul %118, %120, %cst_165 {dimension_numbers = #tpu.dot_dimension_numbers<[1], [0], [0], [1], [0, 0, 1, 1], [], []>} : vector<10x84xf32>, vector<84x160xf32>, vector<10x160xf32> -> vector<10x160xf32>
    %122 = arith.addf %117, %121 : vector<10x160xf32>
    %c3_166 = arith.constant 3 : index
    %c0_167 = arith.constant 0 : index
    %123 = vector.load %arg21[%c3_166, %c0_167] : memref<14x84xf32, #tpu.memory_space<vmem>>, vector<10x84xf32>
    %c3_168 = arith.constant 3 : index
    %c0_169 = arith.constant 0 : index
    %c0_170 = arith.constant 0 : index
    %124 = vector.load %arg8[%c3_168, %c0_169, %c0_170] : memref<5x84x160xf32, #tpu.memory_space<vmem>>, vector<1x84x160xf32>
    %125 = vector.shape_cast %124 : vector<1x84x160xf32> to vector<84x160xf32>
    %cst_171 = arith.constant dense<0.000000e+00> : vector<10x160xf32>
    %126 = tpu.matmul %123, %125, %cst_171 {dimension_numbers = #tpu.dot_dimension_numbers<[1], [0], [0], [1], [0, 0, 1, 1], [], []>} : vector<10x84xf32>, vector<84x160xf32>, vector<10x160xf32> -> vector<10x160xf32>
    %127 = arith.addf %122, %126 : vector<10x160xf32>
    %c4_172 = arith.constant 4 : index
    %c0_173 = arith.constant 0 : index
    %128 = vector.load %arg21[%c4_172, %c0_173] : memref<14x84xf32, #tpu.memory_space<vmem>>, vector<10x84xf32>
    %c4_174 = arith.constant 4 : index
    %c0_175 = arith.constant 0 : index
    %c0_176 = arith.constant 0 : index
    %129 = vector.load %arg8[%c4_174, %c0_175, %c0_176] : memref<5x84x160xf32, #tpu.memory_space<vmem>>, vector<1x84x160xf32>
    %130 = vector.shape_cast %129 : vector<1x84x160xf32> to vector<84x160xf32>
    %cst_177 = arith.constant dense<0.000000e+00> : vector<10x160xf32>
    %131 = tpu.matmul %128, %130, %cst_177 {dimension_numbers = #tpu.dot_dimension_numbers<[1], [0], [0], [1], [0, 0, 1, 1], [], []>} : vector<10x84xf32>, vector<84x160xf32>, vector<10x160xf32> -> vector<10x160xf32>
    %132 = arith.addf %127, %131 : vector<10x160xf32>
    %c0_178 = arith.constant 0 : index
    %c0_179 = arith.constant 0 : index
    %133 = vector.load %arg9[%c0_178, %c0_179] : memref<1x160xf32, #tpu.memory_space<vmem>>, vector<1x160xf32>
    %134 = vector.broadcast %133 : vector<1x160xf32> to vector<10x160xf32>
    %135 = arith.addf %132, %134 : vector<10x160xf32>
    %cst_180 = arith.constant 0.000000e+00 : f32
    %136 = vector.broadcast %cst_180 : f32 to vector<10x160xf32>
    %137 = arith.maximumf %135, %136 : vector<10x160xf32>
    %c0_181 = arith.constant 0 : index
    %c0_182 = arith.constant 0 : index
    %138 = vector.load %arg10[%c0_181, %c0_182] : memref<5x10xf32, #tpu.memory_space<vmem>>, vector<5x10xf32>
    %cst_183 = arith.constant dense<0.000000e+00> : vector<5x160xf32>
    %139 = tpu.matmul %138, %137, %cst_183 {dimension_numbers = #tpu.dot_dimension_numbers<[1], [0], [0], [1], [0, 0, 1, 1], [], []>} : vector<5x10xf32>, vector<10x160xf32>, vector<5x160xf32> -> vector<5x160xf32>
    %c0_184 = arith.constant 0 : index
    %c0_185 = arith.constant 0 : index
    %140 = vector.load %arg11[%c0_184, %c0_185] : memref<5x10xf32, #tpu.memory_space<vmem>>, vector<5x10xf32>
    %cst_186 = arith.constant dense<0.000000e+00> : vector<5x160xf32>
    %141 = tpu.matmul %140, %137, %cst_186 {dimension_numbers = #tpu.dot_dimension_numbers<[1], [0], [0], [1], [0, 0, 1, 1], [], []>} : vector<5x10xf32>, vector<10x160xf32>, vector<5x160xf32> -> vector<5x160xf32>
    %142 = arith.maximumf %139, %141 : vector<5x160xf32>
    %c0_187 = arith.constant 0 : index
    %c0_188 = arith.constant 0 : index
    %143 = vector.load %arg12[%c0_187, %c0_188] : memref<160x80xf32, #tpu.memory_space<vmem>>, vector<160x80xf32>
    %cst_189 = arith.constant dense<0.000000e+00> : vector<5x80xf32>
    %144 = tpu.matmul %142, %143, %cst_189 {dimension_numbers = #tpu.dot_dimension_numbers<[1], [0], [0], [1], [0, 0, 1, 1], [], []>} : vector<5x160xf32>, vector<160x80xf32>, vector<5x80xf32> -> vector<5x80xf32>
    %c0_190 = arith.constant 0 : index
    %c0_191 = arith.constant 0 : index
    %145 = vector.load %arg13[%c0_190, %c0_191] : memref<160x80xf32, #tpu.memory_space<vmem>>, vector<160x80xf32>
    %cst_192 = arith.constant dense<0.000000e+00> : vector<5x80xf32>
    %146 = tpu.matmul %142, %145, %cst_192 {dimension_numbers = #tpu.dot_dimension_numbers<[1], [0], [0], [1], [0, 0, 1, 1], [], []>} : vector<5x160xf32>, vector<160x80xf32>, vector<5x80xf32> -> vector<5x80xf32>
    %147 = arith.maximumf %144, %146 : vector<5x80xf32>
    %c0_193 = arith.constant 0 : index
    %c0_194 = arith.constant 0 : index
    %148 = vector.load %arg22[%c0_193, %c0_194] : memref<5x80xf32, #tpu.memory_space<vmem>>, vector<5x80xf32>
    tpu.vector_store %arg22[%c0_193, %c0_194], %147 {strides = array<i32>} : memref<5x80xf32, #tpu.memory_space<vmem>>, vector<5x80xf32>,
    %cst_195 = arith.constant 0.000000e+00 : f32
    %149 = vector.broadcast %cst_195 : f32 to vector<1x120xf32>
    %c0_196 = arith.constant 0 : index
    %c0_197 = arith.constant 0 : index
    %150 = vector.load %arg22[%c0_196, %c0_197] : memref<5x80xf32, #tpu.memory_space<vmem>>, vector<1x80xf32>
    %c0_198 = arith.constant 0 : index
    %c0_199 = arith.constant 0 : index
    %c0_200 = arith.constant 0 : index
    %151 = vector.load %arg14[%c0_198, %c0_199, %c0_200] : memref<5x80x120xf32, #tpu.memory_space<vmem>>, vector<1x80x120xf32>
    %152 = vector.shape_cast %151 : vector<1x80x120xf32> to vector<80x120xf32>
    %cst_201 = arith.constant dense<0.000000e+00> : vector<1x120xf32>
    %153 = tpu.matmul %150, %152, %cst_201 {dimension_numbers = #tpu.dot_dimension_numbers<[1], [0], [0], [1], [0, 0, 1, 1], [], []>} : vector<1x80xf32>, vector<80x120xf32>, vector<1x120xf32> -> vector<1x120xf32>
    %154 = arith.addf %149, %153 : vector<1x120xf32>
    %c1_202 = arith.constant 1 : index
    %c0_203 = arith.constant 0 : index
    %155 = vector.load %arg22[%c1_202, %c0_203] : memref<5x80xf32, #tpu.memory_space<vmem>>, vector<1x80xf32>
    %c1_204 = arith.constant 1 : index
    %c0_205 = arith.constant 0 : index
    %c0_206 = arith.constant 0 : index
    %156 = vector.load %arg14[%c1_204, %c0_205, %c0_206] : memref<5x80x120xf32, #tpu.memory_space<vmem>>, vector<1x80x120xf32>
    %157 = vector.shape_cast %156 : vector<1x80x120xf32> to vector<80x120xf32>
    %cst_207 = arith.constant dense<0.000000e+00> : vector<1x120xf32>
    %158 = tpu.matmul %155, %157, %cst_207 {dimension_numbers = #tpu.dot_dimension_numbers<[1], [0], [0], [1], [0, 0, 1, 1], [], []>} : vector<1x80xf32>, vector<80x120xf32>, vector<1x120xf32> -> vector<1x120xf32>
    %159 = arith.addf %154, %158 : vector<1x120xf32>
    %c2_208 = arith.constant 2 : index
    %c0_209 = arith.constant 0 : index
    %160 = vector.load %arg22[%c2_208, %c0_209] : memref<5x80xf32, #tpu.memory_space<vmem>>, vector<1x80xf32>
    %c2_210 = arith.constant 2 : index
    %c0_211 = arith.constant 0 : index
    %c0_212 = arith.constant 0 : index
    %161 = vector.load %arg14[%c2_210, %c0_211, %c0_212] : memref<5x80x120xf32, #tpu.memory_space<vmem>>, vector<1x80x120xf32>
    %162 = vector.shape_cast %161 : vector<1x80x120xf32> to vector<80x120xf32>
    %cst_213 = arith.constant dense<0.000000e+00> : vector<1x120xf32>
    %163 = tpu.matmul %160, %162, %cst_213 {dimension_numbers = #tpu.dot_dimension_numbers<[1], [0], [0], [1], [0, 0, 1, 1], [], []>} : vector<1x80xf32>, vector<80x120xf32>, vector<1x120xf32> -> vector<1x120xf32>
    %164 = arith.addf %159, %163 : vector<1x120xf32>
    %c3_214 = arith.constant 3 : index
    %c0_215 = arith.constant 0 : index
    %165 = vector.load %arg22[%c3_214, %c0_215] : memref<5x80xf32, #tpu.memory_space<vmem>>, vector<1x80xf32>
    %c3_216 = arith.constant 3 : index
    %c0_217 = arith.constant 0 : index
    %c0_218 = arith.constant 0 : index
    %166 = vector.load %arg14[%c3_216, %c0_217, %c0_218] : memref<5x80x120xf32, #tpu.memory_space<vmem>>, vector<1x80x120xf32>
    %167 = vector.shape_cast %166 : vector<1x80x120xf32> to vector<80x120xf32>
    %cst_219 = arith.constant dense<0.000000e+00> : vector<1x120xf32>
    %168 = tpu.matmul %165, %167, %cst_219 {dimension_numbers = #tpu.dot_dimension_numbers<[1], [0], [0], [1], [0, 0, 1, 1], [], []>} : vector<1x80xf32>, vector<80x120xf32>, vector<1x120xf32> -> vector<1x120xf32>
    %169 = arith.addf %164, %168 : vector<1x120xf32>
    %c4_220 = arith.constant 4 : index
    %c0_221 = arith.constant 0 : index
    %170 = vector.load %arg22[%c4_220, %c0_221] : memref<5x80xf32, #tpu.memory_space<vmem>>, vector<1x80xf32>
    %c4_222 = arith.constant 4 : index
    %c0_223 = arith.constant 0 : index
    %c0_224 = arith.constant 0 : index
    %171 = vector.load %arg14[%c4_222, %c0_223, %c0_224] : memref<5x80x120xf32, #tpu.memory_space<vmem>>, vector<1x80x120xf32>
    %172 = vector.shape_cast %171 : vector<1x80x120xf32> to vector<80x120xf32>
    %cst_225 = arith.constant dense<0.000000e+00> : vector<1x120xf32>
    %173 = tpu.matmul %170, %172, %cst_225 {dimension_numbers = #tpu.dot_dimension_numbers<[1], [0], [0], [1], [0, 0, 1, 1], [], []>} : vector<1x80xf32>, vector<80x120xf32>, vector<1x120xf32> -> vector<1x120xf32>
    %174 = arith.addf %169, %173 : vector<1x120xf32>
    %c0_226 = arith.constant 0 : index
    %c0_227 = arith.constant 0 : index
    %175 = vector.load %arg15[%c0_226, %c0_227] : memref<1x120xf32, #tpu.memory_space<vmem>>, vector<1x120xf32>
    %176 = arith.addf %174, %175 : vector<1x120xf32>
    %cst_228 = arith.constant 0.000000e+00 : f32
    %177 = vector.broadcast %cst_228 : f32 to vector<1x120xf32>
    %178 = arith.maximumf %176, %177 : vector<1x120xf32>
    %c0_229 = arith.constant 0 : index
    %c0_230 = arith.constant 0 : index
    %179 = vector.load %arg16[%c0_229, %c0_230] : memref<120x84xf32, #tpu.memory_space<vmem>>, vector<120x84xf32>
    %cst_231 = arith.constant dense<0.000000e+00> : vector<1x84xf32>
    %180 = tpu.matmul %178, %179, %cst_231 {dimension_numbers = #tpu.dot_dimension_numbers<[1], [0], [0], [1], [0, 0, 1, 1], [], []>} : vector<1x120xf32>, vector<120x84xf32>, vector<1x84xf32> -> vector<1x84xf32>
    %c0_232 = arith.constant 0 : index
    %c0_233 = arith.constant 0 : index
    %181 = vector.load %arg17[%c0_232, %c0_233] : memref<1x84xf32, #tpu.memory_space<vmem>>, vector<1x84xf32>
    %182 = arith.addf %180, %181 : vector<1x84xf32>
    %cst_234 = arith.constant 0.000000e+00 : f32
    %183 = vector.broadcast %cst_234 : f32 to vector<1x84xf32>
    %184 = arith.maximumf %182, %183 : vector<1x84xf32>
    %c0_235 = arith.constant 0 : index
    %c0_236 = arith.constant 0 : index
    %185 = vector.load %arg18[%c0_235, %c0_236] : memref<84x10xf32, #tpu.memory_space<vmem>>, vector<84x10xf32>
    %cst_237 = arith.constant dense<0.000000e+00> : vector<1x10xf32>
    %186 = tpu.matmul %184, %185, %cst_237 {dimension_numbers = #tpu.dot_dimension_numbers<[1], [0], [0], [1], [0, 0, 1, 1], [], []>} : vector<1x84xf32>, vector<84x10xf32>, vector<1x10xf32> -> vector<1x10xf32>
    %c0_238 = arith.constant 0 : index
    %c0_239 = arith.constant 0 : index
    %187 = vector.load %arg19[%c0_238, %c0_239] : memref<1x10xf32, #tpu.memory_space<vmem>>, vector<1x10xf32>
    %188 = arith.addf %186, %187 : vector<1x10xf32>
    %c0_240 = arith.constant 0 : index
    %c0_241 = arith.constant 0 : index
    %c0_242 = arith.constant 0 : index
    %189 = vector.load %arg20[%c0_240, %c0_241, %c0_242] : memref<1x1x10xf32, #tpu.memory_space<vmem>>, vector<1x1x10xf32>
    %190 = vector.shape_cast %189 : vector<1x1x10xf32> to vector<1x10xf32>
    %191 = vector.shape_cast %188 : vector<1x10xf32> to vector<1x1x10xf32>
    tpu.vector_store %arg20[%c0_240, %c0_241, %c0_242], %191 {strides = array<i32>} : memref<1x1x10xf32, #tpu.memory_space<vmem>>, vector<1x1x10xf32>,
    return
  }
  func.func @transform_0(%arg0: i32) -> (i32, i32, i32, i32) {
    %c0_i32 = arith.constant 0 : i32
    %c0_i32_0 = arith.constant 0 : i32
    %c0_i32_1 = arith.constant 0 : i32
    %c0_i32_2 = arith.constant 0 : i32
    return %arg0, %c0_i32, %c0_i32_0, %c0_i32_1 : i32, i32, i32, i32
  }
  func.func @transform_1(%arg0: i32) -> (i32, i32, i32, i32) {
    %c0_i32 = arith.constant 0 : i32
    %c0_i32_0 = arith.constant 0 : i32
    %c0_i32_1 = arith.constant 0 : i32
    %c0_i32_2 = arith.constant 0 : i32
    %c0_i32_3 = arith.constant 0 : i32
    return %c0_i32, %c0_i32_0, %c0_i32_1, %c0_i32_2 : i32, i32, i32, i32
  }
  func.func @transform_2(%arg0: i32) -> (i32, i32) {
    %c0_i32 = arith.constant 0 : i32
    %c0_i32_0 = arith.constant 0 : i32
    %c0_i32_1 = arith.constant 0 : i32
    return %c0_i32, %c0_i32_0 : i32, i32
  }
  func.func @transform_3(%arg0: i32) -> (i32, i32) {
    %c0_i32 = arith.constant 0 : i32
    %c0_i32_0 = arith.constant 0 : i32
    %c0_i32_1 = arith.constant 0 : i32
    return %c0_i32, %c0_i32_0 : i32, i32
  }
  func.func @transform_4(%arg0: i32) -> (i32, i32) {
    %c0_i32 = arith.constant 0 : i32
    %c0_i32_0 = arith.constant 0 : i32
    %c0_i32_1 = arith.constant 0 : i32
    return %c0_i32, %c0_i32_0 : i32, i32
  }
  func.func @transform_5(%arg0: i32) -> (i32, i32) {
    %c0_i32 = arith.constant 0 : i32
    %c0_i32_0 = arith.constant 0 : i32
    %c0_i32_1 = arith.constant 0 : i32
    return %c0_i32, %c0_i32_0 : i32, i32
  }
  func.func @transform_6(%arg0: i32) -> (i32, i32) {
    %c0_i32 = arith.constant 0 : i32
    %c0_i32_0 = arith.constant 0 : i32
    %c0_i32_1 = arith.constant 0 : i32
    return %c0_i32, %c0_i32_0 : i32, i32
  }
  func.func @transform_7(%arg0: i32) -> (i32, i32, i32) {
    %c0_i32 = arith.constant 0 : i32
    %c0_i32_0 = arith.constant 0 : i32
    %c0_i32_1 = arith.constant 0 : i32
    %c0_i32_2 = arith.constant 0 : i32
    return %c0_i32, %c0_i32_0, %c0_i32_1 : i32, i32, i32
  }
  func.func @transform_8(%arg0: i32) -> (i32, i32) {
    %c0_i32 = arith.constant 0 : i32
    %c0_i32_0 = arith.constant 0 : i32
    %c0_i32_1 = arith.constant 0 : i32
    return %c0_i32, %c0_i32_0 : i32, i32
  }
  func.func @transform_9(%arg0: i32) -> (i32, i32) {
    %c0_i32 = arith.constant 0 : i32
    %c0_i32_0 = arith.constant 0 : i32
    %c0_i32_1 = arith.constant 0 : i32
    return %c0_i32, %c0_i32_0 : i32, i32
  }
  func.func @transform_10(%arg0: i32) -> (i32, i32) {
    %c0_i32 = arith.constant 0 : i32
    %c0_i32_0 = arith.constant 0 : i32
    %c0_i32_1 = arith.constant 0 : i32
    return %c0_i32, %c0_i32_0 : i32, i32
  }
  func.func @transform_11(%arg0: i32) -> (i32, i32) {
    %c0_i32 = arith.constant 0 : i32
    %c0_i32_0 = arith.constant 0 : i32
    %c0_i32_1 = arith.constant 0 : i32
    return %c0_i32, %c0_i32_0 : i32, i32
  }
  func.func @transform_12(%arg0: i32) -> (i32, i32) {
    %c0_i32 = arith.constant 0 : i32
    %c0_i32_0 = arith.constant 0 : i32
    %c0_i32_1 = arith.constant 0 : i32
    return %c0_i32, %c0_i32_0 : i32, i32
  }
  func.func @transform_13(%arg0: i32) -> (i32, i32, i32) {
    %c0_i32 = arith.constant 0 : i32
    %c0_i32_0 = arith.constant 0 : i32
    %c0_i32_1 = arith.constant 0 : i32
    %c0_i32_2 = arith.constant 0 : i32
    return %c0_i32, %c0_i32_0, %c0_i32_1 : i32, i32, i32
  }
  func.func @transform_14(%arg0: i32) -> (i32, i32) {
    %c0_i32 = arith.constant 0 : i32
    %c0_i32_0 = arith.constant 0 : i32
    %c0_i32_1 = arith.constant 0 : i32
    return %c0_i32, %c0_i32_0 : i32, i32
  }
  func.func @transform_15(%arg0: i32) -> (i32, i32) {
    %c0_i32 = arith.constant 0 : i32
    %c0_i32_0 = arith.constant 0 : i32
    %c0_i32_1 = arith.constant 0 : i32
    return %c0_i32, %c0_i32_0 : i32, i32
  }
  func.func @transform_16(%arg0: i32) -> (i32, i32) {
    %c0_i32 = arith.constant 0 : i32
    %c0_i32_0 = arith.constant 0 : i32
    %c0_i32_1 = arith.constant 0 : i32
    return %c0_i32, %c0_i32_0 : i32, i32
  }
  func.func @transform_17(%arg0: i32) -> (i32, i32) {
    %c0_i32 = arith.constant 0 : i32
    %c0_i32_0 = arith.constant 0 : i32
    %c0_i32_1 = arith.constant 0 : i32
    return %c0_i32, %c0_i32_0 : i32, i32
  }
  func.func @transform_18(%arg0: i32) -> (i32, i32) {
    %c0_i32 = arith.constant 0 : i32
    %c0_i32_0 = arith.constant 0 : i32
    %c0_i32_1 = arith.constant 0 : i32
    return %c0_i32, %c0_i32_0 : i32, i32
  }
  func.func @transform_19(%arg0: i32) -> (i32, i32, i32) {
    %c0_i32 = arith.constant 0 : i32
    %c0_i32_0 = arith.constant 0 : i32
    %c0_i32_1 = arith.constant 0 : i32
    return %arg0, %c0_i32, %c0_i32_0 : i32, i32, i32
  }
}

</mosaic_0001>

<llo_original>
// kernel: cnn_cifar_forward.1
$region0: #{cnn_cifar_forward.1}
  #allocation0 [shape = 'u32[]', space=smem, size = 0x4, offset = 0x4, fixed_abs, tag = 'smem constant byte address 0x4 - core index']
  #allocation1 [shape = 'u32[144,128]{1,0:T(1,128)}', space=vmem, size = 0x12000, scoped, tag = 'internal scratch']
  #allocation2 [shape = 'f32[14,84]{1,0:T(8,128)}', space=vmem, size = 0x2000, scoped, tag = 'scratch operand']
  #allocation3 [shape = 'f32[5,80]{1,0:T(8,128)}', space=vmem, size = 0x1000, scoped, tag = 'scratch operand']
  %s0 = inlined_call_operand.vmem [shape: f32[2,3,32,32], index: 0, kind: input, shape index: {}]
  %s1 = inlined_call_operand.vmem [shape: f32[5,3,32,168], index: 1, kind: input, shape index: {}]
  %s2 = inlined_call_operand.vmem [shape: f32[1,168], index: 2, kind: input, shape index: {}]
  %s3 = inlined_call_operand.vmem [shape: f32[14,28], index: 3, kind: input, shape index: {}]
  %s4 = inlined_call_operand.vmem [shape: f32[14,28], index: 4, kind: input, shape index: {}]
  %s5 = inlined_call_operand.vmem [shape: f32[168,84], index: 5, kind: input, shape index: {}]
  %s6 = inlined_call_operand.vmem [shape: f32[168,84], index: 6, kind: input, shape index: {}]
  %s7 = inlined_call_operand.vmem [shape: f32[5,84,160], index: 7, kind: input, shape index: {}]
  %s8 = inlined_call_operand.vmem [shape: f32[1,160], index: 8, kind: input, shape index: {}]
  %s9 = inlined_call_operand.vmem [shape: f32[5,10], index: 9, kind: input, shape index: {}]
  %s10 = inlined_call_operand.vmem [shape: f32[5,10], index: 10, kind: input, shape index: {}]
  %s11 = inlined_call_operand.hbm [shape: f32[160,80], index: 11, kind: input, shape index: {}]
  %s12 = inlined_call_operand.hbm [shape: f32[160,80], index: 12, kind: input, shape index: {}]
  %s13 = inlined_call_operand.vmem [shape: f32[5,80,120], index: 13, kind: input, shape index: {}]
  %s14 = inlined_call_operand.vmem [shape: f32[1,120], index: 14, kind: input, shape index: {}]
  %s15 = inlined_call_operand.vmem [shape: f32[120,84], index: 15, kind: input, shape index: {}]
  %s16 = inlined_call_operand.vmem [shape: f32[1,84], index: 16, kind: input, shape index: {}]
  %s17 = inlined_call_operand.vmem [shape: f32[84,10], index: 17, kind: input, shape index: {}]
  %s18 = inlined_call_operand.vmem [shape: f32[1,10], index: 18, kind: input, shape index: {}]
  %s19 = inlined_call_operand.hbm [shape: f32[2,1,10], index: 19, kind: output, shape index: {}]
  %s20 = sld [smem:[#allocation0]]
  $region117: #{cnn_cifar_forward.1} parent=0
    _
  %s22 = ssub.s32 1, %s20
  %s23 = scalar_select 0, %s22, %s20
  $region1: #{cnn_cifar_forward.1} parent=0
    #allocation4 [shape = 'u8[81920]{0}', space=vmem, size = 0x14000, scoped, tag = 'input window, operand 11, single buffered']
    #allocation5 [shape = 's32[2]{0}', space=sflag, size = 0x8, scoped, tag = 'scoped memory for cnn_cifar_forward.1']
    #allocation6 [shape = 's32[2]{0}', space=sflag, size = 0x8, scoped, tag = 'scoped memory for cnn_cifar_forward.1']
    #allocation7 [shape = 'u8[81920]{0}', space=vmem, size = 0x14000, scoped, tag = 'input window, operand 12, single buffered']
    #allocation8 [shape = 's32[1]{0}', space=sflag, size = 0x4, scoped, tag = 'scoped memory for cnn_cifar_forward.1']
    #allocation9 [shape = 'u8[1024]{0}', space=vmem, size = 0x400, scoped, tag = 'output window, operand 0']
    %24 = vsyncpa [#allocation5], 0
    %25 = vsyncpa [#allocation8], 0
    %26 = vsyncpa [#allocation6], 0
    %s27 = scalar_lea.sflag [#allocation6], 1
    %28 = vsyncpa %s27, 0
    loop: start=0, step=1, limit=4
    $region2: #{cnn_cifar_forward.1} parent=1 // loop_pre_header
      _
    $region3: #{cnn_cifar_forward.1} parent=1 // loop_header
      %s30 = sphi 0, %s34
      %p31 = scmp.ge.s32.totalorder %s30, 4
      %s40 = sphi 0, %s42
      %s43 = sphi 0, %s40
      %s44 = sphi 0, %s43
      %s60 = sphi 0, %s44
      %s64 = sphi 0, %s64
      %s66 = sphi 0, %s64
      %s67 = sphi 0, %s66
      %s81 = sphi 0, %s67
      %s85 = sphi 0, %s85
      %s87 = sphi 0, %s85
      %s88 = sphi 0, %s87
      %s102 = sphi 0, %s88
      %s106 = sphi 0, %s106
      %s108 = sphi 0, %s106
      %s109 = sphi 0, %s108
      %s123 = sphi 0, %s109
      %s127 = sphi 0, %s127
      %s129 = sphi 0, %s127
      %s130 = sphi 0, %s129
      %s144 = sphi 0, %s130
      %s148 = sphi 0, %s148
      %s150 = sphi 0, %s148
      %s151 = sphi 0, %s150
      %s165 = sphi 0, %s151
      %s169 = sphi 0, %s169
      %s171 = sphi 0, %s169
      %s172 = sphi 0, %s171
      %s186 = sphi 0, %s172
      %s190 = sphi 0, %s190
      %s192 = sphi 0, %s190
      %s193 = sphi 0, %s192
      %s207 = sphi 0, %s193
      %s211 = sphi 0, %s211
      %s213 = sphi 0, %s211
      %s214 = sphi 0, %s213
      %s228 = sphi 0, %s214
      %s232 = sphi 0, %s232
      %s234 = sphi 0, %s232
      %s235 = sphi 0, %s234
      %s249 = sphi 0, %s235
      %s253 = sphi 0, %s253
      %s255 = sphi 0, %s253
      %s256 = sphi 0, %s255
      %s270 = sphi 0, %s256
      %s274 = sphi 0, %s274
      %s276 = sphi 0, %s274
      %s277 = sphi 0, %s276
      %s291 = sphi 0, %s277
      %s295 = sphi 0, %s295
      %s297 = sphi 0, %s295
      %s298 = sphi 0, %s297
      %s312 = sphi 0, %s298
      %s316 = sphi 0, %s316
      %s318 = sphi 0, %s316
      %s319 = sphi 0, %s318
      %s333 = sphi 0, %s319
      %s337 = sphi 0, %s337
      %s339 = sphi 0, %s337
      %s340 = sphi 0, %s339
      %s354 = sphi 0, %s340
      %s358 = sphi 0, %s358
      %s360 = sphi 0, %s358
      %s361 = sphi 0, %s360
      %s375 = sphi 0, %s361
      %s379 = sphi 0, %s379
      %s381 = sphi 0, %s379
      %s382 = sphi 0, %s381
      %s396 = sphi 0, %s382
      %s400 = sphi 0, %s400
      %s402 = sphi 0, %s400
      %s403 = sphi 0, %s402
      %s417 = sphi 0, %s403
      %s421 = sphi 0, %s421
      %s423 = sphi 0, %s421
      %s424 = sphi 0, %s423
      %s438 = sphi 0, %s424
      %s444 = sphi 0, %s446
      %s447 = sphi 0, %s444
      %s448 = sphi 0, %s447
      %s464 = sphi 0, %s448
    $region4: #{cnn_cifar_forward.1} parent=1 // loop_header_branch
      %33 = sbr.rel (%p31) target = $region8
    $region5: #{cnn_cifar_forward.1} parent=1 // loop_body
      %s35 = ssub.s32 %s30, 1
      %s36 = ssub.s32 %s30, 2
      %s37 = sadd.s32 %s30, 1
      %s38 = ssub.s32 %s30, %s37
      %p39 = scmp.eq.s32.totalorder %s38, 0
      %s41 = sadd.s32 %s40, 1
      %s42 = scalar_select %p39, %s40, %s41
      %p45 = pneg %p39
      %p46 = scmp.eq.s32.totalorder %s30, 1
      %p47 = por %p45, %p46
      %p48 = scmp.ne.s32.totalorder %s40, %s43
      %p49 = scmp.eq.s32.totalorder %s30, 0
      %p50 = por %p48, %p49
      %p51 = scmp.ne.s32.totalorder %s40, %s43
      %p52 = scmp.eq.s32.totalorder %s35, 1
      %p53 = por %p51, %p52
      %p54 = scmp.ne.s32.totalorder %s43, %s44
      %p55 = scmp.eq.s32.totalorder %s35, 0
      %p56 = por %p54, %p55
      %p57 = scmp.ne.s32.totalorder %s43, %s44
      %p58 = scmp.eq.s32.totalorder %s36, 1
      %p59 = por %p57, %p58
      %p61 = scmp.ne.s32.totalorder %s44, %s60
      %p62 = scmp.eq.s32.totalorder %s36, 0
      %p63 = por %p61, %p62
      %s65 = sadd.s32 %s64, 1
      %p68 = scmp.eq.s32.totalorder %s30, 1
      %p69 = scmp.ne.s32.totalorder %s64, %s66
      %p70 = scmp.eq.s32.totalorder %s30, 0
      %p71 = por %p69, %p70
      %p72 = scmp.ne.s32.totalorder %s64, %s66
      %p73 = scmp.eq.s32.totalorder %s35, 1
      %p74 = por %p72, %p73
      %p75 = scmp.ne.s32.totalorder %s66, %s67
      %p76 = scmp.eq.s32.totalorder %s35, 0
      %p77 = por %p75, %p76
      %p78 = scmp.ne.s32.totalorder %s66, %s67
      %p79 = scmp.eq.s32.totalorder %s36, 1
      %p80 = por %p78, %p79
      %p82 = scmp.ne.s32.totalorder %s67, %s81
      %p83 = scmp.eq.s32.totalorder %s36, 0
      %p84 = por %p82, %p83
      %s86 = sadd.s32 %s85, 1
      %p89 = scmp.eq.s32.totalorder %s30, 1
      %p90 = scmp.ne.s32.totalorder %s85, %s87
      %p91 = scmp.eq.s32.totalorder %s30, 0
      %p92 = por %p90, %p91
      %p93 = scmp.ne.s32.totalorder %s85, %s87
      %p94 = scmp.eq.s32.totalorder %s35, 1
      %p95 = por %p93, %p94
      %p96 = scmp.ne.s32.totalorder %s87, %s88
      %p97 = scmp.eq.s32.totalorder %s35, 0
      %p98 = por %p96, %p97
      %p99 = scmp.ne.s32.totalorder %s87, %s88
      %p100 = scmp.eq.s32.totalorder %s36, 1
      %p101 = por %p99, %p100
      %p103 = scmp.ne.s32.totalorder %s88, %s102
      %p104 = scmp.eq.s32.totalorder %s36, 0
      %p105 = por %p103, %p104
      %s107 = sadd.s32 %s106, 1
      %p110 = scmp.eq.s32.totalorder %s30, 1
      %p111 = scmp.ne.s32.totalorder %s106, %s108
      %p112 = scmp.eq.s32.totalorder %s30, 0
      %p113 = por %p111, %p112
      %p114 = scmp.ne.s32.totalorder %s106, %s108
      %p115 = scmp.eq.s32.totalorder %s35, 1
      %p116 = por %p114, %p115
      %p117 = scmp.ne.s32.totalorder %s108, %s109
      %p118 = scmp.eq.s32.totalorder %s35, 0
      %p119 = por %p117, %p118
      %p120 = scmp.ne.s32.totalorder %s108, %s109
      %p121 = scmp.eq.s32.totalorder %s36, 1
      %p122 = por %p120, %p121
      %p124 = scmp.ne.s32.totalorder %s109, %s123
      %p125 = scmp.eq.s32.totalorder %s36, 0
      %p126 = por %p124, %p125
      %s128 = sadd.s32 %s127, 1
      %p131 = scmp.eq.s32.totalorder %s30, 1
      %p132 = scmp.ne.s32.totalorder %s127, %s129
      %p133 = scmp.eq.s32.totalorder %s30, 0
      %p134 = por %p132, %p133
      %p135 = scmp.ne.s32.totalorder %s127, %s129
      %p136 = scmp.eq.s32.totalorder %s35, 1
      %p137 = por %p135, %p136
      %p138 = scmp.ne.s32.totalorder %s129, %s130
      %p139 = scmp.eq.s32.totalorder %s35, 0
      %p140 = por %p138, %p139
      %p141 = scmp.ne.s32.totalorder %s129, %s130
      %p142 = scmp.eq.s32.totalorder %s36, 1
      %p143 = por %p141, %p142
      %p145 = scmp.ne.s32.totalorder %s130, %s144
      %p146 = scmp.eq.s32.totalorder %s36, 0
      %p147 = por %p145, %p146
      %s149 = sadd.s32 %s148, 1
      %p152 = scmp.eq.s32.totalorder %s30, 1
      %p153 = scmp.ne.s32.totalorder %s148, %s150
      %p154 = scmp.eq.s32.totalorder %s30, 0
      %p155 = por %p153, %p154
      %p156 = scmp.ne.s32.totalorder %s148, %s150
      %p157 = scmp.eq.s32.totalorder %s35, 1
      %p158 = por %p156, %p157
      %p159 = scmp.ne.s32.totalorder %s150, %s151
      %p160 = scmp.eq.s32.totalorder %s35, 0
      %p161 = por %p159, %p160
      %p162 = scmp.ne.s32.totalorder %s150, %s151
      %p163 = scmp.eq.s32.totalorder %s36, 1
      %p164 = por %p162, %p163
      %p166 = scmp.ne.s32.totalorder %s151, %s165
      %p167 = scmp.eq.s32.totalorder %s36, 0
      %p168 = por %p166, %p167
      %s170 = sadd.s32 %s169, 1
      %p173 = scmp.eq.s32.totalorder %s30, 1
      %p174 = scmp.ne.s32.totalorder %s169, %s171
      %p175 = scmp.eq.s32.totalorder %s30, 0
      %p176 = por %p174, %p175
      %p177 = scmp.ne.s32.totalorder %s169, %s171
      %p178 = scmp.eq.s32.totalorder %s35, 1
      %p179 = por %p177, %p178
      %p180 = scmp.ne.s32.totalorder %s171, %s172
      %p181 = scmp.eq.s32.totalorder %s35, 0
      %p182 = por %p180, %p181
      %p183 = scmp.ne.s32.totalorder %s171, %s172
      %p184 = scmp.eq.s32.totalorder %s36, 1
      %p185 = por %p183, %p184
      %p187 = scmp.ne.s32.totalorder %s172, %s186
      %p188 = scmp.eq.s32.totalorder %s36, 0
      %p189 = por %p187, %p188
      %s191 = sadd.s32 %s190, 1
      %p194 = scmp.eq.s32.totalorder %s30, 1
      %p195 = scmp.ne.s32.totalorder %s190, %s192
      %p196 = scmp.eq.s32.totalorder %s30, 0
      %p197 = por %p195, %p196
      %p198 = scmp.ne.s32.totalorder %s190, %s192
      %p199 = scmp.eq.s32.totalorder %s35, 1
      %p200 = por %p198, %p199
      %p201 = scmp.ne.s32.totalorder %s192, %s193
      %p202 = scmp.eq.s32.totalorder %s35, 0
      %p203 = por %p201, %p202
      %p204 = scmp.ne.s32.totalorder %s192, %s193
      %p205 = scmp.eq.s32.totalorder %s36, 1
      %p206 = por %p204, %p205
      %p208 = scmp.ne.s32.totalorder %s193, %s207
      %p209 = scmp.eq.s32.totalorder %s36, 0
      %p210 = por %p208, %p209
      %s212 = sadd.s32 %s211, 1
      %p215 = scmp.eq.s32.totalorder %s30, 1
      %p216 = scmp.ne.s32.totalorder %s211, %s213
      %p217 = scmp.eq.s32.totalorder %s30, 0
      %p218 = por %p216, %p217
      %p219 = scmp.ne.s32.totalorder %s211, %s213
      %p220 = scmp.eq.s32.totalorder %s35, 1
      %p221 = por %p219, %p220
      %p222 = scmp.ne.s32.totalorder %s213, %s214
      %p223 = scmp.eq.s32.totalorder %s35, 0
      %p224 = por %p222, %p223
      %p225 = scmp.ne.s32.totalorder %s213, %s214
      %p226 = scmp.eq.s32.totalorder %s36, 1
      %p227 = por %p225, %p226
      %p229 = scmp.ne.s32.totalorder %s214, %s228
      %p230 = scmp.eq.s32.totalorder %s36, 0
      %p231 = por %p229, %p230
      %s233 = sadd.s32 %s232, 1
      %p236 = scmp.eq.s32.totalorder %s30, 1
      %p237 = scmp.ne.s32.totalorder %s232, %s234
      %p238 = scmp.eq.s32.totalorder %s30, 0
      %p239 = por %p237, %p238
      %p240 = scmp.ne.s32.totalorder %s232, %s234
      %p241 = scmp.eq.s32.totalorder %s35, 1
      %p242 = por %p240, %p241
      %p243 = scmp.ne.s32.totalorder %s234, %s235
      %p244 = scmp.eq.s32.totalorder %s35, 0
      %p245 = por %p243, %p244
      %p246 = scmp.ne.s32.totalorder %s234, %s235
      %p247 = scmp.eq.s32.totalorder %s36, 1
      %p248 = por %p246, %p247
      %p250 = scmp.ne.s32.totalorder %s235, %s249
      %p251 = scmp.eq.s32.totalorder %s36, 0
      %p252 = por %p250, %p251
      %s254 = sadd.s32 %s253, 1
      %p257 = scmp.eq.s32.totalorder %s30, 1
      %p258 = scmp.ne.s32.totalorder %s253, %s255
      %p259 = scmp.eq.s32.totalorder %s30, 0
      %p260 = por %p258, %p259
      %p261 = scmp.ne.s32.totalorder %s253, %s255
      %p262 = scmp.eq.s32.totalorder %s35, 1
      %p263 = por %p261, %p262
      %p264 = scmp.ne.s32.totalorder %s255, %s256
      %p265 = scmp.eq.s32.totalorder %s35, 0
      %p266 = por %p264, %p265
      %p267 = scmp.ne.s32.totalorder %s255, %s256
      %p268 = scmp.eq.s32.totalorder %s36, 1
      %p269 = por %p267, %p268
      %p271 = scmp.ne.s32.totalorder %s256, %s270
      %p272 = scmp.eq.s32.totalorder %s36, 0
      %p273 = por %p271, %p272
      %s275 = sadd.s32 %s274, 1
      %p278 = scmp.eq.s32.totalorder %s30, 1
      %p279 = scmp.ne.s32.totalorder %s274, %s276
      %p280 = scmp.eq.s32.totalorder %s30, 0
      %p281 = por %p279, %p280
      %p282 = scmp.ne.s32.totalorder %s274, %s276
      %p283 = scmp.eq.s32.totalorder %s35, 1
      %p284 = por %p282, %p283
      %p285 = scmp.ne.s32.totalorder %s276, %s277
      %p286 = scmp.eq.s32.totalorder %s35, 0
      %p287 = por %p285, %p286
      %p288 = scmp.ne.s32.totalorder %s276, %s277
      %p289 = scmp.eq.s32.totalorder %s36, 1
      %p290 = por %p288, %p289
      %p292 = scmp.ne.s32.totalorder %s277, %s291
      %p293 = scmp.eq.s32.totalorder %s36, 0
      %p294 = por %p292, %p293
      %s296 = sadd.s32 %s295, 1
      %p299 = scmp.eq.s32.totalorder %s30, 1
      %p300 = scmp.ne.s32.totalorder %s295, %s297
      %p301 = scmp.eq.s32.totalorder %s30, 0
      %p302 = por %p300, %p301
      %p303 = scmp.ne.s32.totalorder %s295, %s297
      %p304 = scmp.eq.s32.totalorder %s35, 1
      %p305 = por %p303, %p304
      %p306 = scmp.ne.s32.totalorder %s297, %s298
      %p307 = scmp.eq.s32.totalorder %s35, 0
      %p308 = por %p306, %p307
      %p309 = scmp.ne.s32.totalorder %s297, %s298
      %p310 = scmp.eq.s32.totalorder %s36, 1
      %p311 = por %p309, %p310
      %p313 = scmp.ne.s32.totalorder %s298, %s312
      %p314 = scmp.eq.s32.totalorder %s36, 0
      %p315 = por %p313, %p314
      %s317 = sadd.s32 %s316, 1
      %p320 = scmp.eq.s32.totalorder %s30, 1
      %p321 = scmp.ne.s32.totalorder %s316, %s318
      %p322 = scmp.eq.s32.totalorder %s30, 0
      %p323 = por %p321, %p322
      %p324 = scmp.ne.s32.totalorder %s316, %s318
      %p325 = scmp.eq.s32.totalorder %s35, 1
      %p326 = por %p324, %p325
      %p327 = scmp.ne.s32.totalorder %s318, %s319
      %p328 = scmp.eq.s32.totalorder %s35, 0
      %p329 = por %p327, %p328
      %p330 = scmp.ne.s32.totalorder %s318, %s319
      %p331 = scmp.eq.s32.totalorder %s36, 1
      %p332 = por %p330, %p331
      %p334 = scmp.ne.s32.totalorder %s319, %s333
      %p335 = scmp.eq.s32.totalorder %s36, 0
      %p336 = por %p334, %p335
      %s338 = sadd.s32 %s337, 1
      %p341 = scmp.eq.s32.totalorder %s30, 1
      %p342 = scmp.ne.s32.totalorder %s337, %s339
      %p343 = scmp.eq.s32.totalorder %s30, 0
      %p344 = por %p342, %p343
      %p345 = scmp.ne.s32.totalorder %s337, %s339
      %p346 = scmp.eq.s32.totalorder %s35, 1
      %p347 = por %p345, %p346
      %p348 = scmp.ne.s32.totalorder %s339, %s340
      %p349 = scmp.eq.s32.totalorder %s35, 0
      %p350 = por %p348, %p349
      %p351 = scmp.ne.s32.totalorder %s339, %s340
      %p352 = scmp.eq.s32.totalorder %s36, 1
      %p353 = por %p351, %p352
      %p355 = scmp.ne.s32.totalorder %s340, %s354
      %p356 = scmp.eq.s32.totalorder %s36, 0
      %p357 = por %p355, %p356
      %s359 = sadd.s32 %s358, 1
      %p362 = scmp.eq.s32.totalorder %s30, 1
      %p363 = scmp.ne.s32.totalorder %s358, %s360
      %p364 = scmp.eq.s32.totalorder %s30, 0
      %p365 = por %p363, %p364
      %p366 = scmp.ne.s32.totalorder %s358, %s360
      %p367 = scmp.eq.s32.totalorder %s35, 1
      %p368 = por %p366, %p367
      %p369 = scmp.ne.s32.totalorder %s360, %s361
      %p370 = scmp.eq.s32.totalorder %s35, 0
      %p371 = por %p369, %p370
      %p372 = scmp.ne.s32.totalorder %s360, %s361
      %p373 = scmp.eq.s32.totalorder %s36, 1
      %p374 = por %p372, %p373
      %p376 = scmp.ne.s32.totalorder %s361, %s375
      %p377 = scmp.eq.s32.totalorder %s36, 0
      %p378 = por %p376, %p377
      %s380 = sadd.s32 %s379, 1
      %p383 = scmp.eq.s32.totalorder %s30, 1
      %p384 = scmp.ne.s32.totalorder %s379, %s381
      %p385 = scmp.eq.s32.totalorder %s30, 0
      %p386 = por %p384, %p385
      %p387 = scmp.ne.s32.totalorder %s379, %s381
      %p388 = scmp.eq.s32.totalorder %s35, 1
      %p389 = por %p387, %p388
      %p390 = scmp.ne.s32.totalorder %s381, %s382
      %p391 = scmp.eq.s32.totalorder %s35, 0
      %p392 = por %p390, %p391
      %p393 = scmp.ne.s32.totalorder %s381, %s382
      %p394 = scmp.eq.s32.totalorder %s36, 1
      %p395 = por %p393, %p394
      %p397 = scmp.ne.s32.totalorder %s382, %s396
      %p398 = scmp.eq.s32.totalorder %s36, 0
      %p399 = por %p397, %p398
      %s401 = sadd.s32 %s400, 1
      %p404 = scmp.eq.s32.totalorder %s30, 1
      %p405 = scmp.ne.s32.totalorder %s400, %s402
      %p406 = scmp.eq.s32.totalorder %s30, 0
      %p407 = por %p405, %p406
      %p408 = scmp.ne.s32.totalorder %s400, %s402
      %p409 = scmp.eq.s32.totalorder %s35, 1
      %p410 = por %p408, %p409
      %p411 = scmp.ne.s32.totalorder %s402, %s403
      %p412 = scmp.eq.s32.totalorder %s35, 0
      %p413 = por %p411, %p412
      %p414 = scmp.ne.s32.totalorder %s402, %s403
      %p415 = scmp.eq.s32.totalorder %s36, 1
      %p416 = por %p414, %p415
      %p418 = scmp.ne.s32.totalorder %s403, %s417
      %p419 = scmp.eq.s32.totalorder %s36, 0
      %p420 = por %p418, %p419
      %s422 = sadd.s32 %s421, 1
      %p425 = scmp.eq.s32.totalorder %s30, 1
      %p426 = scmp.ne.s32.totalorder %s421, %s423
      %p427 = scmp.eq.s32.totalorder %s30, 0
      %p428 = por %p426, %p427
      %p429 = scmp.ne.s32.totalorder %s421, %s423
      %p430 = scmp.eq.s32.totalorder %s35, 1
      %p431 = por %p429, %p430
      %p432 = scmp.ne.s32.totalorder %s423, %s424
      %p433 = scmp.eq.s32.totalorder %s35, 0
      %p434 = por %p432, %p433
      %p435 = scmp.ne.s32.totalorder %s423, %s424
      %p436 = scmp.eq.s32.totalorder %s36, 1
      %p437 = por %p435, %p436
      %p439 = scmp.ne.s32.totalorder %s424, %s438
      %p440 = scmp.eq.s32.totalorder %s36, 0
      %p441 = por %p439, %p440
      %s442 = ssub.s32 %s30, %s37
      %p443 = scmp.eq.s32.totalorder %s442, 0
      %s445 = sadd.s32 %s444, 1
      %s446 = scalar_select %p443, %s444, %s445
      %p449 = pneg %p443
      %p450 = scmp.eq.s32.totalorder %s30, 1
      %p451 = por %p449, %p450
      %p452 = scmp.ne.s32.totalorder %s444, %s447
      %p453 = scmp.eq.s32.totalorder %s30, 0
      %p454 = por %p452, %p453
      %p455 = scmp.ne.s32.totalorder %s444, %s447
      %p456 = scmp.eq.s32.totalorder %s35, 1
      %p457 = por %p455, %p456
      %p458 = scmp.ne.s32.totalorder %s447, %s448
      %p459 = scmp.eq.s32.totalorder %s35, 0
      %p460 = por %p458, %p459
      %p461 = scmp.ne.s32.totalorder %s447, %s448
      %p462 = scmp.eq.s32.totalorder %s36, 1
      %p463 = por %p461, %p462
      %p465 = scmp.ne.s32.totalorder %s448, %s464
      %p466 = scmp.eq.s32.totalorder %s36, 0
      %p467 = por %p465, %p466
      %p468 = scmp.le.s32.totalorder 1, %s30
      %p469 = scmp.lt.s32.totalorder %s30, 3
      %p470 = pnand %p468, %p469
      %p471 = pneg %p470
      // Predicated region
      $region9: #{cnn_cifar_forward.1} parent=5 // pred_check
        _
      $region10: #{cnn_cifar_forward.1} parent=5 // pred_check_branch
        %473 = sbr.rel (%p470) target = $region12
      $region11: #{cnn_cifar_forward.1} parent=5 // pred_region
        %s474 = ssub.s32 %s30, 1
        // Predicated region
        $region13: #{cnn_cifar_forward.1} parent=11 // pred_check
          %p475 = pneg %p77
        $region14: #{cnn_cifar_forward.1} parent=11 // pred_check_branch
          %477 = sbr.rel (%p475) target = $region16
        $region15: #{cnn_cifar_forward.1} parent=11 // pred_region
          _
        $region16: #{cnn_cifar_forward.1} parent=11 // pred_fallthru
          _
        // Predicated region
        $region17: #{cnn_cifar_forward.1} parent=11 // pred_check
          %p478 = pneg %p98
        $region18: #{cnn_cifar_forward.1} parent=11 // pred_check_branch
          %480 = sbr.rel (%p478) target = $region20
        $region19: #{cnn_cifar_forward.1} parent=11 // pred_region
          _
        $region20: #{cnn_cifar_forward.1} parent=11 // pred_fallthru
          _
        // Predicated region
        $region21: #{cnn_cifar_forward.1} parent=11 // pred_check
          %p481 = pneg %p119
        $region22: #{cnn_cifar_forward.1} parent=11 // pred_check_branch
          %483 = sbr.rel (%p481) target = $region24
        $region23: #{cnn_cifar_forward.1} parent=11 // pred_region
          _
        $region24: #{cnn_cifar_forward.1} parent=11 // pred_fallthru
          _
        // Predicated region
        $region25: #{cnn_cifar_forward.1} parent=11 // pred_check
          %p484 = pneg %p140
        $region26: #{cnn_cifar_forward.1} parent=11 // pred_check_branch
          %486 = sbr.rel (%p484) target = $region28
        $region27: #{cnn_cifar_forward.1} parent=11 // pred_region
          _
        $region28: #{cnn_cifar_forward.1} parent=11 // pred_fallthru
          _
        // Predicated region
        $region29: #{cnn_cifar_forward.1} parent=11 // pred_check
          %p487 = pneg %p161
        $region30: #{cnn_cifar_forward.1} parent=11 // pred_check_branch
          %489 = sbr.rel (%p487) target = $region32
        $region31: #{cnn_cifar_forward.1} parent=11 // pred_region
          _
        $region32: #{cnn_cifar_forward.1} parent=11 // pred_fallthru
          _
        // Predicated region
        $region33: #{cnn_cifar_forward.1} parent=11 // pred_check
          %p490 = pneg %p182
        $region34: #{cnn_cifar_forward.1} parent=11 // pred_check_branch
          %492 = sbr.rel (%p490) target = $region36
        $region35: #{cnn_cifar_forward.1} parent=11 // pred_region
          _
        $region36: #{cnn_cifar_forward.1} parent=11 // pred_fallthru
          _
        // Predicated region
        $region37: #{cnn_cifar_forward.1} parent=11 // pred_check
          %p493 = pneg %p203
        $region38: #{cnn_cifar_forward.1} parent=11 // pred_check_branch
          %495 = sbr.rel (%p493) target = $region40
        $region39: #{cnn_cifar_forward.1} parent=11 // pred_region
          _
        $region40: #{cnn_cifar_forward.1} parent=11 // pred_fallthru
          _
        // Predicated region
        $region41: #{cnn_cifar_forward.1} parent=11 // pred_check
          %p496 = pneg %p224
        $region42: #{cnn_cifar_forward.1} parent=11 // pred_check_branch
          %498 = sbr.rel (%p496) target = $region44
        $region43: #{cnn_cifar_forward.1} parent=11 // pred_region
          _
        $region44: #{cnn_cifar_forward.1} parent=11 // pred_fallthru
          _
        // Predicated region
        $region45: #{cnn_cifar_forward.1} parent=11 // pred_check
          %p499 = pneg %p245
        $region46: #{cnn_cifar_forward.1} parent=11 // pred_check_branch
          %501 = sbr.rel (%p499) target = $region48
        $region47: #{cnn_cifar_forward.1} parent=11 // pred_region
          _
        $region48: #{cnn_cifar_forward.1} parent=11 // pred_fallthru
          _
        // Predicated region
        $region49: #{cnn_cifar_forward.1} parent=11 // pred_check
          %p502 = pneg %p266
        $region50: #{cnn_cifar_forward.1} parent=11 // pred_check_branch
          %504 = sbr.rel (%p502) target = $region52
        $region51: #{cnn_cifar_forward.1} parent=11 // pred_region
          _
        $region52: #{cnn_cifar_forward.1} parent=11 // pred_fallthru
          _
        // Predicated region
        $region53: #{cnn_cifar_forward.1} parent=11 // pred_check
          %p505 = pneg %p287
        $region54: #{cnn_cifar_forward.1} parent=11 // pred_check_branch
          %507 = sbr.rel (%p505) target = $region56
        $region55: #{cnn_cifar_forward.1} parent=11 // pred_region
          %s509 = ssub.s32 2560, 2560
          %510 = vsyncadd [#allocation5], %s509
          %s511 = sshll.u32 [#allocation4], 4
          %s512 = int_to_ptr.vmem [resolvable:$true] %s511
          %517 = dma.hbm_to_vmem [thread:$0]  %s11, 2560, %s512, [#allocation5], 128, 128, 8
        $region56: #{cnn_cifar_forward.1} parent=11 // pred_fallthru
          _
        // Predicated region
        $region57: #{cnn_cifar_forward.1} parent=11 // pred_check
          %p518 = pneg %p308
        $region58: #{cnn_cifar_forward.1} parent=11 // pred_check_branch
          %520 = sbr.rel (%p518) target = $region60
        $region59: #{cnn_cifar_forward.1} parent=11 // pred_region
          %s522 = ssub.s32 2560, 2560
          %523 = vsyncadd [#allocation8], %s522
          %s524 = sshll.u32 [#allocation7], 4
          %s525 = int_to_ptr.vmem [resolvable:$true] %s524
          %530 = dma.hbm_to_vmem [thread:$0]  %s12, 2560, %s525, [#allocation8], 128, 128, 8
        $region60: #{cnn_cifar_forward.1} parent=11 // pred_fallthru
          _
        // Predicated region
        $region61: #{cnn_cifar_forward.1} parent=11 // pred_check
          %p531 = pneg %p329
        $region62: #{cnn_cifar_forward.1} parent=11 // pred_check_branch
          %533 = sbr.rel (%p531) target = $region64
        $region63: #{cnn_cifar_forward.1} parent=11 // pred_region
          _
        $region64: #{cnn_cifar_forward.1} parent=11 // pred_fallthru
          _
        // Predicated region
        $region65: #{cnn_cifar_forward.1} parent=11 // pred_check
          %p534 = pneg %p350
        $region66: #{cnn_cifar_forward.1} parent=11 // pred_check_branch
          %536 = sbr.rel (%p534) target = $region68
        $region67: #{cnn_cifar_forward.1} parent=11 // pred_region
          _
        $region68: #{cnn_cifar_forward.1} parent=11 // pred_fallthru
          _
        // Predicated region
        $region69: #{cnn_cifar_forward.1} parent=11 // pred_check
          %p537 = pneg %p371
        $region70: #{cnn_cifar_forward.1} parent=11 // pred_check_branch
          %539 = sbr.rel (%p537) target = $region72
        $region71: #{cnn_cifar_forward.1} parent=11 // pred_region
          _
        $region72: #{cnn_cifar_forward.1} parent=11 // pred_fallthru
          _
        // Predicated region
        $region73: #{cnn_cifar_forward.1} parent=11 // pred_check
          %p540 = pneg %p392
        $region74: #{cnn_cifar_forward.1} parent=11 // pred_check_branch
          %542 = sbr.rel (%p540) target = $region76
        $region75: #{cnn_cifar_forward.1} parent=11 // pred_region
          _
        $region76: #{cnn_cifar_forward.1} parent=11 // pred_fallthru
          _
        // Predicated region
        $region77: #{cnn_cifar_forward.1} parent=11 // pred_check
          %p543 = pneg %p413
        $region78: #{cnn_cifar_forward.1} parent=11 // pred_check_branch
          %545 = sbr.rel (%p543) target = $region80
        $region79: #{cnn_cifar_forward.1} parent=11 // pred_region
          _
        $region80: #{cnn_cifar_forward.1} parent=11 // pred_fallthru
          _
        // Predicated region
        $region81: #{cnn_cifar_forward.1} parent=11 // pred_check
          %p546 = pneg %p434
        $region82: #{cnn_cifar_forward.1} parent=11 // pred_check_branch
          %548 = sbr.rel (%p546) target = $region84
        $region83: #{cnn_cifar_forward.1} parent=11 // pred_region
          _
        $region84: #{cnn_cifar_forward.1} parent=11 // pred_fallthru
          _
      $region12: #{cnn_cifar_forward.1} parent=5 // pred_fallthru
        _
      %p549 = scmp.lt.s32.totalorder %s30, 2
      // Predicated region
      $region85: #{cnn_cifar_forward.1} parent=5 // pred_check
        %p550 = pneg %p549
      $region86: #{cnn_cifar_forward.1} parent=5 // pred_check_branch
        %552 = sbr.rel (%p550) target = $region88
      $region87: #{cnn_cifar_forward.1} parent=5 // pred_region
        // Predicated region
        $region89: #{cnn_cifar_forward.1} parent=87 // pred_check
          %p553 = pneg %p50
        $region90: #{cnn_cifar_forward.1} parent=87 // pred_check_branch
          %555 = sbr.rel (%p553) target = $region92
        $region91: #{cnn_cifar_forward.1} parent=87 // pred_region
          %p556 = scmp.lt.s32.totalorder %s30, 1
          %s557 = scalar_select %p556, %s30, 1
          %s558 = smul.addr %s557, 12
          %s559 = smul.addr %s558, 8
          %s560 = scalar_lea.vmem %s0, %s559
        $region92: #{cnn_cifar_forward.1} parent=87 // pred_fallthru
          _
      $region88: #{cnn_cifar_forward.1} parent=5 // pred_fallthru
        _
      %p561 = scmp.le.s32.totalorder 1, %s30
      %p562 = scmp.lt.s32.totalorder %s30, 3
      %p563 = pnand %p561, %p562
      %p564 = pneg %p563
      // Predicated region
      $region93: #{cnn_cifar_forward.1} parent=5 // pred_check
        _
      $region94: #{cnn_cifar_forward.1} parent=5 // pred_check_branch
        %566 = sbr.rel (%p563) target = $region96
      $region95: #{cnn_cifar_forward.1} parent=5 // pred_region
        %s567 = ssub.s32 %s30, 1
        // Predicated region
        $region97: #{cnn_cifar_forward.1} parent=95 // pred_check
          %p568 = pneg %p287
        $region98: #{cnn_cifar_forward.1} parent=95 // pred_check_branch
          %570 = sbr.rel (%p568) target = $region100
        $region99: #{cnn_cifar_forward.1} parent=95 // pred_region
          %571 = dma.done [#allocation5], 2560
        $region100: #{cnn_cifar_forward.1} parent=95 // pred_fallthru
          _
        // Predicated region
        $region101: #{cnn_cifar_forward.1} parent=95 // pred_check
          %p572 = pneg %p308
        $region102: #{cnn_cifar_forward.1} parent=95 // pred_check_branch
          %574 = sbr.rel (%p572) target = $region104
        $region103: #{cnn_cifar_forward.1} parent=95 // pred_region
          %575 = dma.done [#allocation8], 2560
        $region104: #{cnn_cifar_forward.1} parent=95 // pred_fallthru
          _
        %p576 = scmp.lt.s32.totalorder %s35, 1
        %s577 = scalar_select %p576, %s35, 1
        %s578 = smul.addr %s577, 12
        %s579 = smul.addr %s578, 8
        %s580 = scalar_lea.vmem %s0, %s579
        %p581 = pneg %p56
        %p582 = pneg %p53
        %p583 = pneg %p77
        %p584 = pneg %p74
        %p585 = pneg %p98
        %p586 = pneg %p95
        %p587 = pneg %p119
        %p588 = pneg %p116
        %p589 = pneg %p140
        %p590 = pneg %p137
        %p591 = pneg %p161
        %p592 = pneg %p158
        %p593 = pneg %p182
        %p594 = pneg %p179
        %p595 = pneg %p203
        %p596 = pneg %p200
        %p597 = pneg %p224
        %p598 = pneg %p221
        %p599 = pneg %p245
        %p600 = pneg %p242
        %p601 = pneg %p266
        %p602 = pneg %p263
        %p603 = pneg %p287
        %p604 = pneg %p284
        %p605 = pneg %p308
        %p606 = pneg %p305
        %p607 = pneg %p329
        %p608 = pneg %p326
        %p609 = pneg %p350
        %p610 = pneg %p347
        %p611 = pneg %p371
        %p612 = pneg %p368
        %p613 = pneg %p392
        %p614 = pneg %p389
        %p615 = pneg %p413
        %p616 = pneg %p410
        %p617 = pneg %p434
        %p618 = pneg %p431
        %p619 = pneg %p460
        %p620 = pneg %p457
        %s621 = sand.u32 %s447, 1
        %s622 = scalar_lea.sflag [#allocation6], %s621
        %s623 = sand.u32 %s447, 1
        %s624 = scalar_lea.vmem [#allocation9], %s623
        %p625 = scmp.lt.s32.totalorder %s35, 1
        %s626 = scalar_select %p625, %s35, 1
        %s627 = smul.addr %s626, 12
        %s628 = smul.addr %s627, 8
        %s629 = scalar_lea.vmem %s0, %s628
        %v630 = vld [vmem:[%s629] sm:$0xff]
        %v631 = vld [vmem:[%s629 + $0x8] sm:$0xff]
        %v632 = vld [vmem:[%s629 + $0x10] sm:$0xff]
        %v633 = vld [vmem:[%s629 + $0x18] sm:$0xf]
        %v634 = vld [vmem:[%s1] sm:$0xff]
        %v635 = vld [vmem:[%s1 + $0x8] sm:$0xff]
        %v636 = vld [vmem:[%s1 + $0x10] sm:$0xff]
        %v637 = vld [vmem:[%s1 + $0x18] sm:$0xff]
        %v638 = vld [vmem:[%s1 + $0x20] sm:$0xff]
        %v639 = vld [vmem:[%s1 + $0x28] sm:$0xff]
        %v640 = vld [vmem:[%s1 + $0x30] sm:$0xff]
        %v641 = vld [vmem:[%s1 + $0x38] sm:$0xff]
        %s642 = scalar_lea.vmem %s629, 32
        %v643 = vld [vmem:[%s642] sm:$0xff]
        %v644 = vld [vmem:[%s642 + $0x8] sm:$0xff]
        %v645 = vld [vmem:[%s642 + $0x10] sm:$0xff]
        %v646 = vld [vmem:[%s642 + $0x18] sm:$0xf]
        %s647 = scalar_lea.vmem %s1, 64
        %v648 = vld [vmem:[%s647] sm:$0xff]
        %v649 = vld [vmem:[%s647 + $0x8] sm:$0xff]
        %v650 = vld [vmem:[%s647 + $0x10] sm:$0xff]
        %v651 = vld [vmem:[%s647 + $0x18] sm:$0xff]
        %v652 = vld [vmem:[%s647 + $0x20] sm:$0xff]
        %v653 = vld [vmem:[%s647 + $0x28] sm:$0xff]
        %v654 = vld [vmem:[%s647 + $0x30] sm:$0xff]
        %v655 = vld [vmem:[%s647 + $0x38] sm:$0xff]
        %vm656 = vcmask 261120
        %v658 = vsel %vm656, %v643, 0
        %v661 = vsel %vm656, %v644, 0
        %v664 = vsel %vm656, %v645, 0
        %v667 = vsel %vm656, %v646, 0
        %669 = vmatprep.subr.mxu0 %v649
        %670 = vmatpush1.msra.mxu0 %v648
        %671 = vmatprep.subr.mxu0 %v651
        %672 = vmatpush1.msra.mxu0 %v650
        %673 = vmatprep.subr.mxu0 %v653
        %674 = vmatpush1.msra.mxu0 %v652
        %675 = vmatprep.subr.mxu0 %v655
        %676 = vmatpush1.msra.mxu0 %v654
        %677 = vmatprep.subr.mxu0 0.0
        %678 = vmatpush1.msra.mxu0 0.0
        %679 = vmatprep.subr.mxu0 0.0
        %680 = vmatpush1.msra.mxu0 0.0
        %681 = vmatprep.subr.mxu0 0.0
        %682 = vmatpush1.msra.mxu0 0.0
        %683 = vmatprep.subr.mxu0 0.0
        %684 = vmatpush1.msra.mxu0 0.0
        %685 = vmatprep.subr.mxu0 0.0
        %686 = vmatpush1.msra.mxu0 0.0
        %687 = vmatprep.subr.mxu0 0.0
        %688 = vmatpush1.msra.mxu0 0.0
        %689 = vmatprep.subr.mxu0 0.0
        %690 = vmatpush1.msra.mxu0 0.0
        %691 = vmatprep.subr.mxu0 0.0
        %692 = vmatpush1.msra.mxu0 0.0
        %693 = vmatprep.subr.mxu0 0.0
        %694 = vmatpush1.msra.mxu0 0.0
        %695 = vmatprep.subr.mxu0 0.0
        %696 = vmatpush1.msra.mxu0 0.0
        %697 = vmatprep.subr.mxu0 0.0
        %698 = vmatpush1.msra.mxu0 0.0
        %699 = vmatprep.subr.mxu0 0.0
        %700 = vmatpush1.msra.mxu0 0.0
        %701 = vmatprep.subr.mxu0 0.0
        %702 = vmatpush1.msra.mxu0 0.0
        %703 = vmatprep.subr.mxu0 0.0
        %704 = vmatpush1.msra.mxu0 0.0
        %705 = vmatprep.subr.mxu0 0.0
        %706 = vmatpush1.msra.mxu0 0.0
        %707 = vmatprep.subr.mxu0 0.0
        %708 = vmatpush1.msra.mxu0 0.0
        %709 = vmatprep.subr.mxu0 0.0
        %710 = vmatpush1.msra.mxu0 0.0
        %711 = vmatprep.subr.mxu0 0.0
        %712 = vmatpush1.msra.mxu0 0.0
        %713 = vmatprep.subr.mxu0 0.0
        %714 = vmatpush1.msra.mxu0 0.0
        %715 = vmatprep.subr.mxu0 0.0
        %716 = vmatpush1.msra.mxu0 0.0
        %717 = vmatprep.subr.mxu0 0.0
        %718 = vmatpush1.msra.mxu0 0.0
        %719 = vmatprep.subr.mxu0 0.0
        %720 = vmatpush1.msra.mxu0 0.0
        %721 = vmatprep.subr.mxu0 0.0
        %722 = vmatpush1.msra.mxu0 0.0
        %723 = vmatprep.subr.mxu0 0.0
        %724 = vmatpush1.msra.mxu0 0.0
        %725 = vmatprep.subr.mxu0 0.0
        %726 = vmatpush1.msra.mxu0 0.0
        %727 = vmatprep.subr.mxu0 0.0
        %728 = vmatpush1.msra.mxu0 0.0
        %729 = vmatprep.subr.mxu0 0.0
        %730 = vmatpush1.msra.mxu0 0.0
        %731 = vmatprep.subr.mxu0 0.0
        %732 = vmatpush1.msra.mxu0 0.0
        %733 = vmatprep.mubr.f32.mxu0 0.0
        %734 = vmatmul.mubr.f32.gmra.mrb[0].mxu0 %v658
        %v735 = vpop.f32.mrb[0].mxu0
        %v736 = vadd.f32 0.0, %v735
        %v737 = vpop.f32.mrb[0].mxu0
        %v738 = vadd.f32 0.0, %v737
        %739 = vmatprep.mubr.f32.mxu0 0.0
        %740 = vmatmul.mubr.f32.gmra.mrb[0].mxu0 %v661
        %v741 = vpop.f32.mrb[0].mxu0
        %v742 = vadd.f32 0.0, %v741
        %v743 = vpop.f32.mrb[0].mxu0
        %v744 = vadd.f32 0.0, %v743
        %745 = vmatprep.mubr.f32.mxu0 0.0
        %746 = vmatmul.mubr.f32.gmra.mrb[0].mxu0 %v664
        %v747 = vpop.f32.mrb[0].mxu0
        %v748 = vadd.f32 0.0, %v747
        %v749 = vpop.f32.mrb[0].mxu0
        %v750 = vadd.f32 0.0, %v749
        %751 = vmatprep.mubr.f32.mxu0 0.0
        %752 = vmatmul.mubr.f32.gmra.mrb[0].mxu0 %v667
        %v753 = vpop.f32.mrb[0].mxu0
        %v754 = vadd.f32 0.0, %v753
        %v755 = vpop.f32.mrb[0].mxu0
        %v756 = vadd.f32 0.0, %v755
        %757 = vdwg.mxu0
        %v759 = vsel %vm656, %v630, 0
        %v762 = vsel %vm656, %v631, 0
        %v765 = vsel %vm656, %v632, 0
        %v768 = vsel %vm656, %v633, 0
        %770 = vmatprep.subr.mxu0 %v635
        %771 = vmatpush1.msra.mxu0 %v634
        %772 = vmatprep.subr.mxu0 %v637
        %773 = vmatpush1.msra.mxu0 %v636
        %774 = vmatprep.subr.mxu0 %v639
        %775 = vmatpush1.msra.mxu0 %v638
        %776 = vmatprep.subr.mxu0 %v641
        %777 = vmatpush1.msra.mxu0 %v640
        %778 = vmatprep.subr.mxu0 0.0
        %779 = vmatpush1.msra.mxu0 0.0
        %780 = vmatprep.subr.mxu0 0.0
        %781 = vmatpush1.msra.mxu0 0.0
        %782 = vmatprep.subr.mxu0 0.0
        %783 = vmatpush1.msra.mxu0 0.0
        %784 = vmatprep.subr.mxu0 0.0
        %785 = vmatpush1.msra.mxu0 0.0
        %786 = vmatprep.subr.mxu0 0.0
        %787 = vmatpush1.msra.mxu0 0.0
        %788 = vmatprep.subr.mxu0 0.0
        %789 = vmatpush1.msra.mxu0 0.0
        %790 = vmatprep.subr.mxu0 0.0
        %791 = vmatpush1.msra.mxu0 0.0
        %792 = vmatprep.subr.mxu0 0.0
        %793 = vmatpush1.msra.mxu0 0.0
        %794 = vmatprep.subr.mxu0 0.0
        %795 = vmatpush1.msra.mxu0 0.0
        %796 = vmatprep.subr.mxu0 0.0
        %797 = vmatpush1.msra.mxu0 0.0
        %798 = vmatprep.subr.mxu0 0.0
        %799 = vmatpush1.msra.mxu0 0.0
        %800 = vmatprep.subr.mxu0 0.0
        %801 = vmatpush1.msra.mxu0 0.0
        %802 = vmatprep.subr.mxu0 0.0
        %803 = vmatpush1.msra.mxu0 0.0
        %804 = vmatprep.subr.mxu0 0.0
        %805 = vmatpush1.msra.mxu0 0.0
        %806 = vmatprep.subr.mxu0 0.0
        %807 = vmatpush1.msra.mxu0 0.0
        %808 = vmatprep.subr.mxu0 0.0
        %809 = vmatpush1.msra.mxu0 0.0
        %810 = vmatprep.subr.mxu0 0.0
        %811 = vmatpush1.msra.mxu0 0.0
        %812 = vmatprep.subr.mxu0 0.0
        %813 = vmatpush1.msra.mxu0 0.0
        %814 = vmatprep.subr.mxu0 0.0
        %815 = vmatpush1.msra.mxu0 0.0
        %816 = vmatprep.subr.mxu0 0.0
        %817 = vmatpush1.msra.mxu0 0.0
        %818 = vmatprep.subr.mxu0 0.0
        %819 = vmatpush1.msra.mxu0 0.0
        %820 = vmatprep.subr.mxu0 0.0
        %821 = vmatpush1.msra.mxu0 0.0
        %822 = vmatprep.subr.mxu0 0.0
        %823 = vmatpush1.msra.mxu0 0.0
        %824 = vmatprep.subr.mxu0 0.0
        %825 = vmatpush1.msra.mxu0 0.0
        %826 = vmatprep.subr.mxu0 0.0
        %827 = vmatpush1.msra.mxu0 0.0
        %828 = vmatprep.subr.mxu0 0.0
        %829 = vmatpush1.msra.mxu0 0.0
        %830 = vmatprep.subr.mxu0 0.0
        %831 = vmatpush1.msra.mxu0 0.0
        %832 = vmatprep.subr.mxu0 0.0
        %833 = vmatpush1.msra.mxu0 0.0
        %834 = vmatprep.mubr.f32.mxu0 0.0
        %835 = vmatmul.mubr.f32.gmra.mrb[0].mxu0 %v759
        %v836 = vpop.f32.mrb[0].mxu0
        %v837 = vadd.f32 %v736, %v836
        %v838 = vpop.f32.mrb[0].mxu0
        %v839 = vadd.f32 %v738, %v838
        %840 = vmatprep.mubr.f32.mxu0 0.0
        %841 = vmatmul.mubr.f32.gmra.mrb[0].mxu0 %v762
        %v842 = vpop.f32.mrb[0].mxu0
        %v843 = vadd.f32 %v742, %v842
        %v844 = vpop.f32.mrb[0].mxu0
        %v845 = vadd.f32 %v744, %v844
        %846 = vmatprep.mubr.f32.mxu0 0.0
        %847 = vmatmul.mubr.f32.gmra.mrb[0].mxu0 %v765
        %v848 = vpop.f32.mrb[0].mxu0
        %v849 = vadd.f32 %v748, %v848
        %v850 = vpop.f32.mrb[0].mxu0
        %v851 = vadd.f32 %v750, %v850
        %852 = vmatprep.mubr.f32.mxu0 0.0
        %853 = vmatmul.mubr.f32.gmra.mrb[0].mxu0 %v768
        %v854 = vpop.f32.mrb[0].mxu0
        %v855 = vadd.f32 %v754, %v854
        %v856 = vpop.f32.mrb[0].mxu0
        %v857 = vadd.f32 %v756, %v856
        %858 = vdwg.mxu0
        %s859 = scalar_lea.vmem %s629, 64
        %v860 = vld [vmem:[%s859] sm:$0xff]
        %v861 = vld [vmem:[%s859 + $0x8] sm:$0xff]
        %v862 = vld [vmem:[%s859 + $0x10] sm:$0xff]
        %v863 = vld [vmem:[%s859 + $0x18] sm:$0xf]
        %s864 = scalar_lea.vmem %s1, 128
        %v865 = vld [vmem:[%s864] sm:$0xff]
        %v866 = vld [vmem:[%s864 + $0x8] sm:$0xff]
        %v867 = vld [vmem:[%s864 + $0x10] sm:$0xff]
        %v868 = vld [vmem:[%s864 + $0x18] sm:$0xff]
        %v869 = vld [vmem:[%s864 + $0x20] sm:$0xff]
        %v870 = vld [vmem:[%s864 + $0x28] sm:$0xff]
        %v871 = vld [vmem:[%s864 + $0x30] sm:$0xff]
        %v872 = vld [vmem:[%s864 + $0x38] sm:$0xff]
        %v874 = vsel %vm656, %v860, 0
        %v877 = vsel %vm656, %v861, 0
        %v880 = vsel %vm656, %v862, 0
        %v883 = vsel %vm656, %v863, 0
        %885 = vmatprep.subr.mxu0 %v866
        %886 = vmatpush1.msra.mxu0 %v865
        %887 = vmatprep.subr.mxu0 %v868
        %888 = vmatpush1.msra.mxu0 %v867
        %889 = vmatprep.subr.mxu0 %v870
        %890 = vmatpush1.msra.mxu0 %v869
        %891 = vmatprep.subr.mxu0 %v872
        %892 = vmatpush1.msra.mxu0 %v871
        %893 = vmatprep.subr.mxu0 0.0
        %894 = vmatpush1.msra.mxu0 0.0
        %895 = vmatprep.subr.mxu0 0.0
        %896 = vmatpush1.msra.mxu0 0.0
        %897 = vmatprep.subr.mxu0 0.0
        %898 = vmatpush1.msra.mxu0 0.0
        %899 = vmatprep.subr.mxu0 0.0
        %900 = vmatpush1.msra.mxu0 0.0
        %901 = vmatprep.subr.mxu0 0.0
        %902 = vmatpush1.msra.mxu0 0.0
        %903 = vmatprep.subr.mxu0 0.0
        %904 = vmatpush1.msra.mxu0 0.0
        %905 = vmatprep.subr.mxu0 0.0
        %906 = vmatpush1.msra.mxu0 0.0
        %907 = vmatprep.subr.mxu0 0.0
        %908 = vmatpush1.msra.mxu0 0.0
        %909 = vmatprep.subr.mxu0 0.0
        %910 = vmatpush1.msra.mxu0 0.0
        %911 = vmatprep.subr.mxu0 0.0
        %912 = vmatpush1.msra.mxu0 0.0
        %913 = vmatprep.subr.mxu0 0.0
        %914 = vmatpush1.msra.mxu0 0.0
        %915 = vmatprep.subr.mxu0 0.0
        %916 = vmatpush1.msra.mxu0 0.0
        %917 = vmatprep.subr.mxu0 0.0
        %918 = vmatpush1.msra.mxu0 0.0
        %919 = vmatprep.subr.mxu0 0.0
        %920 = vmatpush1.msra.mxu0 0.0
        %921 = vmatprep.subr.mxu0 0.0
        %922 = vmatpush1.msra.mxu0 0.0
        %923 = vmatprep.subr.mxu0 0.0
        %924 = vmatpush1.msra.mxu0 0.0
        %925 = vmatprep.subr.mxu0 0.0
        %926 = vmatpush1.msra.mxu0 0.0
        %927 = vmatprep.subr.mxu0 0.0
        %928 = vmatpush1.msra.mxu0 0.0
        %929 = vmatprep.subr.mxu0 0.0
        %930 = vmatpush1.msra.mxu0 0.0
        %931 = vmatprep.subr.mxu0 0.0
        %932 = vmatpush1.msra.mxu0 0.0
        %933 = vmatprep.subr.mxu0 0.0
        %934 = vmatpush1.msra.mxu0 0.0
        %935 = vmatprep.subr.mxu0 0.0
        %936 = vmatpush1.msra.mxu0 0.0
        %937 = vmatprep.subr.mxu0 0.0
        %938 = vmatpush1.msra.mxu0 0.0
        %939 = vmatprep.subr.mxu0 0.0
        %940 = vmatpush1.msra.mxu0 0.0
        %941 = vmatprep.subr.mxu0 0.0
        %942 = vmatpush1.msra.mxu0 0.0
        %943 = vmatprep.subr.mxu0 0.0
        %944 = vmatpush1.msra.mxu0 0.0
        %945 = vmatprep.subr.mxu0 0.0
        %946 = vmatpush1.msra.mxu0 0.0
        %947 = vmatprep.subr.mxu0 0.0
        %948 = vmatpush1.msra.mxu0 0.0
        %949 = vmatprep.mubr.f32.mxu0 0.0
        %950 = vmatmul.mubr.f32.gmra.mrb[0].mxu0 %v874
        %v951 = vpop.f32.mrb[0].mxu0
        %v952 = vadd.f32 0.0, %v951
        %v953 = vpop.f32.mrb[0].mxu0
        %v954 = vadd.f32 0.0, %v953
        %955 = vmatprep.mubr.f32.mxu0 0.0
        %956 = vmatmul.mubr.f32.gmra.mrb[0].mxu0 %v877
        %v957 = vpop.f32.mrb[0].mxu0
        %v958 = vadd.f32 0.0, %v957
        %v959 = vpop.f32.mrb[0].mxu0
        %v960 = vadd.f32 0.0, %v959
        %961 = vmatprep.mubr.f32.mxu0 0.0
        %962 = vmatmul.mubr.f32.gmra.mrb[0].mxu0 %v880
        %v963 = vpop.f32.mrb[0].mxu0
        %v964 = vadd.f32 0.0, %v963
        %v965 = vpop.f32.mrb[0].mxu0
        %v966 = vadd.f32 0.0, %v965
        %967 = vmatprep.mubr.f32.mxu0 0.0
        %968 = vmatmul.mubr.f32.gmra.mrb[0].mxu0 %v883
        %v969 = vpop.f32.mrb[0].mxu0
        %v970 = vadd.f32 0.0, %v969
        %v971 = vpop.f32.mrb[0].mxu0
        %v972 = vadd.f32 0.0, %v971
        %973 = vdwg.mxu0
        %v974 = vadd.f32 %v837, %v952
        %v975 = vadd.f32 %v839, %v954
        %v976 = vadd.f32 %v843, %v958
        %v977 = vadd.f32 %v845, %v960
        %v978 = vadd.f32 %v849, %v964
        %v979 = vadd.f32 %v851, %v966
        %v980 = vadd.f32 %v855, %v970
        %v981 = vadd.f32 %v857, %v972
        %v982 = vld [vmem:[%s629 + $0x1] sm:$0xff]
        %v983 = vld [vmem:[%s629 + $0x9] sm:$0xff]
        %v984 = vld [vmem:[%s629 + $0x11] sm:$0xff]
        %v985 = vld [vmem:[%s629 + $0x19] sm:$0xf]
        %s986 = scalar_lea.vmem %s1, 192
        %v987 = vld [vmem:[%s986] sm:$0xff]
        %v988 = vld [vmem:[%s986 + $0x8] sm:$0xff]
        %v989 = vld [vmem:[%s986 + $0x10] sm:$0xff]
        %v990 = vld [vmem:[%s986 + $0x18] sm:$0xff]
        %v991 = vld [vmem:[%s986 + $0x20] sm:$0xff]
        %v992 = vld [vmem:[%s986 + $0x28] sm:$0xff]
        %v993 = vld [vmem:[%s986 + $0x30] sm:$0xff]
        %v994 = vld [vmem:[%s986 + $0x38] sm:$0xff]
        %v996 = vsel %vm656, %v982, 0
        %v999 = vsel %vm656, %v983, 0
        %v1002 = vsel %vm656, %v984, 0
        %v1005 = vsel %vm656, %v985, 0
        %1007 = vmatprep.subr.mxu0 %v988
        %1008 = vmatpush1.msra.mxu0 %v987
        %1009 = vmatprep.subr.mxu0 %v990
        %1010 = vmatpush1.msra.mxu0 %v989
        %1011 = vmatprep.subr.mxu0 %v992
        %1012 = vmatpush1.msra.mxu0 %v991
        %1013 = vmatprep.subr.mxu0 %v994
        %1014 = vmatpush1.msra.mxu0 %v993
        %1015 = vmatprep.subr.mxu0 0.0
        %1016 = vmatpush1.msra.mxu0 0.0
        %1017 = vmatprep.subr.mxu0 0.0
        %1018 = vmatpush1.msra.mxu0 0.0
        %1019 = vmatprep.subr.mxu0 0.0
        %1020 = vmatpush1.msra.mxu0 0.0
        %1021 = vmatprep.subr.mxu0 0.0
        %1022 = vmatpush1.msra.mxu0 0.0
        %1023 = vmatprep.subr.mxu0 0.0
        %1024 = vmatpush1.msra.mxu0 0.0
        %1025 = vmatprep.subr.mxu0 0.0
        %1026 = vmatpush1.msra.mxu0 0.0
        %1027 = vmatprep.subr.mxu0 0.0
        %1028 = vmatpush1.msra.mxu0 0.0
        %1029 = vmatprep.subr.mxu0 0.0
        %1030 = vmatpush1.msra.mxu0 0.0
        %1031 = vmatprep.subr.mxu0 0.0
        %1032 = vmatpush1.msra.mxu0 0.0
        %1033 = vmatprep.subr.mxu0 0.0
        %1034 = vmatpush1.msra.mxu0 0.0
        %1035 = vmatprep.subr.mxu0 0.0
        %1036 = vmatpush1.msra.mxu0 0.0
        %1037 = vmatprep.subr.mxu0 0.0
        %1038 = vmatpush1.msra.mxu0 0.0
        %1039 = vmatprep.subr.mxu0 0.0
        %1040 = vmatpush1.msra.mxu0 0.0
        %1041 = vmatprep.subr.mxu0 0.0
        %1042 = vmatpush1.msra.mxu0 0.0
        %1043 = vmatprep.subr.mxu0 0.0
        %1044 = vmatpush1.msra.mxu0 0.0
        %1045 = vmatprep.subr.mxu0 0.0
        %1046 = vmatpush1.msra.mxu0 0.0
        %1047 = vmatprep.subr.mxu0 0.0
        %1048 = vmatpush1.msra.mxu0 0.0
        %1049 = vmatprep.subr.mxu0 0.0
        %1050 = vmatpush1.msra.mxu0 0.0
        %1051 = vmatprep.subr.mxu0 0.0
        %1052 = vmatpush1.msra.mxu0 0.0
        %1053 = vmatprep.subr.mxu0 0.0
        %1054 = vmatpush1.msra.mxu0 0.0
        %1055 = vmatprep.subr.mxu0 0.0
        %1056 = vmatpush1.msra.mxu0 0.0
        %1057 = vmatprep.subr.mxu0 0.0
        %1058 = vmatpush1.msra.mxu0 0.0
        %1059 = vmatprep.subr.mxu0 0.0
        %1060 = vmatpush1.msra.mxu0 0.0
        %1061 = vmatprep.subr.mxu0 0.0
        %1062 = vmatpush1.msra.mxu0 0.0
        %1063 = vmatprep.subr.mxu0 0.0
        %1064 = vmatpush1.msra.mxu0 0.0
        %1065 = vmatprep.subr.mxu0 0.0
        %1066 = vmatpush1.msra.mxu0 0.0
        %1067 = vmatprep.subr.mxu0 0.0
        %1068 = vmatpush1.msra.mxu0 0.0
        %1069 = vmatprep.subr.mxu0 0.0
        %1070 = vmatpush1.msra.mxu0 0.0
        %1071 = vmatprep.mubr.f32.mxu0 0.0
        %1072 = vmatmul.mubr.f32.gmra.mrb[0].mxu0 %v996
        %v1073 = vpop.f32.mrb[0].mxu0
        %v1074 = vadd.f32 0.0, %v1073
        %v1075 = vpop.f32.mrb[0].mxu0
        %v1076 = vadd.f32 0.0, %v1075
        %1077 = vmatprep.mubr.f32.mxu0 0.0
        %1078 = vmatmul.mubr.f32.gmra.mrb[0].mxu0 %v999
        %v1079 = vpop.f32.mrb[0].mxu0
        %v1080 = vadd.f32 0.0, %v1079
        %v1081 = vpop.f32.mrb[0].mxu0
        %v1082 = vadd.f32 0.0, %v1081
        %1083 = vmatprep.mubr.f32.mxu0 0.0
        %1084 = vmatmul.mubr.f32.gmra.mrb[0].mxu0 %v1002
        %v1085 = vpop.f32.mrb[0].mxu0
        %v1086 = vadd.f32 0.0, %v1085
        %v1087 = vpop.f32.mrb[0].mxu0
        %v1088 = vadd.f32 0.0, %v1087
        %1089 = vmatprep.mubr.f32.mxu0 0.0
        %1090 = vmatmul.mubr.f32.gmra.mrb[0].mxu0 %v1005
        %v1091 = vpop.f32.mrb[0].mxu0
        %v1092 = vadd.f32 0.0, %v1091
        %v1093 = vpop.f32.mrb[0].mxu0
        %v1094 = vadd.f32 0.0, %v1093
        %1095 = vdwg.mxu0
        %v1096 = vadd.f32 %v974, %v1074
        %v1097 = vadd.f32 %v975, %v1076
        %v1098 = vadd.f32 %v976, %v1080
        %v1099 = vadd.f32 %v977, %v1082
        %v1100 = vadd.f32 %v978, %v1086
        %v1101 = vadd.f32 %v979, %v1088
        %v1102 = vadd.f32 %v980, %v1092
        %v1103 = vadd.f32 %v981, %v1094
        %v1104 = vld [vmem:[%s642 + $0x1] sm:$0xff]
        %v1105 = vld [vmem:[%s642 + $0x9] sm:$0xff]
        %v1106 = vld [vmem:[%s642 + $0x11] sm:$0xff]
        %v1107 = vld [vmem:[%s642 + $0x19] sm:$0xf]
        %s1108 = scalar_lea.vmem %s1, 256
        %v1109 = vld [vmem:[%s1108] sm:$0xff]
        %v1110 = vld [vmem:[%s1108 + $0x8] sm:$0xff]
        %v1111 = vld [vmem:[%s1108 + $0x10] sm:$0xff]
        %v1112 = vld [vmem:[%s1108 + $0x18] sm:$0xff]
        %v1113 = vld [vmem:[%s1108 + $0x20] sm:$0xff]
        %v1114 = vld [vmem:[%s1108 + $0x28] sm:$0xff]
        %v1115 = vld [vmem:[%s1108 + $0x30] sm:$0xff]
        %v1116 = vld [vmem:[%s1108 + $0x38] sm:$0xff]
        %v1118 = vsel %vm656, %v1104, 0
        %v1121 = vsel %vm656, %v1105, 0
        %v1124 = vsel %vm656, %v1106, 0
        %v1127 = vsel %vm656, %v1107, 0
        %1129 = vmatprep.subr.mxu0 %v1110
        %1130 = vmatpush1.msra.mxu0 %v1109
        %1131 = vmatprep.subr.mxu0 %v1112
        %1132 = vmatpush1.msra.mxu0 %v1111
        %1133 = vmatprep.subr.mxu0 %v1114
        %1134 = vmatpush1.msra.mxu0 %v1113
        %1135 = vmatprep.subr.mxu0 %v1116
        %1136 = vmatpush1.msra.mxu0 %v1115
        %1137 = vmatprep.subr.mxu0 0.0
        %1138 = vmatpush1.msra.mxu0 0.0
        %1139 = vmatprep.subr.mxu0 0.0
        %1140 = vmatpush1.msra.mxu0 0.0
        %1141 = vmatprep.subr.mxu0 0.0
        %1142 = vmatpush1.msra.mxu0 0.0
        %1143 = vmatprep.subr.mxu0 0.0
        %1144 = vmatpush1.msra.mxu0 0.0
        %1145 = vmatprep.subr.mxu0 0.0
        %1146 = vmatpush1.msra.mxu0 0.0
        %1147 = vmatprep.subr.mxu0 0.0
        %1148 = vmatpush1.msra.mxu0 0.0
        %1149 = vmatprep.subr.mxu0 0.0
        %1150 = vmatpush1.msra.mxu0 0.0
        %1151 = vmatprep.subr.mxu0 0.0
        %1152 = vmatpush1.msra.mxu0 0.0
        %1153 = vmatprep.subr.mxu0 0.0
        %1154 = vmatpush1.msra.mxu0 0.0
        %1155 = vmatprep.subr.mxu0 0.0
        %1156 = vmatpush1.msra.mxu0 0.0
        %1157 = vmatprep.subr.mxu0 0.0
        %1158 = vmatpush1.msra.mxu0 0.0
        %1159 = vmatprep.subr.mxu0 0.0
        %1160 = vmatpush1.msra.mxu0 0.0
        %1161 = vmatprep.subr.mxu0 0.0
        %1162 = vmatpush1.msra.mxu0 0.0
        %1163 = vmatprep.subr.mxu0 0.0
        %1164 = vmatpush1.msra.mxu0 0.0
        %1165 = vmatprep.subr.mxu0 0.0
        %1166 = vmatpush1.msra.mxu0 0.0
        %1167 = vmatprep.subr.mxu0 0.0
        %1168 = vmatpush1.msra.mxu0 0.0
        %1169 = vmatprep.subr.mxu0 0.0
        %1170 = vmatpush1.msra.mxu0 0.0
        %1171 = vmatprep.subr.mxu0 0.0
        %1172 = vmatpush1.msra.mxu0 0.0
        %1173 = vmatprep.subr.mxu0 0.0
        %1174 = vmatpush1.msra.mxu0 0.0
        %1175 = vmatprep.subr.mxu0 0.0
        %1176 = vmatpush1.msra.mxu0 0.0
        %1177 = vmatprep.subr.mxu0 0.0
        %1178 = vmatpush1.msra.mxu0 0.0
        %1179 = vmatprep.subr.mxu0 0.0
        %1180 = vmatpush1.msra.mxu0 0.0
        %1181 = vmatprep.subr.mxu0 0.0
        %1182 = vmatpush1.msra.mxu0 0.0
        %1183 = vmatprep.subr.mxu0 0.0
        %1184 = vmatpush1.msra.mxu0 0.0
        %1185 = vmatprep.subr.mxu0 0.0
        %1186 = vmatpush1.msra.mxu0 0.0
        %1187 = vmatprep.subr.mxu0 0.0
        %1188 = vmatpush1.msra.mxu0 0.0
        %1189 = vmatprep.subr.mxu0 0.0
        %1190 = vmatpush1.msra.mxu0 0.0
        %1191 = vmatprep.subr.mxu0 0.0
        %1192 = vmatpush1.msra.mxu0 0.0
        %1193 = vmatprep.mubr.f32.mxu0 0.0
        %1194 = vmatmul.mubr.f32.gmra.mrb[0].mxu0 %v1118
        %v1195 = vpop.f32.mrb[0].mxu0
        %v1196 = vadd.f32 0.0, %v1195
        %v1197 = vpop.f32.mrb[0].mxu0
        %v1198 = vadd.f32 0.0, %v1197
        %1199 = vmatprep.mubr.f32.mxu0 0.0
        %1200 = vmatmul.mubr.f32.gmra.mrb[0].mxu0 %v1121
        %v1201 = vpop.f32.mrb[0].mxu0
        %v1202 = vadd.f32 0.0, %v1201
        %v1203 = vpop.f32.mrb[0].mxu0
        %v1204 = vadd.f32 0.0, %v1203
        %1205 = vmatprep.mubr.f32.mxu0 0.0
        %1206 = vmatmul.mubr.f32.gmra.mrb[0].mxu0 %v1124
        %v1207 = vpop.f32.mrb[0].mxu0
        %v1208 = vadd.f32 0.0, %v1207
        %v1209 = vpop.f32.mrb[0].mxu0
        %v1210 = vadd.f32 0.0, %v1209
        %1211 = vmatprep.mubr.f32.mxu0 0.0
        %1212 = vmatmul.mubr.f32.gmra.mrb[0].mxu0 %v1127
        %v1213 = vpop.f32.mrb[0].mxu0
        %v1214 = vadd.f32 0.0, %v1213
        %v1215 = vpop.f32.mrb[0].mxu0
        %v1216 = vadd.f32 0.0, %v1215
        %1217 = vdwg.mxu0
        %v1218 = vadd.f32 %v1096, %v1196
        %v1219 = vadd.f32 %v1097, %v1198
        %v1220 = vadd.f32 %v1098, %v1202
        %v1221 = vadd.f32 %v1099, %v1204
        %v1222 = vadd.f32 %v1100, %v1208
        %v1223 = vadd.f32 %v1101, %v1210
        %v1224 = vadd.f32 %v1102, %v1214
        %v1225 = vadd.f32 %v1103, %v1216
        %v1226 = vld [vmem:[%s859 + $0x1] sm:$0xff]
        %v1227 = vld [vmem:[%s859 + $0x9] sm:$0xff]
        %v1228 = vld [vmem:[%s859 + $0x11] sm:$0xff]
        %v1229 = vld [vmem:[%s859 + $0x19] sm:$0xf]
        %s1230 = scalar_lea.vmem %s1, 320
        %v1231 = vld [vmem:[%s1230] sm:$0xff]
        %v1232 = vld [vmem:[%s1230 + $0x8] sm:$0xff]
        %v1233 = vld [vmem:[%s1230 + $0x10] sm:$0xff]
        %v1234 = vld [vmem:[%s1230 + $0x18] sm:$0xff]
        %v1235 = vld [vmem:[%s1230 + $0x20] sm:$0xff]
        %v1236 = vld [vmem:[%s1230 + $0x28] sm:$0xff]
        %v1237 = vld [vmem:[%s1230 + $0x30] sm:$0xff]
        %v1238 = vld [vmem:[%s1230 + $0x38] sm:$0xff]
        %v1240 = vsel %vm656, %v1226, 0
        %v1243 = vsel %vm656, %v1227, 0
        %v1246 = vsel %vm656, %v1228, 0
        %v1249 = vsel %vm656, %v1229, 0
        %1251 = vmatprep.subr.mxu0 %v1232
        %1252 = vmatpush1.msra.mxu0 %v1231
        %1253 = vmatprep.subr.mxu0 %v1234
        %1254 = vmatpush1.msra.mxu0 %v1233
        %1255 = vmatprep.subr.mxu0 %v1236
        %1256 = vmatpush1.msra.mxu0 %v1235
        %1257 = vmatprep.subr.mxu0 %v1238
        %1258 = vmatpush1.msra.mxu0 %v1237
        %1259 = vmatprep.subr.mxu0 0.0
        %1260 = vmatpush1.msra.mxu0 0.0
        %1261 = vmatprep.subr.mxu0 0.0
        %1262 = vmatpush1.msra.mxu0 0.0
        %1263 = vmatprep.subr.mxu0 0.0
        %1264 = vmatpush1.msra.mxu0 0.0
        %1265 = vmatprep.subr.mxu0 0.0
        %1266 = vmatpush1.msra.mxu0 0.0
        %1267 = vmatprep.subr.mxu0 0.0
        %1268 = vmatpush1.msra.mxu0 0.0
        %1269 = vmatprep.subr.mxu0 0.0
        %1270 = vmatpush1.msra.mxu0 0.0
        %1271 = vmatprep.subr.mxu0 0.0
        %1272 = vmatpush1.msra.mxu0 0.0
        %1273 = vmatprep.subr.mxu0 0.0
        %1274 = vmatpush1.msra.mxu0 0.0
        %1275 = vmatprep.subr.mxu0 0.0
        %1276 = vmatpush1.msra.mxu0 0.0
        %1277 = vmatprep.subr.mxu0 0.0
        %1278 = vmatpush1.msra.mxu0 0.0
        %1279 = vmatprep.subr.mxu0 0.0
        %1280 = vmatpush1.msra.mxu0 0.0
        %1281 = vmatprep.subr.mxu0 0.0
        %1282 = vmatpush1.msra.mxu0 0.0
        %1283 = vmatprep.subr.mxu0 0.0
        %1284 = vmatpush1.msra.mxu0 0.0
        %1285 = vmatprep.subr.mxu0 0.0
        %1286 = vmatpush1.msra.mxu0 0.0
        %1287 = vmatprep.subr.mxu0 0.0
        %1288 = vmatpush1.msra.mxu0 0.0
        %1289 = vmatprep.subr.mxu0 0.0
        %1290 = vmatpush1.msra.mxu0 0.0
        %1291 = vmatprep.subr.mxu0 0.0
        %1292 = vmatpush1.msra.mxu0 0.0
        %1293 = vmatprep.subr.mxu0 0.0
        %1294 = vmatpush1.msra.mxu0 0.0
        %1295 = vmatprep.subr.mxu0 0.0
        %1296 = vmatpush1.msra.mxu0 0.0
        %1297 = vmatprep.subr.mxu0 0.0
        %1298 = vmatpush1.msra.mxu0 0.0
        %1299 = vmatprep.subr.mxu0 0.0
        %1300 = vmatpush1.msra.mxu0 0.0
        %1301 = vmatprep.subr.mxu0 0.0
        %1302 = vmatpush1.msra.mxu0 0.0
        %1303 = vmatprep.subr.mxu0 0.0
        %1304 = vmatpush1.msra.mxu0 0.0
        %1305 = vmatprep.subr.mxu0 0.0
        %1306 = vmatpush1.msra.mxu0 0.0
        %1307 = vmatprep.subr.mxu0 0.0
        %1308 = vmatpush1.msra.mxu0 0.0
        %1309 = vmatprep.subr.mxu0 0.0
        %1310 = vmatpush1.msra.mxu0 0.0
        %1311 = vmatprep.subr.mxu0 0.0
        %1312 = vmatpush1.msra.mxu0 0.0
        %1313 = vmatprep.subr.mxu0 0.0
        %1314 = vmatpush1.msra.mxu0 0.0
        %1315 = vmatprep.mubr.f32.mxu0 0.0
        %1316 = vmatmul.mubr.f32.gmra.mrb[0].mxu0 %v1240
        %v1317 = vpop.f32.mrb[0].mxu0
        %v1318 = vadd.f32 0.0, %v1317
        %v1319 = vpop.f32.mrb[0].mxu0
        %v1320 = vadd.f32 0.0, %v1319
        %1321 = vmatprep.mubr.f32.mxu0 0.0
        %1322 = vmatmul.mubr.f32.gmra.mrb[0].mxu0 %v1243
        %v1323 = vpop.f32.mrb[0].mxu0
        %v1324 = vadd.f32 0.0, %v1323
        %v1325 = vpop.f32.mrb[0].mxu0
        %v1326 = vadd.f32 0.0, %v1325
        %1327 = vmatprep.mubr.f32.mxu0 0.0
        %1328 = vmatmul.mubr.f32.gmra.mrb[0].mxu0 %v1246
        %v1329 = vpop.f32.mrb[0].mxu0
        %v1330 = vadd.f32 0.0, %v1329
        %v1331 = vpop.f32.mrb[0].mxu0
        %v1332 = vadd.f32 0.0, %v1331
        %1333 = vmatprep.mubr.f32.mxu0 0.0
        %1334 = vmatmul.mubr.f32.gmra.mrb[0].mxu0 %v1249
        %v1335 = vpop.f32.mrb[0].mxu0
        %v1336 = vadd.f32 0.0, %v1335
        %v1337 = vpop.f32.mrb[0].mxu0
        %v1338 = vadd.f32 0.0, %v1337
        %1339 = vdwg.mxu0
        %v1340 = vadd.f32 %v1218, %v1318
        %v1341 = vadd.f32 %v1219, %v1320
        %v1342 = vadd.f32 %v1220, %v1324
        %v1343 = vadd.f32 %v1221, %v1326
        %v1344 = vadd.f32 %v1222, %v1330
        %v1345 = vadd.f32 %v1223, %v1332
        %v1346 = vadd.f32 %v1224, %v1336
        %v1347 = vadd.f32 %v1225, %v1338
        %v1348 = vld [vmem:[%s629 + $0x2] sm:$0xff]
        %v1349 = vld [vmem:[%s629 + $0xa] sm:$0xff]
        %v1350 = vld [vmem:[%s629 + $0x12] sm:$0xff]
        %v1351 = vld [vmem:[%s629 + $0x1a] sm:$0xf]
        %s1352 = scalar_lea.vmem %s1, 384
        %v1353 = vld [vmem:[%s1352] sm:$0xff]
        %v1354 = vld [vmem:[%s1352 + $0x8] sm:$0xff]
        %v1355 = vld [vmem:[%s1352 + $0x10] sm:$0xff]
        %v1356 = vld [vmem:[%s1352 + $0x18] sm:$0xff]
        %v1357 = vld [vmem:[%s1352 + $0x20] sm:$0xff]
        %v1358 = vld [vmem:[%s1352 + $0x28] sm:$0xff]
        %v1359 = vld [vmem:[%s1352 + $0x30] sm:$0xff]
        %v1360 = vld [vmem:[%s1352 + $0x38] sm:$0xff]
        %v1362 = vsel %vm656, %v1348, 0
        %v1365 = vsel %vm656, %v1349, 0
        %v1368 = vsel %vm656, %v1350, 0
        %v1371 = vsel %vm656, %v1351, 0
        %1373 = vmatprep.subr.mxu0 %v1354
        %1374 = vmatpush1.msra.mxu0 %v1353
        %1375 = vmatprep.subr.mxu0 %v1356
        %1376 = vmatpush1.msra.mxu0 %v1355
        %1377 = vmatprep.subr.mxu0 %v1358
        %1378 = vmatpush1.msra.mxu0 %v1357
        %1379 = vmatprep.subr.mxu0 %v1360
        %1380 = vmatpush1.msra.mxu0 %v1359
        %1381 = vmatprep.subr.mxu0 0.0
        %1382 = vmatpush1.msra.mxu0 0.0
        %1383 = vmatprep.subr.mxu0 0.0
        %1384 = vmatpush1.msra.mxu0 0.0
        %1385 = vmatprep.subr.mxu0 0.0
        %1386 = vmatpush1.msra.mxu0 0.0
        %1387 = vmatprep.subr.mxu0 0.0
        %1388 = vmatpush1.msra.mxu0 0.0
        %1389 = vmatprep.subr.mxu0 0.0
        %1390 = vmatpush1.msra.mxu0 0.0
        %1391 = vmatprep.subr.mxu0 0.0
        %1392 = vmatpush1.msra.mxu0 0.0
        %1393 = vmatprep.subr.mxu0 0.0
        %1394 = vmatpush1.msra.mxu0 0.0
        %1395 = vmatprep.subr.mxu0 0.0
        %1396 = vmatpush1.msra.mxu0 0.0
        %1397 = vmatprep.subr.mxu0 0.0
        %1398 = vmatpush1.msra.mxu0 0.0
        %1399 = vmatprep.subr.mxu0 0.0
        %1400 = vmatpush1.msra.mxu0 0.0
        %1401 = vmatprep.subr.mxu0 0.0
        %1402 = vmatpush1.msra.mxu0 0.0
        %1403 = vmatprep.subr.mxu0 0.0
        %1404 = vmatpush1.msra.mxu0 0.0
        %1405 = vmatprep.subr.mxu0 0.0
        %1406 = vmatpush1.msra.mxu0 0.0
        %1407 = vmatprep.subr.mxu0 0.0
        %1408 = vmatpush1.msra.mxu0 0.0
        %1409 = vmatprep.subr.mxu0 0.0
        %1410 = vmatpush1.msra.mxu0 0.0
        %1411 = vmatprep.subr.mxu0 0.0
        %1412 = vmatpush1.msra.mxu0 0.0
        %1413 = vmatprep.subr.mxu0 0.0
        %1414 = vmatpush1.msra.mxu0 0.0
        %1415 = vmatprep.subr.mxu0 0.0
        %1416 = vmatpush1.msra.mxu0 0.0
        %1417 = vmatprep.subr.mxu0 0.0
        %1418 = vmatpush1.msra.mxu0 0.0
        %1419 = vmatprep.subr.mxu0 0.0
        %1420 = vmatpush1.msra.mxu0 0.0
        %1421 = vmatprep.subr.mxu0 0.0
        %1422 = vmatpush1.msra.mxu0 0.0
        %1423 = vmatprep.subr.mxu0 0.0
        %1424 = vmatpush1.msra.mxu0 0.0
        %1425 = vmatprep.subr.mxu0 0.0
        %1426 = vmatpush1.msra.mxu0 0.0
        %1427 = vmatprep.subr.mxu0 0.0
        %1428 = vmatpush1.msra.mxu0 0.0
        %1429 = vmatprep.subr.mxu0 0.0
        %1430 = vmatpush1.msra.mxu0 0.0
        %1431 = vmatprep.subr.mxu0 0.0
        %1432 = vmatpush1.msra.mxu0 0.0
        %1433 = vmatprep.subr.mxu0 0.0
        %1434 = vmatpush1.msra.mxu0 0.0
        %1435 = vmatprep.subr.mxu0 0.0
        %1436 = vmatpush1.msra.mxu0 0.0
        %1437 = vmatprep.mubr.f32.mxu0 0.0
        %1438 = vmatmul.mubr.f32.gmra.mrb[0].mxu0 %v1362
        %v1439 = vpop.f32.mrb[0].mxu0
        %v1440 = vadd.f32 0.0, %v1439
        %v1441 = vpop.f32.mrb[0].mxu0
        %v1442 = vadd.f32 0.0, %v1441
        %1443 = vmatprep.mubr.f32.mxu0 0.0
        %1444 = vmatmul.mubr.f32.gmra.mrb[0].mxu0 %v1365
        %v1445 = vpop.f32.mrb[0].mxu0
        %v1446 = vadd.f32 0.0, %v1445
        %v1447 = vpop.f32.mrb[0].mxu0
        %v1448 = vadd.f32 0.0, %v1447
        %1449 = vmatprep.mubr.f32.mxu0 0.0
        %1450 = vmatmul.mubr.f32.gmra.mrb[0].mxu0 %v1368
        %v1451 = vpop.f32.mrb[0].mxu0
        %v1452 = vadd.f32 0.0, %v1451
        %v1453 = vpop.f32.mrb[0].mxu0
        %v1454 = vadd.f32 0.0, %v1453
        %1455 = vmatprep.mubr.f32.mxu0 0.0
        %1456 = vmatmul.mubr.f32.gmra.mrb[0].mxu0 %v1371
        %v1457 = vpop.f32.mrb[0].mxu0
        %v1458 = vadd.f32 0.0, %v1457
        %v1459 = vpop.f32.mrb[0].mxu0
        %v1460 = vadd.f32 0.0, %v1459
        %1461 = vdwg.mxu0
        %v1462 = vadd.f32 %v1340, %v1440
        %v1463 = vadd.f32 %v1341, %v1442
        %v1464 = vadd.f32 %v1342, %v1446
        %v1465 = vadd.f32 %v1343, %v1448
        %v1466 = vadd.f32 %v1344, %v1452
        %v1467 = vadd.f32 %v1345, %v1454
        %v1468 = vadd.f32 %v1346, %v1458
        %v1469 = vadd.f32 %v1347, %v1460
        %v1470 = vld [vmem:[%s642 + $0x2] sm:$0xff]
        %v1471 = vld [vmem:[%s642 + $0xa] sm:$0xff]
        %v1472 = vld [vmem:[%s642 + $0x12] sm:$0xff]
        %v1473 = vld [vmem:[%s642 + $0x1a] sm:$0xf]
        %s1474 = scalar_lea.vmem %s1, 448
        %v1475 = vld [vmem:[%s1474] sm:$0xff]
        %v1476 = vld [vmem:[%s1474 + $0x8] sm:$0xff]
        %v1477 = vld [vmem:[%s1474 + $0x10] sm:$0xff]
        %v1478 = vld [vmem:[%s1474 + $0x18] sm:$0xff]
        %v1479 = vld [vmem:[%s1474 + $0x20] sm:$0xff]
        %v1480 = vld [vmem:[%s1474 + $0x28] sm:$0xff]
        %v1481 = vld [vmem:[%s1474 + $0x30] sm:$0xff]
        %v1482 = vld [vmem:[%s1474 + $0x38] sm:$0xff]
        %v1484 = vsel %vm656, %v1470, 0
        %v1487 = vsel %vm656, %v1471, 0
        %v1490 = vsel %vm656, %v1472, 0
        %v1493 = vsel %vm656, %v1473, 0
        %1495 = vmatprep.subr.mxu0 %v1476
        %1496 = vmatpush1.msra.mxu0 %v1475
        %1497 = vmatprep.subr.mxu0 %v1478
        %1498 = vmatpush1.msra.mxu0 %v1477
        %1499 = vmatprep.subr.mxu0 %v1480
        %1500 = vmatpush1.msra.mxu0 %v1479
        %1501 = vmatprep.subr.mxu0 %v1482
        %1502 = vmatpush1.msra.mxu0 %v1481
        %1503 = vmatprep.subr.mxu0 0.0
        %1504 = vmatpush1.msra.mxu0 0.0
        %1505 = vmatprep.subr.mxu0 0.0
        %1506 = vmatpush1.msra.mxu0 0.0
        %1507 = vmatprep.subr.mxu0 0.0
        %1508 = vmatpush1.msra.mxu0 0.0
        %1509 = vmatprep.subr.mxu0 0.0
        %1510 = vmatpush1.msra.mxu0 0.0
        %1511 = vmatprep.subr.mxu0 0.0
        %1512 = vmatpush1.msra.mxu0 0.0
        %1513 = vmatprep.subr.mxu0 0.0
        %1514 = vmatpush1.msra.mxu0 0.0
        %1515 = vmatprep.subr.mxu0 0.0
        %1516 = vmatpush1.msra.mxu0 0.0
        %1517 = vmatprep.subr.mxu0 0.0
        %1518 = vmatpush1.msra.mxu0 0.0
        %1519 = vmatprep.subr.mxu0 0.0
        %1520 = vmatpush1.msra.mxu0 0.0
        %1521 = vmatprep.subr.mxu0 0.0
        %1522 = vmatpush1.msra.mxu0 0.0
        %1523 = vmatprep.subr.mxu0 0.0
        %1524 = vmatpush1.msra.mxu0 0.0
        %1525 = vmatprep.subr.mxu0 0.0
        %1526 = vmatpush1.msra.mxu0 0.0
        %1527 = vmatprep.subr.mxu0 0.0
        %1528 = vmatpush1.msra.mxu0 0.0
        %1529 = vmatprep.subr.mxu0 0.0
        %1530 = vmatpush1.msra.mxu0 0.0
        %1531 = vmatprep.subr.mxu0 0.0
        %1532 = vmatpush1.msra.mxu0 0.0
        %1533 = vmatprep.subr.mxu0 0.0
        %1534 = vmatpush1.msra.mxu0 0.0
        %1535 = vmatprep.subr.mxu0 0.0
        %1536 = vmatpush1.msra.mxu0 0.0
        %1537 = vmatprep.subr.mxu0 0.0
        %1538 = vmatpush1.msra.mxu0 0.0
        %1539 = vmatprep.subr.mxu0 0.0
        %1540 = vmatpush1.msra.mxu0 0.0
        %1541 = vmatprep.subr.mxu0 0.0
        %1542 = vmatpush1.msra.mxu0 0.0
        %1543 = vmatprep.subr.mxu0 0.0
        %1544 = vmatpush1.msra.mxu0 0.0
        %1545 = vmatprep.subr.mxu0 0.0
        %1546 = vmatpush1.msra.mxu0 0.0
        %1547 = vmatprep.subr.mxu0 0.0
        %1548 = vmatpush1.msra.mxu0 0.0
        %1549 = vmatprep.subr.mxu0 0.0
        %1550 = vmatpush1.msra.mxu0 0.0
        %1551 = vmatprep.subr.mxu0 0.0
        %1552 = vmatpush1.msra.mxu0 0.0
        %1553 = vmatprep.subr.mxu0 0.0
        %1554 = vmatpush1.msra.mxu0 0.0
        %1555 = vmatprep.subr.mxu0 0.0
        %1556 = vmatpush1.msra.mxu0 0.0
        %1557 = vmatprep.subr.mxu0 0.0
        %1558 = vmatpush1.msra.mxu0 0.0
        %1559 = vmatprep.mubr.f32.mxu0 0.0
        %1560 = vmatmul.mubr.f32.gmra.mrb[0].mxu0 %v1484
        %v1561 = vpop.f32.mrb[0].mxu0
        %v1562 = vadd.f32 0.0, %v1561
        %v1563 = vpop.f32.mrb[0].mxu0
        %v1564 = vadd.f32 0.0, %v1563
        %1565 = vmatprep.mubr.f32.mxu0 0.0
        %1566 = vmatmul.mubr.f32.gmra.mrb[0].mxu0 %v1487
        %v1567 = vpop.f32.mrb[0].mxu0
        %v1568 = vadd.f32 0.0, %v1567
        %v1569 = vpop.f32.mrb[0].mxu0
        %v1570 = vadd.f32 0.0, %v1569
        %1571 = vmatprep.mubr.f32.mxu0 0.0
        %1572 = vmatmul.mubr.f32.gmra.mrb[0].mxu0 %v1490
        %v1573 = vpop.f32.mrb[0].mxu0
        %v1574 = vadd.f32 0.0, %v1573
        %v1575 = vpop.f32.mrb[0].mxu0
        %v1576 = vadd.f32 0.0, %v1575
        %1577 = vmatprep.mubr.f32.mxu0 0.0
        %1578 = vmatmul.mubr.f32.gmra.mrb[0].mxu0 %v1493
        %v1579 = vpop.f32.mrb[0].mxu0
        %v1580 = vadd.f32 0.0, %v1579
        %v1581 = vpop.f32.mrb[0].mxu0
        %v1582 = vadd.f32 0.0, %v1581
        %1583 = vdwg.mxu0
        %v1584 = vadd.f32 %v1462, %v1562
        %v1585 = vadd.f32 %v1463, %v1564
        %v1586 = vadd.f32 %v1464, %v1568
        %v1587 = vadd.f32 %v1465, %v1570
        %v1588 = vadd.f32 %v1466, %v1574
        %v1589 = vadd.f32 %v1467, %v1576
        %v1590 = vadd.f32 %v1468, %v1580
        %v1591 = vadd.f32 %v1469, %v1582
        %v1592 = vld [vmem:[%s859 + $0x2] sm:$0xff]
        %v1593 = vld [vmem:[%s859 + $0xa] sm:$0xff]
        %v1594 = vld [vmem:[%s859 + $0x12] sm:$0xff]
        %v1595 = vld [vmem:[%s859 + $0x1a] sm:$0xf]
        %s1596 = scalar_lea.vmem %s1, 512
        %v1597 = vld [vmem:[%s1596] sm:$0xff]
        %v1598 = vld [vmem:[%s1596 + $0x8] sm:$0xff]
        %v1599 = vld [vmem:[%s1596 + $0x10] sm:$0xff]
        %v1600 = vld [vmem:[%s1596 + $0x18] sm:$0xff]
        %v1601 = vld [vmem:[%s1596 + $0x20] sm:$0xff]
        %v1602 = vld [vmem:[%s1596 + $0x28] sm:$0xff]
        %v1603 = vld [vmem:[%s1596 + $0x30] sm:$0xff]
        %v1604 = vld [vmem:[%s1596 + $0x38] sm:$0xff]
        %v1606 = vsel %vm656, %v1592, 0
        %v1609 = vsel %vm656, %v1593, 0
        %v1612 = vsel %vm656, %v1594, 0
        %v1615 = vsel %vm656, %v1595, 0
        %1617 = vmatprep.subr.mxu0 %v1598
        %1618 = vmatpush1.msra.mxu0 %v1597
        %1619 = vmatprep.subr.mxu0 %v1600
        %1620 = vmatpush1.msra.mxu0 %v1599
        %1621 = vmatprep.subr.mxu0 %v1602
        %1622 = vmatpush1.msra.mxu0 %v1601
        %1623 = vmatprep.subr.mxu0 %v1604
        %1624 = vmatpush1.msra.mxu0 %v1603
        %1625 = vmatprep.subr.mxu0 0.0
        %1626 = vmatpush1.msra.mxu0 0.0
        %1627 = vmatprep.subr.mxu0 0.0
        %1628 = vmatpush1.msra.mxu0 0.0
        %1629 = vmatprep.subr.mxu0 0.0
        %1630 = vmatpush1.msra.mxu0 0.0
        %1631 = vmatprep.subr.mxu0 0.0
        %1632 = vmatpush1.msra.mxu0 0.0
        %1633 = vmatprep.subr.mxu0 0.0
        %1634 = vmatpush1.msra.mxu0 0.0
        %1635 = vmatprep.subr.mxu0 0.0
        %1636 = vmatpush1.msra.mxu0 0.0
        %1637 = vmatprep.subr.mxu0 0.0
        %1638 = vmatpush1.msra.mxu0 0.0
        %1639 = vmatprep.subr.mxu0 0.0
        %1640 = vmatpush1.msra.mxu0 0.0
        %1641 = vmatprep.subr.mxu0 0.0
        %1642 = vmatpush1.msra.mxu0 0.0
        %1643 = vmatprep.subr.mxu0 0.0
        %1644 = vmatpush1.msra.mxu0 0.0
        %1645 = vmatprep.subr.mxu0 0.0
        %1646 = vmatpush1.msra.mxu0 0.0
        %1647 = vmatprep.subr.mxu0 0.0
        %1648 = vmatpush1.msra.mxu0 0.0
        %1649 = vmatprep.subr.mxu0 0.0
        %1650 = vmatpush1.msra.mxu0 0.0
        %1651 = vmatprep.subr.mxu0 0.0
        %1652 = vmatpush1.msra.mxu0 0.0
        %1653 = vmatprep.subr.mxu0 0.0
        %1654 = vmatpush1.msra.mxu0 0.0
        %1655 = vmatprep.subr.mxu0 0.0
        %1656 = vmatpush1.msra.mxu0 0.0
        %1657 = vmatprep.subr.mxu0 0.0
        %1658 = vmatpush1.msra.mxu0 0.0
        %1659 = vmatprep.subr.mxu0 0.0
        %1660 = vmatpush1.msra.mxu0 0.0
        %1661 = vmatprep.subr.mxu0 0.0
        %1662 = vmatpush1.msra.mxu0 0.0
        %1663 = vmatprep.subr.mxu0 0.0
        %1664 = vmatpush1.msra.mxu0 0.0
        %1665 = vmatprep.subr.mxu0 0.0
        %1666 = vmatpush1.msra.mxu0 0.0
        %1667 = vmatprep.subr.mxu0 0.0
        %1668 = vmatpush1.msra.mxu0 0.0
        %1669 = vmatprep.subr.mxu0 0.0
        %1670 = vmatpush1.msra.mxu0 0.0
        %1671 = vmatprep.subr.mxu0 0.0
        %1672 = vmatpush1.msra.mxu0 0.0
        %1673 = vmatprep.subr.mxu0 0.0
        %1674 = vmatpush1.msra.mxu0 0.0
        %1675 = vmatprep.subr.mxu0 0.0
        %1676 = vmatpush1.msra.mxu0 0.0
        %1677 = vmatprep.subr.mxu0 0.0
        %1678 = vmatpush1.msra.mxu0 0.0
        %1679 = vmatprep.subr.mxu0 0.0
        %1680 = vmatpush1.msra.mxu0 0.0
        %1681 = vmatprep.mubr.f32.mxu0 0.0
        %1682 = vmatmul.mubr.f32.gmra.mrb[0].mxu0 %v1606
        %v1683 = vpop.f32.mrb[0].mxu0
        %v1684 = vadd.f32 0.0, %v1683
        %v1685 = vpop.f32.mrb[0].mxu0
        %v1686 = vadd.f32 0.0, %v1685
        %1687 = vmatprep.mubr.f32.mxu0 0.0
        %1688 = vmatmul.mubr.f32.gmra.mrb[0].mxu0 %v1609
        %v1689 = vpop.f32.mrb[0].mxu0
        %v1690 = vadd.f32 0.0, %v1689
        %v1691 = vpop.f32.mrb[0].mxu0
        %v1692 = vadd.f32 0.0, %v1691
        %1693 = vmatprep.mubr.f32.mxu0 0.0
        %1694 = vmatmul.mubr.f32.gmra.mrb[0].mxu0 %v1612
        %v1695 = vpop.f32.mrb[0].mxu0
        %v1696 = vadd.f32 0.0, %v1695
        %v1697 = vpop.f32.mrb[0].mxu0
        %v1698 = vadd.f32 0.0, %v1697
        %1699 = vmatprep.mubr.f32.mxu0 0.0
        %1700 = vmatmul.mubr.f32.gmra.mrb[0].mxu0 %v1615
        %v1701 = vpop.f32.mrb[0].mxu0
        %v1702 = vadd.f32 0.0, %v1701
        %v1703 = vpop.f32.mrb[0].mxu0
        %v1704 = vadd.f32 0.0, %v1703
        %1705 = vdwg.mxu0
        %v1706 = vadd.f32 %v1584, %v1684
        %v1707 = vadd.f32 %v1585, %v1686
        %v1708 = vadd.f32 %v1586, %v1690
        %v1709 = vadd.f32 %v1587, %v1692
        %v1710 = vadd.f32 %v1588, %v1696
        %v1711 = vadd.f32 %v1589, %v1698
        %v1712 = vadd.f32 %v1590, %v1702
        %v1713 = vadd.f32 %v1591, %v1704
        %v1714 = vld [vmem:[%s629 + $0x3] sm:$0xff]
        %v1715 = vld [vmem:[%s629 + $0xb] sm:$0xff]
        %v1716 = vld [vmem:[%s629 + $0x13] sm:$0xff]
        %v1717 = vld [vmem:[%s629 + $0x1b] sm:$0xf]
        %s1718 = scalar_lea.vmem %s1, 576
        %v1719 = vld [vmem:[%s1718] sm:$0xff]
        %v1720 = vld [vmem:[%s1718 + $0x8] sm:$0xff]
        %v1721 = vld [vmem:[%s1718 + $0x10] sm:$0xff]
        %v1722 = vld [vmem:[%s1718 + $0x18] sm:$0xff]
        %v1723 = vld [vmem:[%s1718 + $0x20] sm:$0xff]
        %v1724 = vld [vmem:[%s1718 + $0x28] sm:$0xff]
        %v1725 = vld [vmem:[%s1718 + $0x30] sm:$0xff]
        %v1726 = vld [vmem:[%s1718 + $0x38] sm:$0xff]
        %v1728 = vsel %vm656, %v1714, 0
        %v1731 = vsel %vm656, %v1715, 0
        %v1734 = vsel %vm656, %v1716, 0
        %v1737 = vsel %vm656, %v1717, 0
        %1739 = vmatprep.subr.mxu0 %v1720
        %1740 = vmatpush1.msra.mxu0 %v1719
        %1741 = vmatprep.subr.mxu0 %v1722
        %1742 = vmatpush1.msra.mxu0 %v1721
        %1743 = vmatprep.subr.mxu0 %v1724
        %1744 = vmatpush1.msra.mxu0 %v1723
        %1745 = vmatprep.subr.mxu0 %v1726
        %1746 = vmatpush1.msra.mxu0 %v1725
        %1747 = vmatprep.subr.mxu0 0.0
        %1748 = vmatpush1.msra.mxu0 0.0
        %1749 = vmatprep.subr.mxu0 0.0
        %1750 = vmatpush1.msra.mxu0 0.0
        %1751 = vmatprep.subr.mxu0 0.0
        %1752 = vmatpush1.msra.mxu0 0.0
        %1753 = vmatprep.subr.mxu0 0.0
        %1754 = vmatpush1.msra.mxu0 0.0
        %1755 = vmatprep.subr.mxu0 0.0
        %1756 = vmatpush1.msra.mxu0 0.0
        %1757 = vmatprep.subr.mxu0 0.0
        %1758 = vmatpush1.msra.mxu0 0.0
        %1759 = vmatprep.subr.mxu0 0.0
        %1760 = vmatpush1.msra.mxu0 0.0
        %1761 = vmatprep.subr.mxu0 0.0
        %1762 = vmatpush1.msra.mxu0 0.0
        %1763 = vmatprep.subr.mxu0 0.0
        %1764 = vmatpush1.msra.mxu0 0.0
        %1765 = vmatprep.subr.mxu0 0.0
        %1766 = vmatpush1.msra.mxu0 0.0
        %1767 = vmatprep.subr.mxu0 0.0
        %1768 = vmatpush1.msra.mxu0 0.0
        %1769 = vmatprep.subr.mxu0 0.0
        %1770 = vmatpush1.msra.mxu0 0.0
        %1771 = vmatprep.subr.mxu0 0.0
        %1772 = vmatpush1.msra.mxu0 0.0
        %1773 = vmatprep.subr.mxu0 0.0
        %1774 = vmatpush1.msra.mxu0 0.0
        %1775 = vmatprep.subr.mxu0 0.0
        %1776 = vmatpush1.msra.mxu0 0.0
        %1777 = vmatprep.subr.mxu0 0.0
        %1778 = vmatpush1.msra.mxu0 0.0
        %1779 = vmatprep.subr.mxu0 0.0
        %1780 = vmatpush1.msra.mxu0 0.0
        %1781 = vmatprep.subr.mxu0 0.0
        %1782 = vmatpush1.msra.mxu0 0.0
        %1783 = vmatprep.subr.mxu0 0.0
        %1784 = vmatpush1.msra.mxu0 0.0
        %1785 = vmatprep.subr.mxu0 0.0
        %1786 = vmatpush1.msra.mxu0 0.0
        %1787 = vmatprep.subr.mxu0 0.0
        %1788 = vmatpush1.msra.mxu0 0.0
        %1789 = vmatprep.subr.mxu0 0.0
        %1790 = vmatpush1.msra.mxu0 0.0
        %1791 = vmatprep.subr.mxu0 0.0
        %1792 = vmatpush1.msra.mxu0 0.0
        %1793 = vmatprep.subr.mxu0 0.0
        %1794 = vmatpush1.msra.mxu0 0.0
        %1795 = vmatprep.subr.mxu0 0.0
        %1796 = vmatpush1.msra.mxu0 0.0
        %1797 = vmatprep.subr.mxu0 0.0
        %1798 = vmatpush1.msra.mxu0 0.0
        %1799 = vmatprep.subr.mxu0 0.0
        %1800 = vmatpush1.msra.mxu0 0.0
        %1801 = vmatprep.subr.mxu0 0.0
        %1802 = vmatpush1.msra.mxu0 0.0
        %1803 = vmatprep.mubr.f32.mxu0 0.0
        %1804 = vmatmul.mubr.f32.gmra.mrb[0].mxu0 %v1728
        %v1805 = vpop.f32.mrb[0].mxu0
        %v1806 = vadd.f32 0.0, %v1805
        %v1807 = vpop.f32.mrb[0].mxu0
        %v1808 = vadd.f32 0.0, %v1807
        %1809 = vmatprep.mubr.f32.mxu0 0.0
        %1810 = vmatmul.mubr.f32.gmra.mrb[0].mxu0 %v1731
        %v1811 = vpop.f32.mrb[0].mxu0
        %v1812 = vadd.f32 0.0, %v1811
        %v1813 = vpop.f32.mrb[0].mxu0
        %v1814 = vadd.f32 0.0, %v1813
        %1815 = vmatprep.mubr.f32.mxu0 0.0
        %1816 = vmatmul.mubr.f32.gmra.mrb[0].mxu0 %v1734
        %v1817 = vpop.f32.mrb[0].mxu0
        %v1818 = vadd.f32 0.0, %v1817
        %v1819 = vpop.f32.mrb[0].mxu0
        %v1820 = vadd.f32 0.0, %v1819
        %1821 = vmatprep.mubr.f32.mxu0 0.0
        %1822 = vmatmul.mubr.f32.gmra.mrb[0].mxu0 %v1737
        %v1823 = vpop.f32.mrb[0].mxu0
        %v1824 = vadd.f32 0.0, %v1823
        %v1825 = vpop.f32.mrb[0].mxu0
        %v1826 = vadd.f32 0.0, %v1825
        %1827 = vdwg.mxu0
        %v1828 = vadd.f32 %v1706, %v1806
        %v1829 = vadd.f32 %v1707, %v1808
        %v1830 = vadd.f32 %v1708, %v1812
        %v1831 = vadd.f32 %v1709, %v1814
        %v1832 = vadd.f32 %v1710, %v1818
        %v1833 = vadd.f32 %v1711, %v1820
        %v1834 = vadd.f32 %v1712, %v1824
        %v1835 = vadd.f32 %v1713, %v1826
        %v1836 = vld [vmem:[%s642 + $0x3] sm:$0xff]
        %v1837 = vld [vmem:[%s642 + $0xb] sm:$0xff]
        %v1838 = vld [vmem:[%s642 + $0x13] sm:$0xff]
        %v1839 = vld [vmem:[%s642 + $0x1b] sm:$0xf]
        %s1840 = scalar_lea.vmem %s1, 640
        %v1841 = vld [vmem:[%s1840] sm:$0xff]
        %v1842 = vld [vmem:[%s1840 + $0x8] sm:$0xff]
        %v1843 = vld [vmem:[%s1840 + $0x10] sm:$0xff]
        %v1844 = vld [vmem:[%s1840 + $0x18] sm:$0xff]
        %v1845 = vld [vmem:[%s1840 + $0x20] sm:$0xff]
        %v1846 = vld [vmem:[%s1840 + $0x28] sm:$0xff]
        %v1847 = vld [vmem:[%s1840 + $0x30] sm:$0xff]
        %v1848 = vld [vmem:[%s1840 + $0x38] sm:$0xff]
        %v1850 = vsel %vm656, %v1836, 0
        %v1853 = vsel %vm656, %v1837, 0
        %v1856 = vsel %vm656, %v1838, 0
        %v1859 = vsel %vm656, %v1839, 0
        %1861 = vmatprep.subr.mxu0 %v1842
        %1862 = vmatpush1.msra.mxu0 %v1841
        %1863 = vmatprep.subr.mxu0 %v1844
        %1864 = vmatpush1.msra.mxu0 %v1843
        %1865 = vmatprep.subr.mxu0 %v1846
        %1866 = vmatpush1.msra.mxu0 %v1845
        %1867 = vmatprep.subr.mxu0 %v1848
        %1868 = vmatpush1.msra.mxu0 %v1847
        %1869 = vmatprep.subr.mxu0 0.0
        %1870 = vmatpush1.msra.mxu0 0.0
        %1871 = vmatprep.subr.mxu0 0.0
        %1872 = vmatpush1.msra.mxu0 0.0
        %1873 = vmatprep.subr.mxu0 0.0
        %1874 = vmatpush1.msra.mxu0 0.0
        %1875 = vmatprep.subr.mxu0 0.0
        %1876 = vmatpush1.msra.mxu0 0.0
        %1877 = vmatprep.subr.mxu0 0.0
        %1878 = vmatpush1.msra.mxu0 0.0
        %1879 = vmatprep.subr.mxu0 0.0
        %1880 = vmatpush1.msra.mxu0 0.0
        %1881 = vmatprep.subr.mxu0 0.0
        %1882 = vmatpush1.msra.mxu0 0.0
        %1883 = vmatprep.subr.mxu0 0.0
        %1884 = vmatpush1.msra.mxu0 0.0
        %1885 = vmatprep.subr.mxu0 0.0
        %1886 = vmatpush1.msra.mxu0 0.0
        %1887 = vmatprep.subr.mxu0 0.0
        %1888 = vmatpush1.msra.mxu0 0.0
        %1889 = vmatprep.subr.mxu0 0.0
        %1890 = vmatpush1.msra.mxu0 0.0
        %1891 = vmatprep.subr.mxu0 0.0
        %1892 = vmatpush1.msra.mxu0 0.0
        %1893 = vmatprep.subr.mxu0 0.0
        %1894 = vmatpush1.msra.mxu0 0.0
        %1895 = vmatprep.subr.mxu0 0.0
        %1896 = vmatpush1.msra.mxu0 0.0
        %1897 = vmatprep.subr.mxu0 0.0
        %1898 = vmatpush1.msra.mxu0 0.0
        %1899 = vmatprep.subr.mxu0 0.0
        %1900 = vmatpush1.msra.mxu0 0.0
        %1901 = vmatprep.subr.mxu0 0.0
        %1902 = vmatpush1.msra.mxu0 0.0
        %1903 = vmatprep.subr.mxu0 0.0
        %1904 = vmatpush1.msra.mxu0 0.0
        %1905 = vmatprep.subr.mxu0 0.0
        %1906 = vmatpush1.msra.mxu0 0.0
        %1907 = vmatprep.subr.mxu0 0.0
        %1908 = vmatpush1.msra.mxu0 0.0
        %1909 = vmatprep.subr.mxu0 0.0
        %1910 = vmatpush1.msra.mxu0 0.0
        %1911 = vmatprep.subr.mxu0 0.0
        %1912 = vmatpush1.msra.mxu0 0.0
        %1913 = vmatprep.subr.mxu0 0.0
        %1914 = vmatpush1.msra.mxu0 0.0
        %1915 = vmatprep.subr.mxu0 0.0
        %1916 = vmatpush1.msra.mxu0 0.0
        %1917 = vmatprep.subr.mxu0 0.0
        %1918 = vmatpush1.msra.mxu0 0.0
        %1919 = vmatprep.subr.mxu0 0.0
        %1920 = vmatpush1.msra.mxu0 0.0
        %1921 = vmatprep.subr.mxu0 0.0
        %1922 = vmatpush1.msra.mxu0 0.0
        %1923 = vmatprep.subr.mxu0 0.0
        %1924 = vmatpush1.msra.mxu0 0.0
        %1925 = vmatprep.mubr.f32.mxu0 0.0
        %1926 = vmatmul.mubr.f32.gmra.mrb[0].mxu0 %v1850
        %v1927 = vpop.f32.mrb[0].mxu0
        %v1928 = vadd.f32 0.0, %v1927
        %v1929 = vpop.f32.mrb[0].mxu0
        %v1930 = vadd.f32 0.0, %v1929
        %1931 = vmatprep.mubr.f32.mxu0 0.0
        %1932 = vmatmul.mubr.f32.gmra.mrb[0].mxu0 %v1853
        %v1933 = vpop.f32.mrb[0].mxu0
        %v1934 = vadd.f32 0.0, %v1933
        %v1935 = vpop.f32.mrb[0].mxu0
        %v1936 = vadd.f32 0.0, %v1935
        %1937 = vmatprep.mubr.f32.mxu0 0.0
        %1938 = vmatmul.mubr.f32.gmra.mrb[0].mxu0 %v1856
        %v1939 = vpop.f32.mrb[0].mxu0
        %v1940 = vadd.f32 0.0, %v1939
        %v1941 = vpop.f32.mrb[0].mxu0
        %v1942 = vadd.f32 0.0, %v1941
        %1943 = vmatprep.mubr.f32.mxu0 0.0
        %1944 = vmatmul.mubr.f32.gmra.mrb[0].mxu0 %v1859
        %v1945 = vpop.f32.mrb[0].mxu0
        %v1946 = vadd.f32 0.0, %v1945
        %v1947 = vpop.f32.mrb[0].mxu0
        %v1948 = vadd.f32 0.0, %v1947
        %1949 = vdwg.mxu0
        %v1950 = vadd.f32 %v1828, %v1928
        %v1951 = vadd.f32 %v1829, %v1930
        %v1952 = vadd.f32 %v1830, %v1934
        %v1953 = vadd.f32 %v1831, %v1936
        %v1954 = vadd.f32 %v1832, %v1940
        %v1955 = vadd.f32 %v1833, %v1942
        %v1956 = vadd.f32 %v1834, %v1946
        %v1957 = vadd.f32 %v1835, %v1948
        %v1958 = vld [vmem:[%s859 + $0x3] sm:$0xff]
        %v1959 = vld [vmem:[%s859 + $0xb] sm:$0xff]
        %v1960 = vld [vmem:[%s859 + $0x13] sm:$0xff]
        %v1961 = vld [vmem:[%s859 + $0x1b] sm:$0xf]
        %s1962 = scalar_lea.vmem %s1, 704
        %v1963 = vld [vmem:[%s1962] sm:$0xff]
        %v1964 = vld [vmem:[%s1962 + $0x8] sm:$0xff]
        %v1965 = vld [vmem:[%s1962 + $0x10] sm:$0xff]
        %v1966 = vld [vmem:[%s1962 + $0x18] sm:$0xff]
        %v1967 = vld [vmem:[%s1962 + $0x20] sm:$0xff]
        %v1968 = vld [vmem:[%s1962 + $0x28] sm:$0xff]
        %v1969 = vld [vmem:[%s1962 + $0x30] sm:$0xff]
        %v1970 = vld [vmem:[%s1962 + $0x38] sm:$0xff]
        %v1972 = vsel %vm656, %v1958, 0
        %v1975 = vsel %vm656, %v1959, 0
        %v1978 = vsel %vm656, %v1960, 0
        %v1981 = vsel %vm656, %v1961, 0
        %1983 = vmatprep.subr.mxu0 %v1964
        %1984 = vmatpush1.msra.mxu0 %v1963
        %1985 = vmatprep.subr.mxu0 %v1966
        %1986 = vmatpush1.msra.mxu0 %v1965
        %1987 = vmatprep.subr.mxu0 %v1968
        %1988 = vmatpush1.msra.mxu0 %v1967
        %1989 = vmatprep.subr.mxu0 %v1970
        %1990 = vmatpush1.msra.mxu0 %v1969
        %1991 = vmatprep.subr.mxu0 0.0
        %1992 = vmatpush1.msra.mxu0 0.0
        %1993 = vmatprep.subr.mxu0 0.0
        %1994 = vmatpush1.msra.mxu0 0.0
        %1995 = vmatprep.subr.mxu0 0.0
        %1996 = vmatpush1.msra.mxu0 0.0
        %1997 = vmatprep.subr.mxu0 0.0
        %1998 = vmatpush1.msra.mxu0 0.0
        %1999 = vmatprep.subr.mxu0 0.0
        %2000 = vmatpush1.msra.mxu0 0.0
        %2001 = vmatprep.subr.mxu0 0.0
        %2002 = vmatpush1.msra.mxu0 0.0
        %2003 = vmatprep.subr.mxu0 0.0
        %2004 = vmatpush1.msra.mxu0 0.0
        %2005 = vmatprep.subr.mxu0 0.0
        %2006 = vmatpush1.msra.mxu0 0.0
        %2007 = vmatprep.subr.mxu0 0.0
        %2008 = vmatpush1.msra.mxu0 0.0
        %2009 = vmatprep.subr.mxu0 0.0
        %2010 = vmatpush1.msra.mxu0 0.0
        %2011 = vmatprep.subr.mxu0 0.0
        %2012 = vmatpush1.msra.mxu0 0.0
        %2013 = vmatprep.subr.mxu0 0.0
        %2014 = vmatpush1.msra.mxu0 0.0
        %2015 = vmatprep.subr.mxu0 0.0
        %2016 = vmatpush1.msra.mxu0 0.0
        %2017 = vmatprep.subr.mxu0 0.0
        %2018 = vmatpush1.msra.mxu0 0.0
        %2019 = vmatprep.subr.mxu0 0.0
        %2020 = vmatpush1.msra.mxu0 0.0
        %2021 = vmatprep.subr.mxu0 0.0
        %2022 = vmatpush1.msra.mxu0 0.0
        %2023 = vmatprep.subr.mxu0 0.0
        %2024 = vmatpush1.msra.mxu0 0.0
        %2025 = vmatprep.subr.mxu0 0.0
        %2026 = vmatpush1.msra.mxu0 0.0
        %2027 = vmatprep.subr.mxu0 0.0
        %2028 = vmatpush1.msra.mxu0 0.0
        %2029 = vmatprep.subr.mxu0 0.0
        %2030 = vmatpush1.msra.mxu0 0.0
        %2031 = vmatprep.subr.mxu0 0.0
        %2032 = vmatpush1.msra.mxu0 0.0
        %2033 = vmatprep.subr.mxu0 0.0
        %2034 = vmatpush1.msra.mxu0 0.0
        %2035 = vmatprep.subr.mxu0 0.0
        %2036 = vmatpush1.msra.mxu0 0.0
        %2037 = vmatprep.subr.mxu0 0.0
        %2038 = vmatpush1.msra.mxu0 0.0
        %2039 = vmatprep.subr.mxu0 0.0
        %2040 = vmatpush1.msra.mxu0 0.0
        %2041 = vmatprep.subr.mxu0 0.0
        %2042 = vmatpush1.msra.mxu0 0.0
        %2043 = vmatprep.subr.mxu0 0.0
        %2044 = vmatpush1.msra.mxu0 0.0
        %2045 = vmatprep.subr.mxu0 0.0
        %2046 = vmatpush1.msra.mxu0 0.0
        %2047 = vmatprep.mubr.f32.mxu0 0.0
        %2048 = vmatmul.mubr.f32.gmra.mrb[0].mxu0 %v1972
        %v2049 = vpop.f32.mrb[0].mxu0
        %v2050 = vadd.f32 0.0, %v2049
        %v2051 = vpop.f32.mrb[0].mxu0
        %v2052 = vadd.f32 0.0, %v2051
        %2053 = vmatprep.mubr.f32.mxu0 0.0
        %2054 = vmatmul.mubr.f32.gmra.mrb[0].mxu0 %v1975
        %v2055 = vpop.f32.mrb[0].mxu0
        %v2056 = vadd.f32 0.0, %v2055
        %v2057 = vpop.f32.mrb[0].mxu0
        %v2058 = vadd.f32 0.0, %v2057
        %2059 = vmatprep.mubr.f32.mxu0 0.0
        %2060 = vmatmul.mubr.f32.gmra.mrb[0].mxu0 %v1978
        %v2061 = vpop.f32.mrb[0].mxu0
        %v2062 = vadd.f32 0.0, %v2061
        %v2063 = vpop.f32.mrb[0].mxu0
        %v2064 = vadd.f32 0.0, %v2063
        %2065 = vmatprep.mubr.f32.mxu0 0.0
        %2066 = vmatmul.mubr.f32.gmra.mrb[0].mxu0 %v1981
        %v2067 = vpop.f32.mrb[0].mxu0
        %v2068 = vadd.f32 0.0, %v2067
        %v2069 = vpop.f32.mrb[0].mxu0
        %v2070 = vadd.f32 0.0, %v2069
        %2071 = vdwg.mxu0
        %v2072 = vadd.f32 %v1950, %v2050
        %v2073 = vadd.f32 %v1951, %v2052
        %v2074 = vadd.f32 %v1952, %v2056
        %v2075 = vadd.f32 %v1953, %v2058
        %v2076 = vadd.f32 %v1954, %v2062
        %v2077 = vadd.f32 %v1955, %v2064
        %v2078 = vadd.f32 %v1956, %v2068
        %v2079 = vadd.f32 %v1957, %v2070
        %v2080 = vld [vmem:[%s629 + $0x4] sm:$0xff]
        %v2081 = vld [vmem:[%s629 + $0xc] sm:$0xff]
        %v2082 = vld [vmem:[%s629 + $0x14] sm:$0xff]
        %v2083 = vld [vmem:[%s629 + $0x1c] sm:$0xf]
        %s2084 = scalar_lea.vmem %s1, 768
        %v2085 = vld [vmem:[%s2084] sm:$0xff]
        %v2086 = vld [vmem:[%s2084 + $0x8] sm:$0xff]
        %v2087 = vld [vmem:[%s2084 + $0x10] sm:$0xff]
        %v2088 = vld [vmem:[%s2084 + $0x18] sm:$0xff]
        %v2089 = vld [vmem:[%s2084 + $0x20] sm:$0xff]
        %v2090 = vld [vmem:[%s2084 + $0x28] sm:$0xff]
        %v2091 = vld [vmem:[%s2084 + $0x30] sm:$0xff]
        %v2092 = vld [vmem:[%s2084 + $0x38] sm:$0xff]
        %v2094 = vsel %vm656, %v2080, 0
        %v2097 = vsel %vm656, %v2081, 0
        %v2100 = vsel %vm656, %v2082, 0
        %v2103 = vsel %vm656, %v2083, 0
        %2105 = vmatprep.subr.mxu0 %v2086
        %2106 = vmatpush1.msra.mxu0 %v2085
        %2107 = vmatprep.subr.mxu0 %v2088
        %2108 = vmatpush1.msra.mxu0 %v2087
        %2109 = vmatprep.subr.mxu0 %v2090
        %2110 = vmatpush1.msra.mxu0 %v2089
        %2111 = vmatprep.subr.mxu0 %v2092
        %2112 = vmatpush1.msra.mxu0 %v2091
        %2113 = vmatprep.subr.mxu0 0.0
        %2114 = vmatpush1.msra.mxu0 0.0
        %2115 = vmatprep.subr.mxu0 0.0
        %2116 = vmatpush1.msra.mxu0 0.0
        %2117 = vmatprep.subr.mxu0 0.0
        %2118 = vmatpush1.msra.mxu0 0.0
        %2119 = vmatprep.subr.mxu0 0.0
        %2120 = vmatpush1.msra.mxu0 0.0
        %2121 = vmatprep.subr.mxu0 0.0
        %2122 = vmatpush1.msra.mxu0 0.0
        %2123 = vmatprep.subr.mxu0 0.0
        %2124 = vmatpush1.msra.mxu0 0.0
        %2125 = vmatprep.subr.mxu0 0.0
        %2126 = vmatpush1.msra.mxu0 0.0
        %2127 = vmatprep.subr.mxu0 0.0
        %2128 = vmatpush1.msra.mxu0 0.0
        %2129 = vmatprep.subr.mxu0 0.0
        %2130 = vmatpush1.msra.mxu0 0.0
        %2131 = vmatprep.subr.mxu0 0.0
        %2132 = vmatpush1.msra.mxu0 0.0
        %2133 = vmatprep.subr.mxu0 0.0
        %2134 = vmatpush1.msra.mxu0 0.0
        %2135 = vmatprep.subr.mxu0 0.0
        %2136 = vmatpush1.msra.mxu0 0.0
        %2137 = vmatprep.subr.mxu0 0.0
        %2138 = vmatpush1.msra.mxu0 0.0
        %2139 = vmatprep.subr.mxu0 0.0
        %2140 = vmatpush1.msra.mxu0 0.0
        %2141 = vmatprep.subr.mxu0 0.0
        %2142 = vmatpush1.msra.mxu0 0.0
        %2143 = vmatprep.subr.mxu0 0.0
        %2144 = vmatpush1.msra.mxu0 0.0
        %2145 = vmatprep.subr.mxu0 0.0
        %2146 = vmatpush1.msra.mxu0 0.0
        %2147 = vmatprep.subr.mxu0 0.0
        %2148 = vmatpush1.msra.mxu0 0.0
        %2149 = vmatprep.subr.mxu0 0.0
        %2150 = vmatpush1.msra.mxu0 0.0
        %2151 = vmatprep.subr.mxu0 0.0
        %2152 = vmatpush1.msra.mxu0 0.0
        %2153 = vmatprep.subr.mxu0 0.0
        %2154 = vmatpush1.msra.mxu0 0.0
        %2155 = vmatprep.subr.mxu0 0.0
        %2156 = vmatpush1.msra.mxu0 0.0
        %2157 = vmatprep.subr.mxu0 0.0
        %2158 = vmatpush1.msra.mxu0 0.0
        %2159 = vmatprep.subr.mxu0 0.0
        %2160 = vmatpush1.msra.mxu0 0.0
        %2161 = vmatprep.subr.mxu0 0.0
        %2162 = vmatpush1.msra.mxu0 0.0
        %2163 = vmatprep.subr.mxu0 0.0
        %2164 = vmatpush1.msra.mxu0 0.0
        %2165 = vmatprep.subr.mxu0 0.0
        %2166 = vmatpush1.msra.mxu0 0.0
        %2167 = vmatprep.subr.mxu0 0.0
        %2168 = vmatpush1.msra.mxu0 0.0
        %2169 = vmatprep.mubr.f32.mxu0 0.0
        %2170 = vmatmul.mubr.f32.gmra.mrb[0].mxu0 %v2094
        %v2171 = vpop.f32.mrb[0].mxu0
        %v2172 = vadd.f32 0.0, %v2171
        %v2173 = vpop.f32.mrb[0].mxu0
        %v2174 = vadd.f32 0.0, %v2173
        %2175 = vmatprep.mubr.f32.mxu0 0.0
        %2176 = vmatmul.mubr.f32.gmra.mrb[0].mxu0 %v2097
        %v2177 = vpop.f32.mrb[0].mxu0
        %v2178 = vadd.f32 0.0, %v2177
        %v2179 = vpop.f32.mrb[0].mxu0
        %v2180 = vadd.f32 0.0, %v2179
        %2181 = vmatprep.mubr.f32.mxu0 0.0
        %2182 = vmatmul.mubr.f32.gmra.mrb[0].mxu0 %v2100
        %v2183 = vpop.f32.mrb[0].mxu0
        %v2184 = vadd.f32 0.0, %v2183
        %v2185 = vpop.f32.mrb[0].mxu0
        %v2186 = vadd.f32 0.0, %v2185
        %2187 = vmatprep.mubr.f32.mxu0 0.0
        %2188 = vmatmul.mubr.f32.gmra.mrb[0].mxu0 %v2103
        %v2189 = vpop.f32.mrb[0].mxu0
        %v2190 = vadd.f32 0.0, %v2189
        %v2191 = vpop.f32.mrb[0].mxu0
        %v2192 = vadd.f32 0.0, %v2191
        %2193 = vdwg.mxu0
        %v2194 = vadd.f32 %v2072, %v2172
        %v2195 = vadd.f32 %v2073, %v2174
        %v2196 = vadd.f32 %v2074, %v2178
        %v2197 = vadd.f32 %v2075, %v2180
        %v2198 = vadd.f32 %v2076, %v2184
        %v2199 = vadd.f32 %v2077, %v2186
        %v2200 = vadd.f32 %v2078, %v2190
        %v2201 = vadd.f32 %v2079, %v2192
        %v2202 = vld [vmem:[%s642 + $0x4] sm:$0xff]
        %v2203 = vld [vmem:[%s642 + $0xc] sm:$0xff]
        %v2204 = vld [vmem:[%s642 + $0x14] sm:$0xff]
        %v2205 = vld [vmem:[%s642 + $0x1c] sm:$0xf]
        %s2206 = scalar_lea.vmem %s1, 832
        %v2207 = vld [vmem:[%s2206] sm:$0xff]
        %v2208 = vld [vmem:[%s2206 + $0x8] sm:$0xff]
        %v2209 = vld [vmem:[%s2206 + $0x10] sm:$0xff]
        %v2210 = vld [vmem:[%s2206 + $0x18] sm:$0xff]
        %v2211 = vld [vmem:[%s2206 + $0x20] sm:$0xff]
        %v2212 = vld [vmem:[%s2206 + $0x28] sm:$0xff]
        %v2213 = vld [vmem:[%s2206 + $0x30] sm:$0xff]
        %v2214 = vld [vmem:[%s2206 + $0x38] sm:$0xff]
        %v2216 = vsel %vm656, %v2202, 0
        %v2219 = vsel %vm656, %v2203, 0
        %v2222 = vsel %vm656, %v2204, 0
        %v2225 = vsel %vm656, %v2205, 0
        %2227 = vmatprep.subr.mxu0 %v2208
        %2228 = vmatpush1.msra.mxu0 %v2207
        %2229 = vmatprep.subr.mxu0 %v2210
        %2230 = vmatpush1.msra.mxu0 %v2209
        %2231 = vmatprep.subr.mxu0 %v2212
        %2232 = vmatpush1.msra.mxu0 %v2211
        %2233 = vmatprep.subr.mxu0 %v2214
        %2234 = vmatpush1.msra.mxu0 %v2213
        %2235 = vmatprep.subr.mxu0 0.0
        %2236 = vmatpush1.msra.mxu0 0.0
        %2237 = vmatprep.subr.mxu0 0.0
        %2238 = vmatpush1.msra.mxu0 0.0
        %2239 = vmatprep.subr.mxu0 0.0
        %2240 = vmatpush1.msra.mxu0 0.0
        %2241 = vmatprep.subr.mxu0 0.0
        %2242 = vmatpush1.msra.mxu0 0.0
        %2243 = vmatprep.subr.mxu0 0.0
        %2244 = vmatpush1.msra.mxu0 0.0
        %2245 = vmatprep.subr.mxu0 0.0
        %2246 = vmatpush1.msra.mxu0 0.0
        %2247 = vmatprep.subr.mxu0 0.0
        %2248 = vmatpush1.msra.mxu0 0.0
        %2249 = vmatprep.subr.mxu0 0.0
        %2250 = vmatpush1.msra.mxu0 0.0
        %2251 = vmatprep.subr.mxu0 0.0
        %2252 = vmatpush1.msra.mxu0 0.0
        %2253 = vmatprep.subr.mxu0 0.0
        %2254 = vmatpush1.msra.mxu0 0.0
        %2255 = vmatprep.subr.mxu0 0.0
        %2256 = vmatpush1.msra.mxu0 0.0
        %2257 = vmatprep.subr.mxu0 0.0
        %2258 = vmatpush1.msra.mxu0 0.0
        %2259 = vmatprep.subr.mxu0 0.0
        %2260 = vmatpush1.msra.mxu0 0.0
        %2261 = vmatprep.subr.mxu0 0.0
        %2262 = vmatpush1.msra.mxu0 0.0
        %2263 = vmatprep.subr.mxu0 0.0
        %2264 = vmatpush1.msra.mxu0 0.0
        %2265 = vmatprep.subr.mxu0 0.0
        %2266 = vmatpush1.msra.mxu0 0.0
        %2267 = vmatprep.subr.mxu0 0.0
        %2268 = vmatpush1.msra.mxu0 0.0
        %2269 = vmatprep.subr.mxu0 0.0
        %2270 = vmatpush1.msra.mxu0 0.0
        %2271 = vmatprep.subr.mxu0 0.0
        %2272 = vmatpush1.msra.mxu0 0.0
        %2273 = vmatprep.subr.mxu0 0.0
        %2274 = vmatpush1.msra.mxu0 0.0
        %2275 = vmatprep.subr.mxu0 0.0
        %2276 = vmatpush1.msra.mxu0 0.0
        %2277 = vmatprep.subr.mxu0 0.0
        %2278 = vmatpush1.msra.mxu0 0.0
        %2279 = vmatprep.subr.mxu0 0.0
        %2280 = vmatpush1.msra.mxu0 0.0
        %2281 = vmatprep.subr.mxu0 0.0
        %2282 = vmatpush1.msra.mxu0 0.0
        %2283 = vmatprep.subr.mxu0 0.0
        %2284 = vmatpush1.msra.mxu0 0.0
        %2285 = vmatprep.subr.mxu0 0.0
        %2286 = vmatpush1.msra.mxu0 0.0
        %2287 = vmatprep.subr.mxu0 0.0
        %2288 = vmatpush1.msra.mxu0 0.0
        %2289 = vmatprep.subr.mxu0 0.0
        %2290 = vmatpush1.msra.mxu0 0.0
        %2291 = vmatprep.mubr.f32.mxu0 0.0
        %2292 = vmatmul.mubr.f32.gmra.mrb[0].mxu0 %v2216
        %v2293 = vpop.f32.mrb[0].mxu0
        %v2294 = vadd.f32 0.0, %v2293
        %v2295 = vpop.f32.mrb[0].mxu0
        %v2296 = vadd.f32 0.0, %v2295
        %2297 = vmatprep.mubr.f32.mxu0 0.0
        %2298 = vmatmul.mubr.f32.gmra.mrb[0].mxu0 %v2219
        %v2299 = vpop.f32.mrb[0].mxu0
        %v2300 = vadd.f32 0.0, %v2299
        %v2301 = vpop.f32.mrb[0].mxu0
        %v2302 = vadd.f32 0.0, %v2301
        %2303 = vmatprep.mubr.f32.mxu0 0.0
        %2304 = vmatmul.mubr.f32.gmra.mrb[0].mxu0 %v2222
        %v2305 = vpop.f32.mrb[0].mxu0
        %v2306 = vadd.f32 0.0, %v2305
        %v2307 = vpop.f32.mrb[0].mxu0
        %v2308 = vadd.f32 0.0, %v2307
        %2309 = vmatprep.mubr.f32.mxu0 0.0
        %2310 = vmatmul.mubr.f32.gmra.mrb[0].mxu0 %v2225
        %v2311 = vpop.f32.mrb[0].mxu0
        %v2312 = vadd.f32 0.0, %v2311
        %v2313 = vpop.f32.mrb[0].mxu0
        %v2314 = vadd.f32 0.0, %v2313
        %2315 = vdwg.mxu0
        %v2316 = vadd.f32 %v2194, %v2294
        %v2317 = vadd.f32 %v2195, %v2296
        %v2318 = vadd.f32 %v2196, %v2300
        %v2319 = vadd.f32 %v2197, %v2302
        %v2320 = vadd.f32 %v2198, %v2306
        %v2321 = vadd.f32 %v2199, %v2308
        %v2322 = vadd.f32 %v2200, %v2312
        %v2323 = vadd.f32 %v2201, %v2314
        %v2324 = vld [vmem:[%s859 + $0x4] sm:$0xff]
        %v2325 = vld [vmem:[%s859 + $0xc] sm:$0xff]
        %v2326 = vld [vmem:[%s859 + $0x14] sm:$0xff]
        %v2327 = vld [vmem:[%s859 + $0x1c] sm:$0xf]
        %s2328 = scalar_lea.vmem %s1, 896
        %v2329 = vld [vmem:[%s2328] sm:$0xff]
        %v2330 = vld [vmem:[%s2328 + $0x8] sm:$0xff]
        %v2331 = vld [vmem:[%s2328 + $0x10] sm:$0xff]
        %v2332 = vld [vmem:[%s2328 + $0x18] sm:$0xff]
        %v2333 = vld [vmem:[%s2328 + $0x20] sm:$0xff]
        %v2334 = vld [vmem:[%s2328 + $0x28] sm:$0xff]
        %v2335 = vld [vmem:[%s2328 + $0x30] sm:$0xff]
        %v2336 = vld [vmem:[%s2328 + $0x38] sm:$0xff]
        %v2338 = vsel %vm656, %v2324, 0
        %v2341 = vsel %vm656, %v2325, 0
        %v2344 = vsel %vm656, %v2326, 0
        %v2347 = vsel %vm656, %v2327, 0
        %2349 = vmatprep.subr.mxu0 %v2330
        %2350 = vmatpush1.msra.mxu0 %v2329
        %2351 = vmatprep.subr.mxu0 %v2332
        %2352 = vmatpush1.msra.mxu0 %v2331
        %2353 = vmatprep.subr.mxu0 %v2334
        %2354 = vmatpush1.msra.mxu0 %v2333
        %2355 = vmatprep.subr.mxu0 %v2336
        %2356 = vmatpush1.msra.mxu0 %v2335
        %2357 = vmatprep.subr.mxu0 0.0
        %2358 = vmatpush1.msra.mxu0 0.0
        %2359 = vmatprep.subr.mxu0 0.0
        %2360 = vmatpush1.msra.mxu0 0.0
        %2361 = vmatprep.subr.mxu0 0.0
        %2362 = vmatpush1.msra.mxu0 0.0
        %2363 = vmatprep.subr.mxu0 0.0
        %2364 = vmatpush1.msra.mxu0 0.0
        %2365 = vmatprep.subr.mxu0 0.0
        %2366 = vmatpush1.msra.mxu0 0.0
        %2367 = vmatprep.subr.mxu0 0.0
        %2368 = vmatpush1.msra.mxu0 0.0
        %2369 = vmatprep.subr.mxu0 0.0
        %2370 = vmatpush1.msra.mxu0 0.0
        %2371 = vmatprep.subr.mxu0 0.0
        %2372 = vmatpush1.msra.mxu0 0.0
        %2373 = vmatprep.subr.mxu0 0.0
        %2374 = vmatpush1.msra.mxu0 0.0
        %2375 = vmatprep.subr.mxu0 0.0
        %2376 = vmatpush1.msra.mxu0 0.0
        %2377 = vmatprep.subr.mxu0 0.0
        %2378 = vmatpush1.msra.mxu0 0.0
        %2379 = vmatprep.subr.mxu0 0.0
        %2380 = vmatpush1.msra.mxu0 0.0
        %2381 = vmatprep.subr.mxu0 0.0
        %2382 = vmatpush1.msra.mxu0 0.0
        %2383 = vmatprep.subr.mxu0 0.0
        %2384 = vmatpush1.msra.mxu0 0.0
        %2385 = vmatprep.subr.mxu0 0.0
        %2386 = vmatpush1.msra.mxu0 0.0
        %2387 = vmatprep.subr.mxu0 0.0
        %2388 = vmatpush1.msra.mxu0 0.0
        %2389 = vmatprep.subr.mxu0 0.0
        %2390 = vmatpush1.msra.mxu0 0.0
        %2391 = vmatprep.subr.mxu0 0.0
        %2392 = vmatpush1.msra.mxu0 0.0
        %2393 = vmatprep.subr.mxu0 0.0
        %2394 = vmatpush1.msra.mxu0 0.0
        %2395 = vmatprep.subr.mxu0 0.0
        %2396 = vmatpush1.msra.mxu0 0.0
        %2397 = vmatprep.subr.mxu0 0.0
        %2398 = vmatpush1.msra.mxu0 0.0
        %2399 = vmatprep.subr.mxu0 0.0
        %2400 = vmatpush1.msra.mxu0 0.0
        %2401 = vmatprep.subr.mxu0 0.0
        %2402 = vmatpush1.msra.mxu0 0.0
        %2403 = vmatprep.subr.mxu0 0.0
        %2404 = vmatpush1.msra.mxu0 0.0
        %2405 = vmatprep.subr.mxu0 0.0
        %2406 = vmatpush1.msra.mxu0 0.0
        %2407 = vmatprep.subr.mxu0 0.0
        %2408 = vmatpush1.msra.mxu0 0.0
        %2409 = vmatprep.subr.mxu0 0.0
        %2410 = vmatpush1.msra.mxu0 0.0
        %2411 = vmatprep.subr.mxu0 0.0
        %2412 = vmatpush1.msra.mxu0 0.0
        %2413 = vmatprep.mubr.f32.mxu0 0.0
        %2414 = vmatmul.mubr.f32.gmra.mrb[0].mxu0 %v2338
        %v2415 = vpop.f32.mrb[0].mxu0
        %v2416 = vadd.f32 0.0, %v2415
        %v2417 = vpop.f32.mrb[0].mxu0
        %v2418 = vadd.f32 0.0, %v2417
        %2419 = vmatprep.mubr.f32.mxu0 0.0
        %2420 = vmatmul.mubr.f32.gmra.mrb[0].mxu0 %v2341
        %v2421 = vpop.f32.mrb[0].mxu0
        %v2422 = vadd.f32 0.0, %v2421
        %v2423 = vpop.f32.mrb[0].mxu0
        %v2424 = vadd.f32 0.0, %v2423
        %2425 = vmatprep.mubr.f32.mxu0 0.0
        %2426 = vmatmul.mubr.f32.gmra.mrb[0].mxu0 %v2344
        %v2427 = vpop.f32.mrb[0].mxu0
        %v2428 = vadd.f32 0.0, %v2427
        %v2429 = vpop.f32.mrb[0].mxu0
        %v2430 = vadd.f32 0.0, %v2429
        %2431 = vmatprep.mubr.f32.mxu0 0.0
        %2432 = vmatmul.mubr.f32.gmra.mrb[0].mxu0 %v2347
        %v2433 = vpop.f32.mrb[0].mxu0
        %v2434 = vadd.f32 0.0, %v2433
        %v2435 = vpop.f32.mrb[0].mxu0
        %v2436 = vadd.f32 0.0, %v2435
        %2437 = vdwg.mxu0
        %v2438 = vadd.f32 %v2316, %v2416
        %v2439 = vadd.f32 %v2317, %v2418
        %v2440 = vadd.f32 %v2318, %v2422
        %v2441 = vadd.f32 %v2319, %v2424
        %v2442 = vadd.f32 %v2320, %v2428
        %v2443 = vadd.f32 %v2321, %v2430
        %v2444 = vadd.f32 %v2322, %v2434
        %v2445 = vadd.f32 %v2323, %v2436
        %v2446 = vld [vmem:[%s2] sm:$0x3]
        %v2448 = vlaneseq
        %v2449 = vshrl.u32 %v2448, 7
        %v2450 = vsub.s32 0, %v2449
        %v2451 = vrot.slane %v2446, %v2450
        %v2452 = vlaneseq
        %v2453 = vshrl.u32 %v2452, 7
        %v2454 = vsub.s32 1, %v2453
        %v2455 = vrot.slane %v2446, %v2454
        %v2458 = vadd.f32 %v2438, %v2451
        %v2459 = vadd.f32 %v2439, %v2455
        %v2460 = vadd.f32 %v2440, %v2451
        %v2461 = vadd.f32 %v2441, %v2455
        %v2462 = vadd.f32 %v2442, %v2451
        %v2463 = vadd.f32 %v2443, %v2455
        %v2464 = vadd.f32 %v2444, %v2451
        %v2465 = vadd.f32 %v2445, %v2455
        %v2466 = vmax.f32 %v2458, 0.0
        %v2467 = vmax.f32 %v2459, 0.0
        %v2468 = vmax.f32 %v2460, 0.0
        %v2469 = vmax.f32 %v2461, 0.0
        %v2470 = vmax.f32 %v2462, 0.0
        %v2471 = vmax.f32 %v2463, 0.0
        %v2472 = vmax.f32 %v2464, 0.0
        %v2473 = vmax.f32 %v2465, 0.0
        %v2474 = vld [vmem:[%s3] sm:$0xff]
        %v2475 = vld [vmem:[%s3 + $0x8] sm:$0x3f]
        %vm2476 = vcmask 228352
        %v2478 = vsel %vm2476, %v2474, 0
        %v2481 = vsel %vm2476, %v2475, 0
        %vm2483 = vcmask 1043456
        %v2485 = vsel %vm2483, %v2472, 0
        %v2488 = vsel %vm2483, %v2473, 0
        %2490 = vmatprep.subr.mxu0 %v2467
        %2491 = vmatpush1.msra.mxu0 %v2466
        %2492 = vmatprep.subr.mxu0 %v2469
        %2493 = vmatpush1.msra.mxu0 %v2468
        %2494 = vmatprep.subr.mxu0 %v2471
        %2495 = vmatpush1.msra.mxu0 %v2470
        %2496 = vmatprep.subr.mxu0 %v2488
        %2497 = vmatpush1.msra.mxu0 %v2485
        %2498 = vmatprep.subr.mxu0 0.0
        %2499 = vmatpush1.msra.mxu0 0.0
        %2500 = vmatprep.subr.mxu0 0.0
        %2501 = vmatpush1.msra.mxu0 0.0
        %2502 = vmatprep.subr.mxu0 0.0
        %2503 = vmatpush1.msra.mxu0 0.0
        %2504 = vmatprep.subr.mxu0 0.0
        %2505 = vmatpush1.msra.mxu0 0.0
        %2506 = vmatprep.subr.mxu0 0.0
        %2507 = vmatpush1.msra.mxu0 0.0
        %2508 = vmatprep.subr.mxu0 0.0
        %2509 = vmatpush1.msra.mxu0 0.0
        %2510 = vmatprep.subr.mxu0 0.0
        %2511 = vmatpush1.msra.mxu0 0.0
        %2512 = vmatprep.subr.mxu0 0.0
        %2513 = vmatpush1.msra.mxu0 0.0
        %2514 = vmatprep.subr.mxu0 0.0
        %2515 = vmatpush1.msra.mxu0 0.0
        %2516 = vmatprep.subr.mxu0 0.0
        %2517 = vmatpush1.msra.mxu0 0.0
        %2518 = vmatprep.subr.mxu0 0.0
        %2519 = vmatpush1.msra.mxu0 0.0
        %2520 = vmatprep.subr.mxu0 0.0
        %2521 = vmatpush1.msra.mxu0 0.0
        %2522 = vmatprep.subr.mxu0 0.0
        %2523 = vmatpush1.msra.mxu0 0.0
        %2524 = vmatprep.subr.mxu0 0.0
        %2525 = vmatpush1.msra.mxu0 0.0
        %2526 = vmatprep.subr.mxu0 0.0
        %2527 = vmatpush1.msra.mxu0 0.0
        %2528 = vmatprep.subr.mxu0 0.0
        %2529 = vmatpush1.msra.mxu0 0.0
        %2530 = vmatprep.subr.mxu0 0.0
        %2531 = vmatpush1.msra.mxu0 0.0
        %2532 = vmatprep.subr.mxu0 0.0
        %2533 = vmatpush1.msra.mxu0 0.0
        %2534 = vmatprep.subr.mxu0 0.0
        %2535 = vmatpush1.msra.mxu0 0.0
        %2536 = vmatprep.subr.mxu0 0.0
        %2537 = vmatpush1.msra.mxu0 0.0
        %2538 = vmatprep.subr.mxu0 0.0
        %2539 = vmatpush1.msra.mxu0 0.0
        %2540 = vmatprep.subr.mxu0 0.0
        %2541 = vmatpush1.msra.mxu0 0.0
        %2542 = vmatprep.subr.mxu0 0.0
        %2543 = vmatpush1.msra.mxu0 0.0
        %2544 = vmatprep.subr.mxu0 0.0
        %2545 = vmatpush1.msra.mxu0 0.0
        %2546 = vmatprep.subr.mxu0 0.0
        %2547 = vmatpush1.msra.mxu0 0.0
        %2548 = vmatprep.subr.mxu0 0.0
        %2549 = vmatpush1.msra.mxu0 0.0
        %2550 = vmatprep.subr.mxu0 0.0
        %2551 = vmatpush1.msra.mxu0 0.0
        %2552 = vmatprep.subr.mxu0 0.0
        %2553 = vmatpush1.msra.mxu0 0.0
        %2554 = vmatprep.mubr.f32.mxu0 0.0
        %2555 = vmatmul.mubr.f32.gmra.mrb[0].mxu0 %v2478
        %v2556 = vpop.f32.mrb[0].mxu0
        %v2557 = vadd.f32 0.0, %v2556
        %v2558 = vpop.f32.mrb[0].mxu0
        %v2559 = vadd.f32 0.0, %v2558
        %2560 = vmatprep.mubr.f32.mxu0 0.0
        %2561 = vmatmul.mubr.f32.gmra.mrb[0].mxu0 %v2481
        %v2562 = vpop.f32.mrb[0].mxu0
        %v2563 = vadd.f32 0.0, %v2562
        %v2564 = vpop.f32.mrb[0].mxu0
        %v2565 = vadd.f32 0.0, %v2564
        %2566 = vdwg.mxu0
        %v2567 = vld [vmem:[%s4] sm:$0xff]
        %v2568 = vld [vmem:[%s4 + $0x8] sm:$0x3f]
        %v2570 = vsel %vm2476, %v2567, 0
        %v2573 = vsel %vm2476, %v2568, 0
        %2575 = vmatprep.subr.mxu0 %v2467
        %2576 = vmatpush1.msra.mxu0 %v2466
        %2577 = vmatprep.subr.mxu0 %v2469
        %2578 = vmatpush1.msra.mxu0 %v2468
        %2579 = vmatprep.subr.mxu0 %v2471
        %2580 = vmatpush1.msra.mxu0 %v2470
        %2581 = vmatprep.subr.mxu0 %v2488
        %2582 = vmatpush1.msra.mxu0 %v2485
        %2583 = vmatprep.subr.mxu0 0.0
        %2584 = vmatpush1.msra.mxu0 0.0
        %2585 = vmatprep.subr.mxu0 0.0
        %2586 = vmatpush1.msra.mxu0 0.0
        %2587 = vmatprep.subr.mxu0 0.0
        %2588 = vmatpush1.msra.mxu0 0.0
        %2589 = vmatprep.subr.mxu0 0.0
        %2590 = vmatpush1.msra.mxu0 0.0
        %2591 = vmatprep.subr.mxu0 0.0
        %2592 = vmatpush1.msra.mxu0 0.0
        %2593 = vmatprep.subr.mxu0 0.0
        %2594 = vmatpush1.msra.mxu0 0.0
        %2595 = vmatprep.subr.mxu0 0.0
        %2596 = vmatpush1.msra.mxu0 0.0
        %2597 = vmatprep.subr.mxu0 0.0
        %2598 = vmatpush1.msra.mxu0 0.0
        %2599 = vmatprep.subr.mxu0 0.0
        %2600 = vmatpush1.msra.mxu0 0.0
        %2601 = vmatprep.subr.mxu0 0.0
        %2602 = vmatpush1.msra.mxu0 0.0
        %2603 = vmatprep.subr.mxu0 0.0
        %2604 = vmatpush1.msra.mxu0 0.0
        %2605 = vmatprep.subr.mxu0 0.0
        %2606 = vmatpush1.msra.mxu0 0.0
        %2607 = vmatprep.subr.mxu0 0.0
        %2608 = vmatpush1.msra.mxu0 0.0
        %2609 = vmatprep.subr.mxu0 0.0
        %2610 = vmatpush1.msra.mxu0 0.0
        %2611 = vmatprep.subr.mxu0 0.0
        %2612 = vmatpush1.msra.mxu0 0.0
        %2613 = vmatprep.subr.mxu0 0.0
        %2614 = vmatpush1.msra.mxu0 0.0
        %2615 = vmatprep.subr.mxu0 0.0
        %2616 = vmatpush1.msra.mxu0 0.0
        %2617 = vmatprep.subr.mxu0 0.0
        %2618 = vmatpush1.msra.mxu0 0.0
        %2619 = vmatprep.subr.mxu0 0.0
        %2620 = vmatpush1.msra.mxu0 0.0
        %2621 = vmatprep.subr.mxu0 0.0
        %2622 = vmatpush1.msra.mxu0 0.0
        %2623 = vmatprep.subr.mxu0 0.0
        %2624 = vmatpush1.msra.mxu0 0.0
        %2625 = vmatprep.subr.mxu0 0.0
        %2626 = vmatpush1.msra.mxu0 0.0
        %2627 = vmatprep.subr.mxu0 0.0
        %2628 = vmatpush1.msra.mxu0 0.0
        %2629 = vmatprep.subr.mxu0 0.0
        %2630 = vmatpush1.msra.mxu0 0.0
        %2631 = vmatprep.subr.mxu0 0.0
        %2632 = vmatpush1.msra.mxu0 0.0
        %2633 = vmatprep.subr.mxu0 0.0
        %2634 = vmatpush1.msra.mxu0 0.0
        %2635 = vmatprep.subr.mxu0 0.0
        %2636 = vmatpush1.msra.mxu0 0.0
        %2637 = vmatprep.subr.mxu0 0.0
        %2638 = vmatpush1.msra.mxu0 0.0
        %2639 = vmatprep.mubr.f32.mxu0 0.0
        %2640 = vmatmul.mubr.f32.gmra.mrb[0].mxu0 %v2570
        %v2641 = vpop.f32.mrb[0].mxu0
        %v2642 = vadd.f32 0.0, %v2641
        %v2643 = vpop.f32.mrb[0].mxu0
        %v2644 = vadd.f32 0.0, %v2643
        %2645 = vmatprep.mubr.f32.mxu0 0.0
        %2646 = vmatmul.mubr.f32.gmra.mrb[0].mxu0 %v2573
        %v2647 = vpop.f32.mrb[0].mxu0
        %v2648 = vadd.f32 0.0, %v2647
        %v2649 = vpop.f32.mrb[0].mxu0
        %v2650 = vadd.f32 0.0, %v2649
        %2651 = vdwg.mxu0
        %v2652 = vmax.f32 %v2557, %v2642
        %v2653 = vmax.f32 %v2559, %v2644
        %v2654 = vmax.f32 %v2563, %v2648
        %v2655 = vmax.f32 %v2565, %v2650
        %v2656 = vld [vmem:[%s5] sm:$0xff]
        %v2657 = vld [vmem:[%s5 + $0x8] sm:$0xff]
        %v2658 = vld [vmem:[%s5 + $0x10] sm:$0xff]
        %v2659 = vld [vmem:[%s5 + $0x18] sm:$0xff]
        %v2660 = vld [vmem:[%s5 + $0x20] sm:$0xff]
        %v2661 = vld [vmem:[%s5 + $0x28] sm:$0xff]
        %v2662 = vld [vmem:[%s5 + $0x30] sm:$0xff]
        %v2663 = vld [vmem:[%s5 + $0x38] sm:$0xff]
        %v2664 = vld [vmem:[%s5 + $0x40] sm:$0xff]
        %v2665 = vld [vmem:[%s5 + $0x48] sm:$0xff]
        %v2666 = vld [vmem:[%s5 + $0x50] sm:$0xff]
        %v2667 = vld [vmem:[%s5 + $0x58] sm:$0xff]
        %v2668 = vld [vmem:[%s5 + $0x60] sm:$0xff]
        %v2669 = vld [vmem:[%s5 + $0x68] sm:$0xff]
        %v2670 = vld [vmem:[%s5 + $0x70] sm:$0xff]
        %v2671 = vld [vmem:[%s5 + $0x78] sm:$0xff]
        %v2672 = vld [vmem:[%s5 + $0x80] sm:$0xff]
        %v2673 = vld [vmem:[%s5 + $0x88] sm:$0xff]
        %v2674 = vld [vmem:[%s5 + $0x90] sm:$0xff]
        %v2675 = vld [vmem:[%s5 + $0x98] sm:$0xff]
        %v2676 = vld [vmem:[%s5 + $0xa0] sm:$0xff]
        %vm2677 = vcmask 326656
        %v2679 = vsel %vm2677, %v2653, 0
        %v2682 = vsel %vm2677, %v2655, 0
        %2684 = vmatprep.subr.mxu0 0.0
        %2685 = vmatpush1.msra.mxu0 %v2656
        %2686 = vmatprep.subr.mxu0 0.0
        %2687 = vmatpush1.msra.mxu0 %v2657
        %2688 = vmatprep.subr.mxu0 0.0
        %2689 = vmatpush1.msra.mxu0 %v2658
        %2690 = vmatprep.subr.mxu0 0.0
        %2691 = vmatpush1.msra.mxu0 %v2659
        %2692 = vmatprep.subr.mxu0 0.0
        %2693 = vmatpush1.msra.mxu0 %v2660
        %2694 = vmatprep.subr.mxu0 0.0
        %2695 = vmatpush1.msra.mxu0 %v2661
        %2696 = vmatprep.subr.mxu0 0.0
        %2697 = vmatpush1.msra.mxu0 %v2662
        %2698 = vmatprep.subr.mxu0 0.0
        %2699 = vmatpush1.msra.mxu0 %v2663
        %2700 = vmatprep.subr.mxu0 0.0
        %2701 = vmatpush1.msra.mxu0 %v2664
        %2702 = vmatprep.subr.mxu0 0.0
        %2703 = vmatpush1.msra.mxu0 %v2665
        %2704 = vmatprep.subr.mxu0 0.0
        %2705 = vmatpush1.msra.mxu0 %v2666
        %2706 = vmatprep.subr.mxu0 0.0
        %2707 = vmatpush1.msra.mxu0 %v2667
        %2708 = vmatprep.subr.mxu0 0.0
        %2709 = vmatpush1.msra.mxu0 %v2668
        %2710 = vmatprep.subr.mxu0 0.0
        %2711 = vmatpush1.msra.mxu0 %v2669
        %2712 = vmatprep.subr.mxu0 0.0
        %2713 = vmatpush1.msra.mxu0 %v2670
        %2714 = vmatprep.subr.mxu0 0.0
        %2715 = vmatpush1.msra.mxu0 %v2671
        %2716 = vmatprep.subr.mxu0 0.0
        %2717 = vmatpush1.msra.mxu0 %v2672
        %2718 = vmatprep.subr.mxu0 0.0
        %2719 = vmatpush1.msra.mxu0 %v2673
        %2720 = vmatprep.subr.mxu0 0.0
        %2721 = vmatpush1.msra.mxu0 %v2674
        %2722 = vmatprep.subr.mxu0 0.0
        %2723 = vmatpush1.msra.mxu0 %v2675
        %2724 = vmatprep.subr.mxu0 0.0
        %2725 = vmatpush1.msra.mxu0 %v2676
        %2726 = vmatprep.subr.mxu0 0.0
        %2727 = vmatpush1.msra.mxu0 0.0
        %2728 = vmatprep.subr.mxu0 0.0
        %2729 = vmatpush1.msra.mxu0 0.0
        %2730 = vmatprep.subr.mxu0 0.0
        %2731 = vmatpush1.msra.mxu0 0.0
        %2732 = vmatprep.subr.mxu0 0.0
        %2733 = vmatpush1.msra.mxu0 0.0
        %2734 = vmatprep.subr.mxu0 0.0
        %2735 = vmatpush1.msra.mxu0 0.0
        %2736 = vmatprep.subr.mxu0 0.0
        %2737 = vmatpush1.msra.mxu0 0.0
        %2738 = vmatprep.subr.mxu0 0.0
        %2739 = vmatpush1.msra.mxu0 0.0
        %2740 = vmatprep.subr.mxu0 0.0
        %2741 = vmatpush1.msra.mxu0 0.0
        %2742 = vmatprep.subr.mxu0 0.0
        %2743 = vmatpush1.msra.mxu0 0.0
        %2744 = vmatprep.subr.mxu0 0.0
        %2745 = vmatpush1.msra.mxu0 0.0
        %2746 = vmatprep.subr.mxu0 0.0
        %2747 = vmatpush1.msra.mxu0 0.0
        %2748 = vmatprep.mubr.f32.mxu0 %v2679
        %2749 = vmatmul.mubr.f32.gmra.mrb[0].mxu0 %v2652
        %v2750 = vpop.f32.mrb[0].mxu0
        %v2751 = vadd.f32 0.0, %v2750
        %v2752 = vpop.f32.mrb[0].mxu0
        %2753 = vmatprep.mubr.f32.mxu0 %v2682
        %2754 = vmatmul.mubr.f32.gmra.mrb[0].mxu0 %v2654
        %v2755 = vpop.f32.mrb[0].mxu0
        %v2756 = vadd.f32 0.0, %v2755
        %v2757 = vpop.f32.mrb[0].mxu0
        %2758 = vdwg.mxu0
        %v2759 = vld [vmem:[%s6] sm:$0xff]
        %v2760 = vld [vmem:[%s6 + $0x8] sm:$0xff]
        %v2761 = vld [vmem:[%s6 + $0x10] sm:$0xff]
        %v2762 = vld [vmem:[%s6 + $0x18] sm:$0xff]
        %v2763 = vld [vmem:[%s6 + $0x20] sm:$0xff]
        %v2764 = vld [vmem:[%s6 + $0x28] sm:$0xff]
        %v2765 = vld [vmem:[%s6 + $0x30] sm:$0xff]
        %v2766 = vld [vmem:[%s6 + $0x38] sm:$0xff]
        %v2767 = vld [vmem:[%s6 + $0x40] sm:$0xff]
        %v2768 = vld [vmem:[%s6 + $0x48] sm:$0xff]
        %v2769 = vld [vmem:[%s6 + $0x50] sm:$0xff]
        %v2770 = vld [vmem:[%s6 + $0x58] sm:$0xff]
        %v2771 = vld [vmem:[%s6 + $0x60] sm:$0xff]
        %v2772 = vld [vmem:[%s6 + $0x68] sm:$0xff]
        %v2773 = vld [vmem:[%s6 + $0x70] sm:$0xff]
        %v2774 = vld [vmem:[%s6 + $0x78] sm:$0xff]
        %v2775 = vld [vmem:[%s6 + $0x80] sm:$0xff]
        %v2776 = vld [vmem:[%s6 + $0x88] sm:$0xff]
        %v2777 = vld [vmem:[%s6 + $0x90] sm:$0xff]
        %v2778 = vld [vmem:[%s6 + $0x98] sm:$0xff]
        %v2779 = vld [vmem:[%s6 + $0xa0] sm:$0xff]
        %2780 = vmatprep.subr.mxu0 0.0
        %2781 = vmatpush1.msra.mxu0 %v2759
        %2782 = vmatprep.subr.mxu0 0.0
        %2783 = vmatpush1.msra.mxu0 %v2760
        %2784 = vmatprep.subr.mxu0 0.0
        %2785 = vmatpush1.msra.mxu0 %v2761
        %2786 = vmatprep.subr.mxu0 0.0
        %2787 = vmatpush1.msra.mxu0 %v2762
        %2788 = vmatprep.subr.mxu0 0.0
        %2789 = vmatpush1.msra.mxu0 %v2763
        %2790 = vmatprep.subr.mxu0 0.0
        %2791 = vmatpush1.msra.mxu0 %v2764
        %2792 = vmatprep.subr.mxu0 0.0
        %2793 = vmatpush1.msra.mxu0 %v2765
        %2794 = vmatprep.subr.mxu0 0.0
        %2795 = vmatpush1.msra.mxu0 %v2766
        %2796 = vmatprep.subr.mxu0 0.0
        %2797 = vmatpush1.msra.mxu0 %v2767
        %2798 = vmatprep.subr.mxu0 0.0
        %2799 = vmatpush1.msra.mxu0 %v2768
        %2800 = vmatprep.subr.mxu0 0.0
        %2801 = vmatpush1.msra.mxu0 %v2769
        %2802 = vmatprep.subr.mxu0 0.0
        %2803 = vmatpush1.msra.mxu0 %v2770
        %2804 = vmatprep.subr.mxu0 0.0
        %2805 = vmatpush1.msra.mxu0 %v2771
        %2806 = vmatprep.subr.mxu0 0.0
        %2807 = vmatpush1.msra.mxu0 %v2772
        %2808 = vmatprep.subr.mxu0 0.0
        %2809 = vmatpush1.msra.mxu0 %v2773
        %2810 = vmatprep.subr.mxu0 0.0
        %2811 = vmatpush1.msra.mxu0 %v2774
        %2812 = vmatprep.subr.mxu0 0.0
        %2813 = vmatpush1.msra.mxu0 %v2775
        %2814 = vmatprep.subr.mxu0 0.0
        %2815 = vmatpush1.msra.mxu0 %v2776
        %2816 = vmatprep.subr.mxu0 0.0
        %2817 = vmatpush1.msra.mxu0 %v2777
        %2818 = vmatprep.subr.mxu0 0.0
        %2819 = vmatpush1.msra.mxu0 %v2778
        %2820 = vmatprep.subr.mxu0 0.0
        %2821 = vmatpush1.msra.mxu0 %v2779
        %2822 = vmatprep.subr.mxu0 0.0
        %2823 = vmatpush1.msra.mxu0 0.0
        %2824 = vmatprep.subr.mxu0 0.0
        %2825 = vmatpush1.msra.mxu0 0.0
        %2826 = vmatprep.subr.mxu0 0.0
        %2827 = vmatpush1.msra.mxu0 0.0
        %2828 = vmatprep.subr.mxu0 0.0
        %2829 = vmatpush1.msra.mxu0 0.0
        %2830 = vmatprep.subr.mxu0 0.0
        %2831 = vmatpush1.msra.mxu0 0.0
        %2832 = vmatprep.subr.mxu0 0.0
        %2833 = vmatpush1.msra.mxu0 0.0
        %2834 = vmatprep.subr.mxu0 0.0
        %2835 = vmatpush1.msra.mxu0 0.0
        %2836 = vmatprep.subr.mxu0 0.0
        %2837 = vmatpush1.msra.mxu0 0.0
        %2838 = vmatprep.subr.mxu0 0.0
        %2839 = vmatpush1.msra.mxu0 0.0
        %2840 = vmatprep.subr.mxu0 0.0
        %2841 = vmatpush1.msra.mxu0 0.0
        %2842 = vmatprep.subr.mxu0 0.0
        %2843 = vmatpush1.msra.mxu0 0.0
        %2844 = vmatprep.mubr.f32.mxu0 %v2679
        %2845 = vmatmul.mubr.f32.gmra.mrb[0].mxu0 %v2652
        %v2846 = vpop.f32.mrb[0].mxu0
        %v2847 = vadd.f32 0.0, %v2846
        %v2848 = vpop.f32.mrb[0].mxu0
        %2849 = vmatprep.mubr.f32.mxu0 %v2682
        %2850 = vmatmul.mubr.f32.gmra.mrb[0].mxu0 %v2654
        %v2851 = vpop.f32.mrb[0].mxu0
        %v2852 = vadd.f32 0.0, %v2851
        %v2853 = vpop.f32.mrb[0].mxu0
        %2854 = vdwg.mxu0
        %v2855 = vmax.f32 %v2751, %v2847
        %v2856 = vmax.f32 %v2756, %v2852
        %vm2857 = vcmask 687104
        %2858 = vst.msk [vmem:[#allocation2] sm:$0xff] %vm2857, %v2855
        %vm2859 = vcmask 685056
        %2860 = vst.msk [vmem:[#allocation2 + $0x8] sm:$0x3f] %vm2859, %v2856
        %v2861 = vld [vmem:[#allocation2] sm:$0xff]
        %v2862 = vld [vmem:[#allocation2 + $0x8] sm:$0x3]
        %v2863 = vld [vmem:[%s7] sm:$0xff]
        %v2864 = vld [vmem:[%s7 + $0x8] sm:$0xff]
        %v2865 = vld [vmem:[%s7 + $0x10] sm:$0xff]
        %v2866 = vld [vmem:[%s7 + $0x18] sm:$0xff]
        %v2867 = vld [vmem:[%s7 + $0x20] sm:$0xff]
        %v2868 = vld [vmem:[%s7 + $0x28] sm:$0xff]
        %v2869 = vld [vmem:[%s7 + $0x30] sm:$0xff]
        %v2870 = vld [vmem:[%s7 + $0x38] sm:$0xff]
        %v2871 = vld [vmem:[%s7 + $0x40] sm:$0xff]
        %v2872 = vld [vmem:[%s7 + $0x48] sm:$0xff]
        %v2873 = vld [vmem:[%s7 + $0x50] sm:$0xff]
        %v2874 = vld [vmem:[%s7 + $0x58] sm:$0xff]
        %v2875 = vld [vmem:[%s7 + $0x60] sm:$0xff]
        %v2876 = vld [vmem:[%s7 + $0x68] sm:$0xff]
        %v2877 = vld [vmem:[%s7 + $0x70] sm:$0xff]
        %v2878 = vld [vmem:[%s7 + $0x78] sm:$0xff]
        %v2879 = vld [vmem:[%s7 + $0x80] sm:$0xff]
        %v2880 = vld [vmem:[%s7 + $0x88] sm:$0xff]
        %v2881 = vld [vmem:[%s7 + $0x90] sm:$0xff]
        %v2882 = vld [vmem:[%s7 + $0x98] sm:$0xff]
        %v2883 = vld [vmem:[%s7 + $0xa0] sm:$0xf]
        %v2884 = vld [vmem:[%s7 + $0xa8] sm:$0xf]
        %v2885 = vld [vmem:[#allocation2 + $0x1] sm:$0xff]
        %v2886 = vld [vmem:[#allocation2 + $0x9] sm:$0x3]
        %s2887 = scalar_lea.vmem %s7, 176
        %v2888 = vld [vmem:[%s2887] sm:$0xff]
        %v2889 = vld [vmem:[%s2887 + $0x8] sm:$0xff]
        %v2890 = vld [vmem:[%s2887 + $0x10] sm:$0xff]
        %v2891 = vld [vmem:[%s2887 + $0x18] sm:$0xff]
        %v2892 = vld [vmem:[%s2887 + $0x20] sm:$0xff]
        %v2893 = vld [vmem:[%s2887 + $0x28] sm:$0xff]
        %v2894 = vld [vmem:[%s2887 + $0x30] sm:$0xff]
        %v2895 = vld [vmem:[%s2887 + $0x38] sm:$0xff]
        %v2896 = vld [vmem:[%s2887 + $0x40] sm:$0xff]
        %v2897 = vld [vmem:[%s2887 + $0x48] sm:$0xff]
        %v2898 = vld [vmem:[%s2887 + $0x50] sm:$0xff]
        %v2899 = vld [vmem:[%s2887 + $0x58] sm:$0xff]
        %v2900 = vld [vmem:[%s2887 + $0x60] sm:$0xff]
        %v2901 = vld [vmem:[%s2887 + $0x68] sm:$0xff]
        %v2902 = vld [vmem:[%s2887 + $0x70] sm:$0xff]
        %v2903 = vld [vmem:[%s2887 + $0x78] sm:$0xff]
        %v2904 = vld [vmem:[%s2887 + $0x80] sm:$0xff]
        %v2905 = vld [vmem:[%s2887 + $0x88] sm:$0xff]
        %v2906 = vld [vmem:[%s2887 + $0x90] sm:$0xff]
        %v2907 = vld [vmem:[%s2887 + $0x98] sm:$0xff]
        %v2908 = vld [vmem:[%s2887 + $0xa0] sm:$0xf]
        %v2909 = vld [vmem:[%s2887 + $0xa8] sm:$0xf]
        %v2911 = vsel %vm2857, %v2885, 0
        %v2914 = vsel %vm2857, %v2886, 0
        %v2917 = vsel %vm2483, %v2908, 0
        %v2920 = vsel %vm2483, %v2909, 0
        %2922 = vmatprep.subr.mxu0 %v2889
        %2923 = vmatpush1.msra.mxu0 %v2888
        %2924 = vmatprep.subr.mxu0 %v2891
        %2925 = vmatpush1.msra.mxu0 %v2890
        %2926 = vmatprep.subr.mxu0 %v2893
        %2927 = vmatpush1.msra.mxu0 %v2892
        %2928 = vmatprep.subr.mxu0 %v2895
        %2929 = vmatpush1.msra.mxu0 %v2894
        %2930 = vmatprep.subr.mxu0 %v2897
        %2931 = vmatpush1.msra.mxu0 %v2896
        %2932 = vmatprep.subr.mxu0 %v2899
        %2933 = vmatpush1.msra.mxu0 %v2898
        %2934 = vmatprep.subr.mxu0 %v2901
        %2935 = vmatpush1.msra.mxu0 %v2900
        %2936 = vmatprep.subr.mxu0 %v2903
        %2937 = vmatpush1.msra.mxu0 %v2902
        %2938 = vmatprep.subr.mxu0 %v2905
        %2939 = vmatpush1.msra.mxu0 %v2904
        %2940 = vmatprep.subr.mxu0 %v2907
        %2941 = vmatpush1.msra.mxu0 %v2906
        %2942 = vmatprep.subr.mxu0 %v2920
        %2943 = vmatpush1.msra.mxu0 %v2917
        %2944 = vmatprep.subr.mxu0 0.0
        %2945 = vmatpush1.msra.mxu0 0.0
        %2946 = vmatprep.subr.mxu0 0.0
        %2947 = vmatpush1.msra.mxu0 0.0
        %2948 = vmatprep.subr.mxu0 0.0
        %2949 = vmatpush1.msra.mxu0 0.0
        %2950 = vmatprep.subr.mxu0 0.0
        %2951 = vmatpush1.msra.mxu0 0.0
        %2952 = vmatprep.subr.mxu0 0.0
        %2953 = vmatpush1.msra.mxu0 0.0
        %2954 = vmatprep.subr.mxu0 0.0
        %2955 = vmatpush1.msra.mxu0 0.0
        %2956 = vmatprep.subr.mxu0 0.0
        %2957 = vmatpush1.msra.mxu0 0.0
        %2958 = vmatprep.subr.mxu0 0.0
        %2959 = vmatpush1.msra.mxu0 0.0
        %2960 = vmatprep.subr.mxu0 0.0
        %2961 = vmatpush1.msra.mxu0 0.0
        %2962 = vmatprep.subr.mxu0 0.0
        %2963 = vmatpush1.msra.mxu0 0.0
        %2964 = vmatprep.subr.mxu0 0.0
        %2965 = vmatpush1.msra.mxu0 0.0
        %2966 = vmatprep.subr.mxu0 0.0
        %2967 = vmatpush1.msra.mxu0 0.0
        %2968 = vmatprep.subr.mxu0 0.0
        %2969 = vmatpush1.msra.mxu0 0.0
        %2970 = vmatprep.subr.mxu0 0.0
        %2971 = vmatpush1.msra.mxu0 0.0
        %2972 = vmatprep.subr.mxu0 0.0
        %2973 = vmatpush1.msra.mxu0 0.0
        %2974 = vmatprep.subr.mxu0 0.0
        %2975 = vmatpush1.msra.mxu0 0.0
        %2976 = vmatprep.subr.mxu0 0.0
        %2977 = vmatpush1.msra.mxu0 0.0
        %2978 = vmatprep.subr.mxu0 0.0
        %2979 = vmatpush1.msra.mxu0 0.0
        %2980 = vmatprep.subr.mxu0 0.0
        %2981 = vmatpush1.msra.mxu0 0.0
        %2982 = vmatprep.subr.mxu0 0.0
        %2983 = vmatpush1.msra.mxu0 0.0
        %2984 = vmatprep.subr.mxu0 0.0
        %2985 = vmatpush1.msra.mxu0 0.0
        %2986 = vmatprep.mubr.f32.mxu0 0.0
        %2987 = vmatmul.mubr.f32.gmra.mrb[0].mxu0 %v2911
        %v2988 = vpop.f32.mrb[0].mxu0
        %v2989 = vadd.f32 0.0, %v2988
        %v2990 = vpop.f32.mrb[0].mxu0
        %v2991 = vadd.f32 0.0, %v2990
        %2992 = vmatprep.mubr.f32.mxu0 0.0
        %2993 = vmatmul.mubr.f32.gmra.mrb[0].mxu0 %v2914
        %v2994 = vpop.f32.mrb[0].mxu0
        %v2995 = vadd.f32 0.0, %v2994
        %v2996 = vpop.f32.mrb[0].mxu0
        %v2997 = vadd.f32 0.0, %v2996
        %2998 = vdwg.mxu0
        %v3000 = vsel %vm2857, %v2861, 0
        %v3003 = vsel %vm2857, %v2862, 0
        %v3006 = vsel %vm2483, %v2883, 0
        %v3009 = vsel %vm2483, %v2884, 0
        %3011 = vmatprep.subr.mxu0 %v2864
        %3012 = vmatpush1.msra.mxu0 %v2863
        %3013 = vmatprep.subr.mxu0 %v2866
        %3014 = vmatpush1.msra.mxu0 %v2865
        %3015 = vmatprep.subr.mxu0 %v2868
        %3016 = vmatpush1.msra.mxu0 %v2867
        %3017 = vmatprep.subr.mxu0 %v2870
        %3018 = vmatpush1.msra.mxu0 %v2869
        %3019 = vmatprep.subr.mxu0 %v2872
        %3020 = vmatpush1.msra.mxu0 %v2871
        %3021 = vmatprep.subr.mxu0 %v2874
        %3022 = vmatpush1.msra.mxu0 %v2873
        %3023 = vmatprep.subr.mxu0 %v2876
        %3024 = vmatpush1.msra.mxu0 %v2875
        %3025 = vmatprep.subr.mxu0 %v2878
        %3026 = vmatpush1.msra.mxu0 %v2877
        %3027 = vmatprep.subr.mxu0 %v2880
        %3028 = vmatpush1.msra.mxu0 %v2879
        %3029 = vmatprep.subr.mxu0 %v2882
        %3030 = vmatpush1.msra.mxu0 %v2881
        %3031 = vmatprep.subr.mxu0 %v3009
        %3032 = vmatpush1.msra.mxu0 %v3006
        %3033 = vmatprep.subr.mxu0 0.0
        %3034 = vmatpush1.msra.mxu0 0.0
        %3035 = vmatprep.subr.mxu0 0.0
        %3036 = vmatpush1.msra.mxu0 0.0
        %3037 = vmatprep.subr.mxu0 0.0
        %3038 = vmatpush1.msra.mxu0 0.0
        %3039 = vmatprep.subr.mxu0 0.0
        %3040 = vmatpush1.msra.mxu0 0.0
        %3041 = vmatprep.subr.mxu0 0.0
        %3042 = vmatpush1.msra.mxu0 0.0
        %3043 = vmatprep.subr.mxu0 0.0
        %3044 = vmatpush1.msra.mxu0 0.0
        %3045 = vmatprep.subr.mxu0 0.0
        %3046 = vmatpush1.msra.mxu0 0.0
        %3047 = vmatprep.subr.mxu0 0.0
        %3048 = vmatpush1.msra.mxu0 0.0
        %3049 = vmatprep.subr.mxu0 0.0
        %3050 = vmatpush1.msra.mxu0 0.0
        %3051 = vmatprep.subr.mxu0 0.0
        %3052 = vmatpush1.msra.mxu0 0.0
        %3053 = vmatprep.subr.mxu0 0.0
        %3054 = vmatpush1.msra.mxu0 0.0
        %3055 = vmatprep.subr.mxu0 0.0
        %3056 = vmatpush1.msra.mxu0 0.0
        %3057 = vmatprep.subr.mxu0 0.0
        %3058 = vmatpush1.msra.mxu0 0.0
        %3059 = vmatprep.subr.mxu0 0.0
        %3060 = vmatpush1.msra.mxu0 0.0
        %3061 = vmatprep.subr.mxu0 0.0
        %3062 = vmatpush1.msra.mxu0 0.0
        %3063 = vmatprep.subr.mxu0 0.0
        %3064 = vmatpush1.msra.mxu0 0.0
        %3065 = vmatprep.subr.mxu0 0.0
        %3066 = vmatpush1.msra.mxu0 0.0
        %3067 = vmatprep.subr.mxu0 0.0
        %3068 = vmatpush1.msra.mxu0 0.0
        %3069 = vmatprep.subr.mxu0 0.0
        %3070 = vmatpush1.msra.mxu0 0.0
        %3071 = vmatprep.subr.mxu0 0.0
        %3072 = vmatpush1.msra.mxu0 0.0
        %3073 = vmatprep.subr.mxu0 0.0
        %3074 = vmatpush1.msra.mxu0 0.0
        %3075 = vmatprep.mubr.f32.mxu0 0.0
        %3076 = vmatmul.mubr.f32.gmra.mrb[0].mxu0 %v3000
        %v3077 = vpop.f32.mrb[0].mxu0
        %v3078 = vadd.f32 %v2989, %v3077
        %v3079 = vpop.f32.mrb[0].mxu0
        %v3080 = vadd.f32 %v2991, %v3079
        %3081 = vmatprep.mubr.f32.mxu0 0.0
        %3082 = vmatmul.mubr.f32.gmra.mrb[0].mxu0 %v3003
        %v3083 = vpop.f32.mrb[0].mxu0
        %v3084 = vadd.f32 %v2995, %v3083
        %v3085 = vpop.f32.mrb[0].mxu0
        %v3086 = vadd.f32 %v2997, %v3085
        %3087 = vdwg.mxu0
        %v3088 = vld [vmem:[#allocation2 + $0x2] sm:$0xff]
        %v3089 = vld [vmem:[#allocation2 + $0xa] sm:$0x3]
        %s3090 = scalar_lea.vmem %s7, 352
        %v3091 = vld [vmem:[%s3090] sm:$0xff]
        %v3092 = vld [vmem:[%s3090 + $0x8] sm:$0xff]
        %v3093 = vld [vmem:[%s3090 + $0x10] sm:$0xff]
        %v3094 = vld [vmem:[%s3090 + $0x18] sm:$0xff]
        %v3095 = vld [vmem:[%s3090 + $0x20] sm:$0xff]
        %v3096 = vld [vmem:[%s3090 + $0x28] sm:$0xff]
        %v3097 = vld [vmem:[%s3090 + $0x30] sm:$0xff]
        %v3098 = vld [vmem:[%s3090 + $0x38] sm:$0xff]
        %v3099 = vld [vmem:[%s3090 + $0x40] sm:$0xff]
        %v3100 = vld [vmem:[%s3090 + $0x48] sm:$0xff]
        %v3101 = vld [vmem:[%s3090 + $0x50] sm:$0xff]
        %v3102 = vld [vmem:[%s3090 + $0x58] sm:$0xff]
        %v3103 = vld [vmem:[%s3090 + $0x60] sm:$0xff]
        %v3104 = vld [vmem:[%s3090 + $0x68] sm:$0xff]
        %v3105 = vld [vmem:[%s3090 + $0x70] sm:$0xff]
        %v3106 = vld [vmem:[%s3090 + $0x78] sm:$0xff]
        %v3107 = vld [vmem:[%s3090 + $0x80] sm:$0xff]
        %v3108 = vld [vmem:[%s3090 + $0x88] sm:$0xff]
        %v3109 = vld [vmem:[%s3090 + $0x90] sm:$0xff]
        %v3110 = vld [vmem:[%s3090 + $0x98] sm:$0xff]
        %v3111 = vld [vmem:[%s3090 + $0xa0] sm:$0xf]
        %v3112 = vld [vmem:[%s3090 + $0xa8] sm:$0xf]
        %v3114 = vsel %vm2857, %v3088, 0
        %v3117 = vsel %vm2857, %v3089, 0
        %v3120 = vsel %vm2483, %v3111, 0
        %v3123 = vsel %vm2483, %v3112, 0
        %3125 = vmatprep.subr.mxu0 %v3092
        %3126 = vmatpush1.msra.mxu0 %v3091
        %3127 = vmatprep.subr.mxu0 %v3094
        %3128 = vmatpush1.msra.mxu0 %v3093
        %3129 = vmatprep.subr.mxu0 %v3096
        %3130 = vmatpush1.msra.mxu0 %v3095
        %3131 = vmatprep.subr.mxu0 %v3098
        %3132 = vmatpush1.msra.mxu0 %v3097
        %3133 = vmatprep.subr.mxu0 %v3100
        %3134 = vmatpush1.msra.mxu0 %v3099
        %3135 = vmatprep.subr.mxu0 %v3102
        %3136 = vmatpush1.msra.mxu0 %v3101
        %3137 = vmatprep.subr.mxu0 %v3104
        %3138 = vmatpush1.msra.mxu0 %v3103
        %3139 = vmatprep.subr.mxu0 %v3106
        %3140 = vmatpush1.msra.mxu0 %v3105
        %3141 = vmatprep.subr.mxu0 %v3108
        %3142 = vmatpush1.msra.mxu0 %v3107
        %3143 = vmatprep.subr.mxu0 %v3110
        %3144 = vmatpush1.msra.mxu0 %v3109
        %3145 = vmatprep.subr.mxu0 %v3123
        %3146 = vmatpush1.msra.mxu0 %v3120
        %3147 = vmatprep.subr.mxu0 0.0
        %3148 = vmatpush1.msra.mxu0 0.0
        %3149 = vmatprep.subr.mxu0 0.0
        %3150 = vmatpush1.msra.mxu0 0.0
        %3151 = vmatprep.subr.mxu0 0.0
        %3152 = vmatpush1.msra.mxu0 0.0
        %3153 = vmatprep.subr.mxu0 0.0
        %3154 = vmatpush1.msra.mxu0 0.0
        %3155 = vmatprep.subr.mxu0 0.0
        %3156 = vmatpush1.msra.mxu0 0.0
        %3157 = vmatprep.subr.mxu0 0.0
        %3158 = vmatpush1.msra.mxu0 0.0
        %3159 = vmatprep.subr.mxu0 0.0
        %3160 = vmatpush1.msra.mxu0 0.0
        %3161 = vmatprep.subr.mxu0 0.0
        %3162 = vmatpush1.msra.mxu0 0.0
        %3163 = vmatprep.subr.mxu0 0.0
        %3164 = vmatpush1.msra.mxu0 0.0
        %3165 = vmatprep.subr.mxu0 0.0
        %3166 = vmatpush1.msra.mxu0 0.0
        %3167 = vmatprep.subr.mxu0 0.0
        %3168 = vmatpush1.msra.mxu0 0.0
        %3169 = vmatprep.subr.mxu0 0.0
        %3170 = vmatpush1.msra.mxu0 0.0
        %3171 = vmatprep.subr.mxu0 0.0
        %3172 = vmatpush1.msra.mxu0 0.0
        %3173 = vmatprep.subr.mxu0 0.0
        %3174 = vmatpush1.msra.mxu0 0.0
        %3175 = vmatprep.subr.mxu0 0.0
        %3176 = vmatpush1.msra.mxu0 0.0
        %3177 = vmatprep.subr.mxu0 0.0
        %3178 = vmatpush1.msra.mxu0 0.0
        %3179 = vmatprep.subr.mxu0 0.0
        %3180 = vmatpush1.msra.mxu0 0.0
        %3181 = vmatprep.subr.mxu0 0.0
        %3182 = vmatpush1.msra.mxu0 0.0
        %3183 = vmatprep.subr.mxu0 0.0
        %3184 = vmatpush1.msra.mxu0 0.0
        %3185 = vmatprep.subr.mxu0 0.0
        %3186 = vmatpush1.msra.mxu0 0.0
        %3187 = vmatprep.subr.mxu0 0.0
        %3188 = vmatpush1.msra.mxu0 0.0
        %3189 = vmatprep.mubr.f32.mxu0 0.0
        %3190 = vmatmul.mubr.f32.gmra.mrb[0].mxu0 %v3114
        %v3191 = vpop.f32.mrb[0].mxu0
        %v3192 = vadd.f32 0.0, %v3191
        %v3193 = vpop.f32.mrb[0].mxu0
        %v3194 = vadd.f32 0.0, %v3193
        %3195 = vmatprep.mubr.f32.mxu0 0.0
        %3196 = vmatmul.mubr.f32.gmra.mrb[0].mxu0 %v3117
        %v3197 = vpop.f32.mrb[0].mxu0
        %v3198 = vadd.f32 0.0, %v3197
        %v3199 = vpop.f32.mrb[0].mxu0
        %v3200 = vadd.f32 0.0, %v3199
        %3201 = vdwg.mxu0
        %v3202 = vadd.f32 %v3078, %v3192
        %v3203 = vadd.f32 %v3080, %v3194
        %v3204 = vadd.f32 %v3084, %v3198
        %v3205 = vadd.f32 %v3086, %v3200
        %v3206 = vld [vmem:[#allocation2 + $0x3] sm:$0xff]
        %v3207 = vld [vmem:[#allocation2 + $0xb] sm:$0x3]
        %s3208 = scalar_lea.vmem %s7, 528
        %v3209 = vld [vmem:[%s3208] sm:$0xff]
        %v3210 = vld [vmem:[%s3208 + $0x8] sm:$0xff]
        %v3211 = vld [vmem:[%s3208 + $0x10] sm:$0xff]
        %v3212 = vld [vmem:[%s3208 + $0x18] sm:$0xff]
        %v3213 = vld [vmem:[%s3208 + $0x20] sm:$0xff]
        %v3214 = vld [vmem:[%s3208 + $0x28] sm:$0xff]
        %v3215 = vld [vmem:[%s3208 + $0x30] sm:$0xff]
        %v3216 = vld [vmem:[%s3208 + $0x38] sm:$0xff]
        %v3217 = vld [vmem:[%s3208 + $0x40] sm:$0xff]
        %v3218 = vld [vmem:[%s3208 + $0x48] sm:$0xff]
        %v3219 = vld [vmem:[%s3208 + $0x50] sm:$0xff]
        %v3220 = vld [vmem:[%s3208 + $0x58] sm:$0xff]
        %v3221 = vld [vmem:[%s3208 + $0x60] sm:$0xff]
        %v3222 = vld [vmem:[%s3208 + $0x68] sm:$0xff]
        %v3223 = vld [vmem:[%s3208 + $0x70] sm:$0xff]
        %v3224 = vld [vmem:[%s3208 + $0x78] sm:$0xff]
        %v3225 = vld [vmem:[%s3208 + $0x80] sm:$0xff]
        %v3226 = vld [vmem:[%s3208 + $0x88] sm:$0xff]
        %v3227 = vld [vmem:[%s3208 + $0x90] sm:$0xff]
        %v3228 = vld [vmem:[%s3208 + $0x98] sm:$0xff]
        %v3229 = vld [vmem:[%s3208 + $0xa0] sm:$0xf]
        %v3230 = vld [vmem:[%s3208 + $0xa8] sm:$0xf]
        %v3232 = vsel %vm2857, %v3206, 0
        %v3235 = vsel %vm2857, %v3207, 0
        %v3238 = vsel %vm2483, %v3229, 0
        %v3241 = vsel %vm2483, %v3230, 0
        %3243 = vmatprep.subr.mxu0 %v3210
        %3244 = vmatpush1.msra.mxu0 %v3209
        %3245 = vmatprep.subr.mxu0 %v3212
        %3246 = vmatpush1.msra.mxu0 %v3211
        %3247 = vmatprep.subr.mxu0 %v3214
        %3248 = vmatpush1.msra.mxu0 %v3213
        %3249 = vmatprep.subr.mxu0 %v3216
        %3250 = vmatpush1.msra.mxu0 %v3215
        %3251 = vmatprep.subr.mxu0 %v3218
        %3252 = vmatpush1.msra.mxu0 %v3217
        %3253 = vmatprep.subr.mxu0 %v3220
        %3254 = vmatpush1.msra.mxu0 %v3219
        %3255 = vmatprep.subr.mxu0 %v3222
        %3256 = vmatpush1.msra.mxu0 %v3221
        %3257 = vmatprep.subr.mxu0 %v3224
        %3258 = vmatpush1.msra.mxu0 %v3223
        %3259 = vmatprep.subr.mxu0 %v3226
        %3260 = vmatpush1.msra.mxu0 %v3225
        %3261 = vmatprep.subr.mxu0 %v3228
        %3262 = vmatpush1.msra.mxu0 %v3227
        %3263 = vmatprep.subr.mxu0 %v3241
        %3264 = vmatpush1.msra.mxu0 %v3238
        %3265 = vmatprep.subr.mxu0 0.0
        %3266 = vmatpush1.msra.mxu0 0.0
        %3267 = vmatprep.subr.mxu0 0.0
        %3268 = vmatpush1.msra.mxu0 0.0
        %3269 = vmatprep.subr.mxu0 0.0
        %3270 = vmatpush1.msra.mxu0 0.0
        %3271 = vmatprep.subr.mxu0 0.0
        %3272 = vmatpush1.msra.mxu0 0.0
        %3273 = vmatprep.subr.mxu0 0.0
        %3274 = vmatpush1.msra.mxu0 0.0
        %3275 = vmatprep.subr.mxu0 0.0
        %3276 = vmatpush1.msra.mxu0 0.0
        %3277 = vmatprep.subr.mxu0 0.0
        %3278 = vmatpush1.msra.mxu0 0.0
        %3279 = vmatprep.subr.mxu0 0.0
        %3280 = vmatpush1.msra.mxu0 0.0
        %3281 = vmatprep.subr.mxu0 0.0
        %3282 = vmatpush1.msra.mxu0 0.0
        %3283 = vmatprep.subr.mxu0 0.0
        %3284 = vmatpush1.msra.mxu0 0.0
        %3285 = vmatprep.subr.mxu0 0.0
        %3286 = vmatpush1.msra.mxu0 0.0
        %3287 = vmatprep.subr.mxu0 0.0
        %3288 = vmatpush1.msra.mxu0 0.0
        %3289 = vmatprep.subr.mxu0 0.0
        %3290 = vmatpush1.msra.mxu0 0.0
        %3291 = vmatprep.subr.mxu0 0.0
        %3292 = vmatpush1.msra.mxu0 0.0
        %3293 = vmatprep.subr.mxu0 0.0
        %3294 = vmatpush1.msra.mxu0 0.0
        %3295 = vmatprep.subr.mxu0 0.0
        %3296 = vmatpush1.msra.mxu0 0.0
        %3297 = vmatprep.subr.mxu0 0.0
        %3298 = vmatpush1.msra.mxu0 0.0
        %3299 = vmatprep.subr.mxu0 0.0
        %3300 = vmatpush1.msra.mxu0 0.0
        %3301 = vmatprep.subr.mxu0 0.0
        %3302 = vmatpush1.msra.mxu0 0.0
        %3303 = vmatprep.subr.mxu0 0.0
        %3304 = vmatpush1.msra.mxu0 0.0
        %3305 = vmatprep.subr.mxu0 0.0
        %3306 = vmatpush1.msra.mxu0 0.0
        %3307 = vmatprep.mubr.f32.mxu0 0.0
        %3308 = vmatmul.mubr.f32.gmra.mrb[0].mxu0 %v3232
        %v3309 = vpop.f32.mrb[0].mxu0
        %v3310 = vadd.f32 0.0, %v3309
        %v3311 = vpop.f32.mrb[0].mxu0
        %v3312 = vadd.f32 0.0, %v3311
        %3313 = vmatprep.mubr.f32.mxu0 0.0
        %3314 = vmatmul.mubr.f32.gmra.mrb[0].mxu0 %v3235
        %v3315 = vpop.f32.mrb[0].mxu0
        %v3316 = vadd.f32 0.0, %v3315
        %v3317 = vpop.f32.mrb[0].mxu0
        %v3318 = vadd.f32 0.0, %v3317
        %3319 = vdwg.mxu0
        %v3320 = vadd.f32 %v3202, %v3310
        %v3321 = vadd.f32 %v3203, %v3312
        %v3322 = vadd.f32 %v3204, %v3316
        %v3323 = vadd.f32 %v3205, %v3318
        %v3324 = vld [vmem:[#allocation2 + $0x4] sm:$0xff]
        %v3325 = vld [vmem:[#allocation2 + $0xc] sm:$0x3]
        %s3326 = scalar_lea.vmem %s7, 704
        %v3327 = vld [vmem:[%s3326] sm:$0xff]
        %v3328 = vld [vmem:[%s3326 + $0x8] sm:$0xff]
        %v3329 = vld [vmem:[%s3326 + $0x10] sm:$0xff]
        %v3330 = vld [vmem:[%s3326 + $0x18] sm:$0xff]
        %v3331 = vld [vmem:[%s3326 + $0x20] sm:$0xff]
        %v3332 = vld [vmem:[%s3326 + $0x28] sm:$0xff]
        %v3333 = vld [vmem:[%s3326 + $0x30] sm:$0xff]
        %v3334 = vld [vmem:[%s3326 + $0x38] sm:$0xff]
        %v3335 = vld [vmem:[%s3326 + $0x40] sm:$0xff]
        %v3336 = vld [vmem:[%s3326 + $0x48] sm:$0xff]
        %v3337 = vld [vmem:[%s3326 + $0x50] sm:$0xff]
        %v3338 = vld [vmem:[%s3326 + $0x58] sm:$0xff]
        %v3339 = vld [vmem:[%s3326 + $0x60] sm:$0xff]
        %v3340 = vld [vmem:[%s3326 + $0x68] sm:$0xff]
        %v3341 = vld [vmem:[%s3326 + $0x70] sm:$0xff]
        %v3342 = vld [vmem:[%s3326 + $0x78] sm:$0xff]
        %v3343 = vld [vmem:[%s3326 + $0x80] sm:$0xff]
        %v3344 = vld [vmem:[%s3326 + $0x88] sm:$0xff]
        %v3345 = vld [vmem:[%s3326 + $0x90] sm:$0xff]
        %v3346 = vld [vmem:[%s3326 + $0x98] sm:$0xff]
        %v3347 = vld [vmem:[%s3326 + $0xa0] sm:$0xf]
        %v3348 = vld [vmem:[%s3326 + $0xa8] sm:$0xf]
        %v3350 = vsel %vm2857, %v3324, 0
        %v3353 = vsel %vm2857, %v3325, 0
        %v3356 = vsel %vm2483, %v3347, 0
        %v3359 = vsel %vm2483, %v3348, 0
        %3361 = vmatprep.subr.mxu0 %v3328
        %3362 = vmatpush1.msra.mxu0 %v3327
        %3363 = vmatprep.subr.mxu0 %v3330
        %3364 = vmatpush1.msra.mxu0 %v3329
        %3365 = vmatprep.subr.mxu0 %v3332
        %3366 = vmatpush1.msra.mxu0 %v3331
        %3367 = vmatprep.subr.mxu0 %v3334
        %3368 = vmatpush1.msra.mxu0 %v3333
        %3369 = vmatprep.subr.mxu0 %v3336
        %3370 = vmatpush1.msra.mxu0 %v3335
        %3371 = vmatprep.subr.mxu0 %v3338
        %3372 = vmatpush1.msra.mxu0 %v3337
        %3373 = vmatprep.subr.mxu0 %v3340
        %3374 = vmatpush1.msra.mxu0 %v3339
        %3375 = vmatprep.subr.mxu0 %v3342
        %3376 = vmatpush1.msra.mxu0 %v3341
        %3377 = vmatprep.subr.mxu0 %v3344
        %3378 = vmatpush1.msra.mxu0 %v3343
        %3379 = vmatprep.subr.mxu0 %v3346
        %3380 = vmatpush1.msra.mxu0 %v3345
        %3381 = vmatprep.subr.mxu0 %v3359
        %3382 = vmatpush1.msra.mxu0 %v3356
        %3383 = vmatprep.subr.mxu0 0.0
        %3384 = vmatpush1.msra.mxu0 0.0
        %3385 = vmatprep.subr.mxu0 0.0
        %3386 = vmatpush1.msra.mxu0 0.0
        %3387 = vmatprep.subr.mxu0 0.0
        %3388 = vmatpush1.msra.mxu0 0.0
        %3389 = vmatprep.subr.mxu0 0.0
        %3390 = vmatpush1.msra.mxu0 0.0
        %3391 = vmatprep.subr.mxu0 0.0
        %3392 = vmatpush1.msra.mxu0 0.0
        %3393 = vmatprep.subr.mxu0 0.0
        %3394 = vmatpush1.msra.mxu0 0.0
        %3395 = vmatprep.subr.mxu0 0.0
        %3396 = vmatpush1.msra.mxu0 0.0
        %3397 = vmatprep.subr.mxu0 0.0
        %3398 = vmatpush1.msra.mxu0 0.0
        %3399 = vmatprep.subr.mxu0 0.0
        %3400 = vmatpush1.msra.mxu0 0.0
        %3401 = vmatprep.subr.mxu0 0.0
        %3402 = vmatpush1.msra.mxu0 0.0
        %3403 = vmatprep.subr.mxu0 0.0
        %3404 = vmatpush1.msra.mxu0 0.0
        %3405 = vmatprep.subr.mxu0 0.0
        %3406 = vmatpush1.msra.mxu0 0.0
        %3407 = vmatprep.subr.mxu0 0.0
        %3408 = vmatpush1.msra.mxu0 0.0
        %3409 = vmatprep.subr.mxu0 0.0
        %3410 = vmatpush1.msra.mxu0 0.0
        %3411 = vmatprep.subr.mxu0 0.0
        %3412 = vmatpush1.msra.mxu0 0.0
        %3413 = vmatprep.subr.mxu0 0.0
        %3414 = vmatpush1.msra.mxu0 0.0
        %3415 = vmatprep.subr.mxu0 0.0
        %3416 = vmatpush1.msra.mxu0 0.0
        %3417 = vmatprep.subr.mxu0 0.0
        %3418 = vmatpush1.msra.mxu0 0.0
        %3419 = vmatprep.subr.mxu0 0.0
        %3420 = vmatpush1.msra.mxu0 0.0
        %3421 = vmatprep.subr.mxu0 0.0
        %3422 = vmatpush1.msra.mxu0 0.0
        %3423 = vmatprep.subr.mxu0 0.0
        %3424 = vmatpush1.msra.mxu0 0.0
        %3425 = vmatprep.mubr.f32.mxu0 0.0
        %3426 = vmatmul.mubr.f32.gmra.mrb[0].mxu0 %v3350
        %v3427 = vpop.f32.mrb[0].mxu0
        %v3428 = vadd.f32 0.0, %v3427
        %v3429 = vpop.f32.mrb[0].mxu0
        %v3430 = vadd.f32 0.0, %v3429
        %3431 = vmatprep.mubr.f32.mxu0 0.0
        %3432 = vmatmul.mubr.f32.gmra.mrb[0].mxu0 %v3353
        %v3433 = vpop.f32.mrb[0].mxu0
        %v3434 = vadd.f32 0.0, %v3433
        %v3435 = vpop.f32.mrb[0].mxu0
        %v3436 = vadd.f32 0.0, %v3435
        %3437 = vdwg.mxu0
        %v3438 = vadd.f32 %v3320, %v3428
        %v3439 = vadd.f32 %v3321, %v3430
        %v3440 = vadd.f32 %v3322, %v3434
        %v3441 = vadd.f32 %v3323, %v3436
        %v3442 = vld [vmem:[%s8] sm:$0x3]
        %v3444 = vlaneseq
        %v3445 = vshrl.u32 %v3444, 7
        %v3446 = vsub.s32 0, %v3445
        %v3447 = vrot.slane %v3442, %v3446
        %v3448 = vlaneseq
        %v3449 = vshrl.u32 %v3448, 7
        %v3450 = vsub.s32 1, %v3449
        %v3451 = vrot.slane %v3442, %v3450
        %v3454 = vadd.f32 %v3438, %v3447
        %v3455 = vadd.f32 %v3439, %v3451
        %v3456 = vadd.f32 %v3440, %v3447
        %v3457 = vadd.f32 %v3441, %v3451
        %v3458 = vmax.f32 %v3454, 0.0
        %v3459 = vmax.f32 %v3455, 0.0
        %v3460 = vmax.f32 %v3456, 0.0
        %v3461 = vmax.f32 %v3457, 0.0
        %v3462 = vld [vmem:[%s9] sm:$0x1f]
        %vm3463 = vcmask 80896
        %v3465 = vsel %vm3463, %v3462, 0
        %vm3467 = vcmask 1041408
        %v3469 = vsel %vm3467, %v3460, 0
        %v3472 = vsel %vm3467, %v3461, 0
        %3474 = vmatprep.subr.mxu0 %v3459
        %3475 = vmatpush1.msra.mxu0 %v3458
        %3476 = vmatprep.subr.mxu0 %v3472
        %3477 = vmatpush1.msra.mxu0 %v3469
        %3478 = vmatprep.subr.mxu0 0.0
        %3479 = vmatpush1.msra.mxu0 0.0
        %3480 = vmatprep.subr.mxu0 0.0
        %3481 = vmatpush1.msra.mxu0 0.0
        %3482 = vmatprep.subr.mxu0 0.0
        %3483 = vmatpush1.msra.mxu0 0.0
        %3484 = vmatprep.subr.mxu0 0.0
        %3485 = vmatpush1.msra.mxu0 0.0
        %3486 = vmatprep.subr.mxu0 0.0
        %3487 = vmatpush1.msra.mxu0 0.0
        %3488 = vmatprep.subr.mxu0 0.0
        %3489 = vmatpush1.msra.mxu0 0.0
        %3490 = vmatprep.subr.mxu0 0.0
        %3491 = vmatpush1.msra.mxu0 0.0
        %3492 = vmatprep.subr.mxu0 0.0
        %3493 = vmatpush1.msra.mxu0 0.0
        %3494 = vmatprep.subr.mxu0 0.0
        %3495 = vmatpush1.msra.mxu0 0.0
        %3496 = vmatprep.subr.mxu0 0.0
        %3497 = vmatpush1.msra.mxu0 0.0
        %3498 = vmatprep.subr.mxu0 0.0
        %3499 = vmatpush1.msra.mxu0 0.0
        %3500 = vmatprep.subr.mxu0 0.0
        %3501 = vmatpush1.msra.mxu0 0.0
        %3502 = vmatprep.subr.mxu0 0.0
        %3503 = vmatpush1.msra.mxu0 0.0
        %3504 = vmatprep.subr.mxu0 0.0
        %3505 = vmatpush1.msra.mxu0 0.0
        %3506 = vmatprep.subr.mxu0 0.0
        %3507 = vmatpush1.msra.mxu0 0.0
        %3508 = vmatprep.subr.mxu0 0.0
        %3509 = vmatpush1.msra.mxu0 0.0
        %3510 = vmatprep.subr.mxu0 0.0
        %3511 = vmatpush1.msra.mxu0 0.0
        %3512 = vmatprep.subr.mxu0 0.0
        %3513 = vmatpush1.msra.mxu0 0.0
        %3514 = vmatprep.subr.mxu0 0.0
        %3515 = vmatpush1.msra.mxu0 0.0
        %3516 = vmatprep.subr.mxu0 0.0
        %3517 = vmatpush1.msra.mxu0 0.0
        %3518 = vmatprep.subr.mxu0 0.0
        %3519 = vmatpush1.msra.mxu0 0.0
        %3520 = vmatprep.subr.mxu0 0.0
        %3521 = vmatpush1.msra.mxu0 0.0
        %3522 = vmatprep.subr.mxu0 0.0
        %3523 = vmatpush1.msra.mxu0 0.0
        %3524 = vmatprep.subr.mxu0 0.0
        %3525 = vmatpush1.msra.mxu0 0.0
        %3526 = vmatprep.subr.mxu0 0.0
        %3527 = vmatpush1.msra.mxu0 0.0
        %3528 = vmatprep.subr.mxu0 0.0
        %3529 = vmatpush1.msra.mxu0 0.0
        %3530 = vmatprep.subr.mxu0 0.0
        %3531 = vmatpush1.msra.mxu0 0.0
        %3532 = vmatprep.subr.mxu0 0.0
        %3533 = vmatpush1.msra.mxu0 0.0
        %3534 = vmatprep.subr.mxu0 0.0
        %3535 = vmatpush1.msra.mxu0 0.0
        %3536 = vmatprep.subr.mxu0 0.0
        %3537 = vmatpush1.msra.mxu0 0.0
        %3538 = vmatprep.mubr.f32.mxu0 0.0
        %3539 = vmatmul.mubr.f32.gmra.mrb[0].mxu0 %v3465
        %v3540 = vpop.f32.mrb[0].mxu0
        %v3541 = vadd.f32 0.0, %v3540
        %v3542 = vpop.f32.mrb[0].mxu0
        %v3543 = vadd.f32 0.0, %v3542
        %3544 = vdwg.mxu0
        %v3545 = vld [vmem:[%s10] sm:$0x1f]
        %v3547 = vsel %vm3463, %v3545, 0
        %3549 = vmatprep.subr.mxu0 %v3459
        %3550 = vmatpush1.msra.mxu0 %v3458
        %3551 = vmatprep.subr.mxu0 %v3472
        %3552 = vmatpush1.msra.mxu0 %v3469
        %3553 = vmatprep.subr.mxu0 0.0
        %3554 = vmatpush1.msra.mxu0 0.0
        %3555 = vmatprep.subr.mxu0 0.0
        %3556 = vmatpush1.msra.mxu0 0.0
        %3557 = vmatprep.subr.mxu0 0.0
        %3558 = vmatpush1.msra.mxu0 0.0
        %3559 = vmatprep.subr.mxu0 0.0
        %3560 = vmatpush1.msra.mxu0 0.0
        %3561 = vmatprep.subr.mxu0 0.0
        %3562 = vmatpush1.msra.mxu0 0.0
        %3563 = vmatprep.subr.mxu0 0.0
        %3564 = vmatpush1.msra.mxu0 0.0
        %3565 = vmatprep.subr.mxu0 0.0
        %3566 = vmatpush1.msra.mxu0 0.0
        %3567 = vmatprep.subr.mxu0 0.0
        %3568 = vmatpush1.msra.mxu0 0.0
        %3569 = vmatprep.subr.mxu0 0.0
        %3570 = vmatpush1.msra.mxu0 0.0
        %3571 = vmatprep.subr.mxu0 0.0
        %3572 = vmatpush1.msra.mxu0 0.0
        %3573 = vmatprep.subr.mxu0 0.0
        %3574 = vmatpush1.msra.mxu0 0.0
        %3575 = vmatprep.subr.mxu0 0.0
        %3576 = vmatpush1.msra.mxu0 0.0
        %3577 = vmatprep.subr.mxu0 0.0
        %3578 = vmatpush1.msra.mxu0 0.0
        %3579 = vmatprep.subr.mxu0 0.0
        %3580 = vmatpush1.msra.mxu0 0.0
        %3581 = vmatprep.subr.mxu0 0.0
        %3582 = vmatpush1.msra.mxu0 0.0
        %3583 = vmatprep.subr.mxu0 0.0
        %3584 = vmatpush1.msra.mxu0 0.0
        %3585 = vmatprep.subr.mxu0 0.0
        %3586 = vmatpush1.msra.mxu0 0.0
        %3587 = vmatprep.subr.mxu0 0.0
        %3588 = vmatpush1.msra.mxu0 0.0
        %3589 = vmatprep.subr.mxu0 0.0
        %3590 = vmatpush1.msra.mxu0 0.0
        %3591 = vmatprep.subr.mxu0 0.0
        %3592 = vmatpush1.msra.mxu0 0.0
        %3593 = vmatprep.subr.mxu0 0.0
        %3594 = vmatpush1.msra.mxu0 0.0
        %3595 = vmatprep.subr.mxu0 0.0
        %3596 = vmatpush1.msra.mxu0 0.0
        %3597 = vmatprep.subr.mxu0 0.0
        %3598 = vmatpush1.msra.mxu0 0.0
        %3599 = vmatprep.subr.mxu0 0.0
        %3600 = vmatpush1.msra.mxu0 0.0
        %3601 = vmatprep.subr.mxu0 0.0
        %3602 = vmatpush1.msra.mxu0 0.0
        %3603 = vmatprep.subr.mxu0 0.0
        %3604 = vmatpush1.msra.mxu0 0.0
        %3605 = vmatprep.subr.mxu0 0.0
        %3606 = vmatpush1.msra.mxu0 0.0
        %3607 = vmatprep.subr.mxu0 0.0
        %3608 = vmatpush1.msra.mxu0 0.0
        %3609 = vmatprep.subr.mxu0 0.0
        %3610 = vmatpush1.msra.mxu0 0.0
        %3611 = vmatprep.subr.mxu0 0.0
        %3612 = vmatpush1.msra.mxu0 0.0
        %3613 = vmatprep.mubr.f32.mxu0 0.0
        %3614 = vmatmul.mubr.f32.gmra.mrb[0].mxu0 %v3547
        %v3615 = vpop.f32.mrb[0].mxu0
        %v3616 = vadd.f32 0.0, %v3615
        %v3617 = vpop.f32.mrb[0].mxu0
        %v3618 = vadd.f32 0.0, %v3617
        %3619 = vdwg.mxu0
        %v3620 = vmax.f32 %v3541, %v3616
        %v3621 = vmax.f32 %v3543, %v3618
        %v3622 = vld [vmem:[#allocation4] sm:$0xff]
        %v3623 = vld [vmem:[#allocation4 + $0x8] sm:$0xff]
        %v3624 = vld [vmem:[#allocation4 + $0x10] sm:$0xff]
        %v3625 = vld [vmem:[#allocation4 + $0x18] sm:$0xff]
        %v3626 = vld [vmem:[#allocation4 + $0x20] sm:$0xff]
        %v3627 = vld [vmem:[#allocation4 + $0x28] sm:$0xff]
        %v3628 = vld [vmem:[#allocation4 + $0x30] sm:$0xff]
        %v3629 = vld [vmem:[#allocation4 + $0x38] sm:$0xff]
        %v3630 = vld [vmem:[#allocation4 + $0x40] sm:$0xff]
        %v3631 = vld [vmem:[#allocation4 + $0x48] sm:$0xff]
        %v3632 = vld [vmem:[#allocation4 + $0x50] sm:$0xff]
        %v3633 = vld [vmem:[#allocation4 + $0x58] sm:$0xff]
        %v3634 = vld [vmem:[#allocation4 + $0x60] sm:$0xff]
        %v3635 = vld [vmem:[#allocation4 + $0x68] sm:$0xff]
        %v3636 = vld [vmem:[#allocation4 + $0x70] sm:$0xff]
        %v3637 = vld [vmem:[#allocation4 + $0x78] sm:$0xff]
        %v3638 = vld [vmem:[#allocation4 + $0x80] sm:$0xff]
        %v3639 = vld [vmem:[#allocation4 + $0x88] sm:$0xff]
        %v3640 = vld [vmem:[#allocation4 + $0x90] sm:$0xff]
        %v3641 = vld [vmem:[#allocation4 + $0x98] sm:$0xff]
        %v3643 = vsel %vm656, %v3621, 0
        %3645 = vmatprep.subr.mxu0 0.0
        %3646 = vmatpush1.msra.mxu0 %v3622
        %3647 = vmatprep.subr.mxu0 0.0
        %3648 = vmatpush1.msra.mxu0 %v3623
        %3649 = vmatprep.subr.mxu0 0.0
        %3650 = vmatpush1.msra.mxu0 %v3624
        %3651 = vmatprep.subr.mxu0 0.0
        %3652 = vmatpush1.msra.mxu0 %v3625
        %3653 = vmatprep.subr.mxu0 0.0
        %3654 = vmatpush1.msra.mxu0 %v3626
        %3655 = vmatprep.subr.mxu0 0.0
        %3656 = vmatpush1.msra.mxu0 %v3627
        %3657 = vmatprep.subr.mxu0 0.0
        %3658 = vmatpush1.msra.mxu0 %v3628
        %3659 = vmatprep.subr.mxu0 0.0
        %3660 = vmatpush1.msra.mxu0 %v3629
        %3661 = vmatprep.subr.mxu0 0.0
        %3662 = vmatpush1.msra.mxu0 %v3630
        %3663 = vmatprep.subr.mxu0 0.0
        %3664 = vmatpush1.msra.mxu0 %v3631
        %3665 = vmatprep.subr.mxu0 0.0
        %3666 = vmatpush1.msra.mxu0 %v3632
        %3667 = vmatprep.subr.mxu0 0.0
        %3668 = vmatpush1.msra.mxu0 %v3633
        %3669 = vmatprep.subr.mxu0 0.0
        %3670 = vmatpush1.msra.mxu0 %v3634
        %3671 = vmatprep.subr.mxu0 0.0
        %3672 = vmatpush1.msra.mxu0 %v3635
        %3673 = vmatprep.subr.mxu0 0.0
        %3674 = vmatpush1.msra.mxu0 %v3636
        %3675 = vmatprep.subr.mxu0 0.0
        %3676 = vmatpush1.msra.mxu0 %v3637
        %3677 = vmatprep.subr.mxu0 0.0
        %3678 = vmatpush1.msra.mxu0 %v3638
        %3679 = vmatprep.subr.mxu0 0.0
        %3680 = vmatpush1.msra.mxu0 %v3639
        %3681 = vmatprep.subr.mxu0 0.0
        %3682 = vmatpush1.msra.mxu0 %v3640
        %3683 = vmatprep.subr.mxu0 0.0
        %3684 = vmatpush1.msra.mxu0 %v3641
        %3685 = vmatprep.subr.mxu0 0.0
        %3686 = vmatpush1.msra.mxu0 0.0
        %3687 = vmatprep.subr.mxu0 0.0
        %3688 = vmatpush1.msra.mxu0 0.0
        %3689 = vmatprep.subr.mxu0 0.0
        %3690 = vmatpush1.msra.mxu0 0.0
        %3691 = vmatprep.subr.mxu0 0.0
        %3692 = vmatpush1.msra.mxu0 0.0
        %3693 = vmatprep.subr.mxu0 0.0
        %3694 = vmatpush1.msra.mxu0 0.0
        %3695 = vmatprep.subr.mxu0 0.0
        %3696 = vmatpush1.msra.mxu0 0.0
        %3697 = vmatprep.subr.mxu0 0.0
        %3698 = vmatpush1.msra.mxu0 0.0
        %3699 = vmatprep.subr.mxu0 0.0
        %3700 = vmatpush1.msra.mxu0 0.0
        %3701 = vmatprep.subr.mxu0 0.0
        %3702 = vmatpush1.msra.mxu0 0.0
        %3703 = vmatprep.subr.mxu0 0.0
        %3704 = vmatpush1.msra.mxu0 0.0
        %3705 = vmatprep.subr.mxu0 0.0
        %3706 = vmatpush1.msra.mxu0 0.0
        %3707 = vmatprep.subr.mxu0 0.0
        %3708 = vmatpush1.msra.mxu0 0.0
        %3709 = vmatprep.mubr.f32.mxu0 %v3643
        %3710 = vmatmul.mubr.f32.gmra.mrb[0].mxu0 %v3620
        %v3711 = vpop.f32.mrb[0].mxu0
        %v3712 = vadd.f32 0.0, %v3711
        %v3713 = vpop.f32.mrb[0].mxu0
        %3714 = vdwg.mxu0
        %v3715 = vld [vmem:[#allocation7] sm:$0xff]
        %v3716 = vld [vmem:[#allocation7 + $0x8] sm:$0xff]
        %v3717 = vld [vmem:[#allocation7 + $0x10] sm:$0xff]
        %v3718 = vld [vmem:[#allocation7 + $0x18] sm:$0xff]
        %v3719 = vld [vmem:[#allocation7 + $0x20] sm:$0xff]
        %v3720 = vld [vmem:[#allocation7 + $0x28] sm:$0xff]
        %v3721 = vld [vmem:[#allocation7 + $0x30] sm:$0xff]
        %v3722 = vld [vmem:[#allocation7 + $0x38] sm:$0xff]
        %v3723 = vld [vmem:[#allocation7 + $0x40] sm:$0xff]
        %v3724 = vld [vmem:[#allocation7 + $0x48] sm:$0xff]
        %v3725 = vld [vmem:[#allocation7 + $0x50] sm:$0xff]
        %v3726 = vld [vmem:[#allocation7 + $0x58] sm:$0xff]
        %v3727 = vld [vmem:[#allocation7 + $0x60] sm:$0xff]
        %v3728 = vld [vmem:[#allocation7 + $0x68] sm:$0xff]
        %v3729 = vld [vmem:[#allocation7 + $0x70] sm:$0xff]
        %v3730 = vld [vmem:[#allocation7 + $0x78] sm:$0xff]
        %v3731 = vld [vmem:[#allocation7 + $0x80] sm:$0xff]
        %v3732 = vld [vmem:[#allocation7 + $0x88] sm:$0xff]
        %v3733 = vld [vmem:[#allocation7 + $0x90] sm:$0xff]
        %v3734 = vld [vmem:[#allocation7 + $0x98] sm:$0xff]
        %3735 = vmatprep.subr.mxu0 0.0
        %3736 = vmatpush1.msra.mxu0 %v3715
        %3737 = vmatprep.subr.mxu0 0.0
        %3738 = vmatpush1.msra.mxu0 %v3716
        %3739 = vmatprep.subr.mxu0 0.0
        %3740 = vmatpush1.msra.mxu0 %v3717
        %3741 = vmatprep.subr.mxu0 0.0
        %3742 = vmatpush1.msra.mxu0 %v3718
        %3743 = vmatprep.subr.mxu0 0.0
        %3744 = vmatpush1.msra.mxu0 %v3719
        %3745 = vmatprep.subr.mxu0 0.0
        %3746 = vmatpush1.msra.mxu0 %v3720
        %3747 = vmatprep.subr.mxu0 0.0
        %3748 = vmatpush1.msra.mxu0 %v3721
        %3749 = vmatprep.subr.mxu0 0.0
        %3750 = vmatpush1.msra.mxu0 %v3722
        %3751 = vmatprep.subr.mxu0 0.0
        %3752 = vmatpush1.msra.mxu0 %v3723
        %3753 = vmatprep.subr.mxu0 0.0
        %3754 = vmatpush1.msra.mxu0 %v3724
        %3755 = vmatprep.subr.mxu0 0.0
        %3756 = vmatpush1.msra.mxu0 %v3725
        %3757 = vmatprep.subr.mxu0 0.0
        %3758 = vmatpush1.msra.mxu0 %v3726
        %3759 = vmatprep.subr.mxu0 0.0
        %3760 = vmatpush1.msra.mxu0 %v3727
        %3761 = vmatprep.subr.mxu0 0.0
        %3762 = vmatpush1.msra.mxu0 %v3728
        %3763 = vmatprep.subr.mxu0 0.0
        %3764 = vmatpush1.msra.mxu0 %v3729
        %3765 = vmatprep.subr.mxu0 0.0
        %3766 = vmatpush1.msra.mxu0 %v3730
        %3767 = vmatprep.subr.mxu0 0.0
        %3768 = vmatpush1.msra.mxu0 %v3731
        %3769 = vmatprep.subr.mxu0 0.0
        %3770 = vmatpush1.msra.mxu0 %v3732
        %3771 = vmatprep.subr.mxu0 0.0
        %3772 = vmatpush1.msra.mxu0 %v3733
        %3773 = vmatprep.subr.mxu0 0.0
        %3774 = vmatpush1.msra.mxu0 %v3734
        %3775 = vmatprep.subr.mxu0 0.0
        %3776 = vmatpush1.msra.mxu0 0.0
        %3777 = vmatprep.subr.mxu0 0.0
        %3778 = vmatpush1.msra.mxu0 0.0
        %3779 = vmatprep.subr.mxu0 0.0
        %3780 = vmatpush1.msra.mxu0 0.0
        %3781 = vmatprep.subr.mxu0 0.0
        %3782 = vmatpush1.msra.mxu0 0.0
        %3783 = vmatprep.subr.mxu0 0.0
        %3784 = vmatpush1.msra.mxu0 0.0
        %3785 = vmatprep.subr.mxu0 0.0
        %3786 = vmatpush1.msra.mxu0 0.0
        %3787 = vmatprep.subr.mxu0 0.0
        %3788 = vmatpush1.msra.mxu0 0.0
        %3789 = vmatprep.subr.mxu0 0.0
        %3790 = vmatpush1.msra.mxu0 0.0
        %3791 = vmatprep.subr.mxu0 0.0
        %3792 = vmatpush1.msra.mxu0 0.0
        %3793 = vmatprep.subr.mxu0 0.0
        %3794 = vmatpush1.msra.mxu0 0.0
        %3795 = vmatprep.subr.mxu0 0.0
        %3796 = vmatpush1.msra.mxu0 0.0
        %3797 = vmatprep.subr.mxu0 0.0
        %3798 = vmatpush1.msra.mxu0 0.0
        %3799 = vmatprep.mubr.f32.mxu0 %v3643
        %3800 = vmatmul.mubr.f32.gmra.mrb[0].mxu0 %v3620
        %v3801 = vpop.f32.mrb[0].mxu0
        %v3802 = vadd.f32 0.0, %v3801
        %v3803 = vpop.f32.mrb[0].mxu0
        %3804 = vdwg.mxu0
        %v3805 = vmax.f32 %v3712, %v3802
        %vm3806 = vcmask 651264
        %3807 = vst.msk [vmem:[#allocation3] sm:$0x1f] %vm3806, %v3805
        %v3808 = vld [vmem:[#allocation3] sm:$0x1]
        %v3809 = vld [vmem:[%s13] sm:$0xff]
        %v3810 = vld [vmem:[%s13 + $0x8] sm:$0xff]
        %v3811 = vld [vmem:[%s13 + $0x10] sm:$0xff]
        %v3812 = vld [vmem:[%s13 + $0x18] sm:$0xff]
        %v3813 = vld [vmem:[%s13 + $0x20] sm:$0xff]
        %v3814 = vld [vmem:[%s13 + $0x28] sm:$0xff]
        %v3815 = vld [vmem:[%s13 + $0x30] sm:$0xff]
        %v3816 = vld [vmem:[%s13 + $0x38] sm:$0xff]
        %v3817 = vld [vmem:[%s13 + $0x40] sm:$0xff]
        %v3818 = vld [vmem:[%s13 + $0x48] sm:$0xff]
        %v3819 = vld [vmem:[#allocation3 + $0x1] sm:$0x1]
        %s3820 = scalar_lea.vmem %s13, 80
        %v3821 = vld [vmem:[%s3820] sm:$0xff]
        %v3822 = vld [vmem:[%s3820 + $0x8] sm:$0xff]
        %v3823 = vld [vmem:[%s3820 + $0x10] sm:$0xff]
        %v3824 = vld [vmem:[%s3820 + $0x18] sm:$0xff]
        %v3825 = vld [vmem:[%s3820 + $0x20] sm:$0xff]
        %v3826 = vld [vmem:[%s3820 + $0x28] sm:$0xff]
        %v3827 = vld [vmem:[%s3820 + $0x30] sm:$0xff]
        %v3828 = vld [vmem:[%s3820 + $0x38] sm:$0xff]
        %v3829 = vld [vmem:[%s3820 + $0x40] sm:$0xff]
        %v3830 = vld [vmem:[%s3820 + $0x48] sm:$0xff]
        %vm3831 = vcmask 654336
        %v3833 = vsel %vm3831, %v3819, 0
        %3835 = vmatprep.subr.mxu0 0.0
        %3836 = vmatpush1.msra.mxu0 %v3821
        %3837 = vmatprep.subr.mxu0 0.0
        %3838 = vmatpush1.msra.mxu0 %v3822
        %3839 = vmatprep.subr.mxu0 0.0
        %3840 = vmatpush1.msra.mxu0 %v3823
        %3841 = vmatprep.subr.mxu0 0.0
        %3842 = vmatpush1.msra.mxu0 %v3824
        %3843 = vmatprep.subr.mxu0 0.0
        %3844 = vmatpush1.msra.mxu0 %v3825
        %3845 = vmatprep.subr.mxu0 0.0
        %3846 = vmatpush1.msra.mxu0 %v3826
        %3847 = vmatprep.subr.mxu0 0.0
        %3848 = vmatpush1.msra.mxu0 %v3827
        %3849 = vmatprep.subr.mxu0 0.0
        %3850 = vmatpush1.msra.mxu0 %v3828
        %3851 = vmatprep.subr.mxu0 0.0
        %3852 = vmatpush1.msra.mxu0 %v3829
        %3853 = vmatprep.subr.mxu0 0.0
        %3854 = vmatpush1.msra.mxu0 %v3830
        %3855 = vmatprep.subr.mxu0 0.0
        %3856 = vmatpush1.msra.mxu0 0.0
        %3857 = vmatprep.subr.mxu0 0.0
        %3858 = vmatpush1.msra.mxu0 0.0
        %3859 = vmatprep.subr.mxu0 0.0
        %3860 = vmatpush1.msra.mxu0 0.0
        %3861 = vmatprep.subr.mxu0 0.0
        %3862 = vmatpush1.msra.mxu0 0.0
        %3863 = vmatprep.subr.mxu0 0.0
        %3864 = vmatpush1.msra.mxu0 0.0
        %3865 = vmatprep.subr.mxu0 0.0
        %3866 = vmatpush1.msra.mxu0 0.0
        %3867 = vmatprep.subr.mxu0 0.0
        %3868 = vmatpush1.msra.mxu0 0.0
        %3869 = vmatprep.subr.mxu0 0.0
        %3870 = vmatpush1.msra.mxu0 0.0
        %3871 = vmatprep.subr.mxu0 0.0
        %3872 = vmatpush1.msra.mxu0 0.0
        %3873 = vmatprep.subr.mxu0 0.0
        %3874 = vmatpush1.msra.mxu0 0.0
        %3875 = vmatprep.subr.mxu0 0.0
        %3876 = vmatpush1.msra.mxu0 0.0
        %3877 = vmatprep.subr.mxu0 0.0
        %3878 = vmatpush1.msra.mxu0 0.0
        %3879 = vmatprep.subr.mxu0 0.0
        %3880 = vmatpush1.msra.mxu0 0.0
        %3881 = vmatprep.subr.mxu0 0.0
        %3882 = vmatpush1.msra.mxu0 0.0
        %3883 = vmatprep.subr.mxu0 0.0
        %3884 = vmatpush1.msra.mxu0 0.0
        %3885 = vmatprep.subr.mxu0 0.0
        %3886 = vmatpush1.msra.mxu0 0.0
        %3887 = vmatprep.subr.mxu0 0.0
        %3888 = vmatpush1.msra.mxu0 0.0
        %3889 = vmatprep.subr.mxu0 0.0
        %3890 = vmatpush1.msra.mxu0 0.0
        %3891 = vmatprep.subr.mxu0 0.0
        %3892 = vmatpush1.msra.mxu0 0.0
        %3893 = vmatprep.subr.mxu0 0.0
        %3894 = vmatpush1.msra.mxu0 0.0
        %3895 = vmatprep.subr.mxu0 0.0
        %3896 = vmatpush1.msra.mxu0 0.0
        %3897 = vmatprep.subr.mxu0 0.0
        %3898 = vmatpush1.msra.mxu0 0.0
        %3899 = vmatprep.mubr.f32.mxu0 0.0
        %3900 = vmatmul.mubr.f32.gmra.mrb[0].mxu0 %v3833
        %v3901 = vpop.f32.mrb[0].mxu0
        %v3902 = vadd.f32 0.0, %v3901
        %v3903 = vpop.f32.mrb[0].mxu0
        %3904 = vdwg.mxu0
        %v3906 = vsel %vm3831, %v3808, 0
        %3908 = vmatprep.subr.mxu0 0.0
        %3909 = vmatpush1.msra.mxu0 %v3809
        %3910 = vmatprep.subr.mxu0 0.0
        %3911 = vmatpush1.msra.mxu0 %v3810
        %3912 = vmatprep.subr.mxu0 0.0
        %3913 = vmatpush1.msra.mxu0 %v3811
        %3914 = vmatprep.subr.mxu0 0.0
        %3915 = vmatpush1.msra.mxu0 %v3812
        %3916 = vmatprep.subr.mxu0 0.0
        %3917 = vmatpush1.msra.mxu0 %v3813
        %3918 = vmatprep.subr.mxu0 0.0
        %3919 = vmatpush1.msra.mxu0 %v3814
        %3920 = vmatprep.subr.mxu0 0.0
        %3921 = vmatpush1.msra.mxu0 %v3815
        %3922 = vmatprep.subr.mxu0 0.0
        %3923 = vmatpush1.msra.mxu0 %v3816
        %3924 = vmatprep.subr.mxu0 0.0
        %3925 = vmatpush1.msra.mxu0 %v3817
        %3926 = vmatprep.subr.mxu0 0.0
        %3927 = vmatpush1.msra.mxu0 %v3818
        %3928 = vmatprep.subr.mxu0 0.0
        %3929 = vmatpush1.msra.mxu0 0.0
        %3930 = vmatprep.subr.mxu0 0.0
        %3931 = vmatpush1.msra.mxu0 0.0
        %3932 = vmatprep.subr.mxu0 0.0
        %3933 = vmatpush1.msra.mxu0 0.0
        %3934 = vmatprep.subr.mxu0 0.0
        %3935 = vmatpush1.msra.mxu0 0.0
        %3936 = vmatprep.subr.mxu0 0.0
        %3937 = vmatpush1.msra.mxu0 0.0
        %3938 = vmatprep.subr.mxu0 0.0
        %3939 = vmatpush1.msra.mxu0 0.0
        %3940 = vmatprep.subr.mxu0 0.0
        %3941 = vmatpush1.msra.mxu0 0.0
        %3942 = vmatprep.subr.mxu0 0.0
        %3943 = vmatpush1.msra.mxu0 0.0
        %3944 = vmatprep.subr.mxu0 0.0
        %3945 = vmatpush1.msra.mxu0 0.0
        %3946 = vmatprep.subr.mxu0 0.0
        %3947 = vmatpush1.msra.mxu0 0.0
        %3948 = vmatprep.subr.mxu0 0.0
        %3949 = vmatpush1.msra.mxu0 0.0
        %3950 = vmatprep.subr.mxu0 0.0
        %3951 = vmatpush1.msra.mxu0 0.0
        %3952 = vmatprep.subr.mxu0 0.0
        %3953 = vmatpush1.msra.mxu0 0.0
        %3954 = vmatprep.subr.mxu0 0.0
        %3955 = vmatpush1.msra.mxu0 0.0
        %3956 = vmatprep.subr.mxu0 0.0
        %3957 = vmatpush1.msra.mxu0 0.0
        %3958 = vmatprep.subr.mxu0 0.0
        %3959 = vmatpush1.msra.mxu0 0.0
        %3960 = vmatprep.subr.mxu0 0.0
        %3961 = vmatpush1.msra.mxu0 0.0
        %3962 = vmatprep.subr.mxu0 0.0
        %3963 = vmatpush1.msra.mxu0 0.0
        %3964 = vmatprep.subr.mxu0 0.0
        %3965 = vmatpush1.msra.mxu0 0.0
        %3966 = vmatprep.subr.mxu0 0.0
        %3967 = vmatpush1.msra.mxu0 0.0
        %3968 = vmatprep.subr.mxu0 0.0
        %3969 = vmatpush1.msra.mxu0 0.0
        %3970 = vmatprep.subr.mxu0 0.0
        %3971 = vmatpush1.msra.mxu0 0.0
        %3972 = vmatprep.mubr.f32.mxu0 0.0
        %3973 = vmatmul.mubr.f32.gmra.mrb[0].mxu0 %v3906
        %v3974 = vpop.f32.mrb[0].mxu0
        %v3975 = vadd.f32 %v3902, %v3974
        %v3976 = vpop.f32.mrb[0].mxu0
        %3977 = vdwg.mxu0
        %v3978 = vld [vmem:[#allocation3 + $0x2] sm:$0x1]
        %s3979 = scalar_lea.vmem %s13, 160
        %v3980 = vld [vmem:[%s3979] sm:$0xff]
        %v3981 = vld [vmem:[%s3979 + $0x8] sm:$0xff]
        %v3982 = vld [vmem:[%s3979 + $0x10] sm:$0xff]
        %v3983 = vld [vmem:[%s3979 + $0x18] sm:$0xff]
        %v3984 = vld [vmem:[%s3979 + $0x20] sm:$0xff]
        %v3985 = vld [vmem:[%s3979 + $0x28] sm:$0xff]
        %v3986 = vld [vmem:[%s3979 + $0x30] sm:$0xff]
        %v3987 = vld [vmem:[%s3979 + $0x38] sm:$0xff]
        %v3988 = vld [vmem:[%s3979 + $0x40] sm:$0xff]
        %v3989 = vld [vmem:[%s3979 + $0x48] sm:$0xff]
        %v3991 = vsel %vm3831, %v3978, 0
        %3993 = vmatprep.subr.mxu0 0.0
        %3994 = vmatpush1.msra.mxu0 %v3980
        %3995 = vmatprep.subr.mxu0 0.0
        %3996 = vmatpush1.msra.mxu0 %v3981
        %3997 = vmatprep.subr.mxu0 0.0
        %3998 = vmatpush1.msra.mxu0 %v3982
        %3999 = vmatprep.subr.mxu0 0.0
        %4000 = vmatpush1.msra.mxu0 %v3983
        %4001 = vmatprep.subr.mxu0 0.0
        %4002 = vmatpush1.msra.mxu0 %v3984
        %4003 = vmatprep.subr.mxu0 0.0
        %4004 = vmatpush1.msra.mxu0 %v3985
        %4005 = vmatprep.subr.mxu0 0.0
        %4006 = vmatpush1.msra.mxu0 %v3986
        %4007 = vmatprep.subr.mxu0 0.0
        %4008 = vmatpush1.msra.mxu0 %v3987
        %4009 = vmatprep.subr.mxu0 0.0
        %4010 = vmatpush1.msra.mxu0 %v3988
        %4011 = vmatprep.subr.mxu0 0.0
        %4012 = vmatpush1.msra.mxu0 %v3989
        %4013 = vmatprep.subr.mxu0 0.0
        %4014 = vmatpush1.msra.mxu0 0.0
        %4015 = vmatprep.subr.mxu0 0.0
        %4016 = vmatpush1.msra.mxu0 0.0
        %4017 = vmatprep.subr.mxu0 0.0
        %4018 = vmatpush1.msra.mxu0 0.0
        %4019 = vmatprep.subr.mxu0 0.0
        %4020 = vmatpush1.msra.mxu0 0.0
        %4021 = vmatprep.subr.mxu0 0.0
        %4022 = vmatpush1.msra.mxu0 0.0
        %4023 = vmatprep.subr.mxu0 0.0
        %4024 = vmatpush1.msra.mxu0 0.0
        %4025 = vmatprep.subr.mxu0 0.0
        %4026 = vmatpush1.msra.mxu0 0.0
        %4027 = vmatprep.subr.mxu0 0.0
        %4028 = vmatpush1.msra.mxu0 0.0
        %4029 = vmatprep.subr.mxu0 0.0
        %4030 = vmatpush1.msra.mxu0 0.0
        %4031 = vmatprep.subr.mxu0 0.0
        %4032 = vmatpush1.msra.mxu0 0.0
        %4033 = vmatprep.subr.mxu0 0.0
        %4034 = vmatpush1.msra.mxu0 0.0
        %4035 = vmatprep.subr.mxu0 0.0
        %4036 = vmatpush1.msra.mxu0 0.0
        %4037 = vmatprep.subr.mxu0 0.0
        %4038 = vmatpush1.msra.mxu0 0.0
        %4039 = vmatprep.subr.mxu0 0.0
        %4040 = vmatpush1.msra.mxu0 0.0
        %4041 = vmatprep.subr.mxu0 0.0
        %4042 = vmatpush1.msra.mxu0 0.0
        %4043 = vmatprep.subr.mxu0 0.0
        %4044 = vmatpush1.msra.mxu0 0.0
        %4045 = vmatprep.subr.mxu0 0.0
        %4046 = vmatpush1.msra.mxu0 0.0
        %4047 = vmatprep.subr.mxu0 0.0
        %4048 = vmatpush1.msra.mxu0 0.0
        %4049 = vmatprep.subr.mxu0 0.0
        %4050 = vmatpush1.msra.mxu0 0.0
        %4051 = vmatprep.subr.mxu0 0.0
        %4052 = vmatpush1.msra.mxu0 0.0
        %4053 = vmatprep.subr.mxu0 0.0
        %4054 = vmatpush1.msra.mxu0 0.0
        %4055 = vmatprep.subr.mxu0 0.0
        %4056 = vmatpush1.msra.mxu0 0.0
        %4057 = vmatprep.mubr.f32.mxu0 0.0
        %4058 = vmatmul.mubr.f32.gmra.mrb[0].mxu0 %v3991
        %v4059 = vpop.f32.mrb[0].mxu0
        %v4060 = vadd.f32 0.0, %v4059
        %v4061 = vpop.f32.mrb[0].mxu0
        %4062 = vdwg.mxu0
        %v4063 = vadd.f32 %v3975, %v4060
        %v4064 = vld [vmem:[#allocation3 + $0x3] sm:$0x1]
        %s4065 = scalar_lea.vmem %s13, 240
        %v4066 = vld [vmem:[%s4065] sm:$0xff]
        %v4067 = vld [vmem:[%s4065 + $0x8] sm:$0xff]
        %v4068 = vld [vmem:[%s4065 + $0x10] sm:$0xff]
        %v4069 = vld [vmem:[%s4065 + $0x18] sm:$0xff]
        %v4070 = vld [vmem:[%s4065 + $0x20] sm:$0xff]
        %v4071 = vld [vmem:[%s4065 + $0x28] sm:$0xff]
        %v4072 = vld [vmem:[%s4065 + $0x30] sm:$0xff]
        %v4073 = vld [vmem:[%s4065 + $0x38] sm:$0xff]
        %v4074 = vld [vmem:[%s4065 + $0x40] sm:$0xff]
        %v4075 = vld [vmem:[%s4065 + $0x48] sm:$0xff]
        %v4077 = vsel %vm3831, %v4064, 0
        %4079 = vmatprep.subr.mxu0 0.0
        %4080 = vmatpush1.msra.mxu0 %v4066
        %4081 = vmatprep.subr.mxu0 0.0
        %4082 = vmatpush1.msra.mxu0 %v4067
        %4083 = vmatprep.subr.mxu0 0.0
        %4084 = vmatpush1.msra.mxu0 %v4068
        %4085 = vmatprep.subr.mxu0 0.0
        %4086 = vmatpush1.msra.mxu0 %v4069
        %4087 = vmatprep.subr.mxu0 0.0
        %4088 = vmatpush1.msra.mxu0 %v4070
        %4089 = vmatprep.subr.mxu0 0.0
        %4090 = vmatpush1.msra.mxu0 %v4071
        %4091 = vmatprep.subr.mxu0 0.0
        %4092 = vmatpush1.msra.mxu0 %v4072
        %4093 = vmatprep.subr.mxu0 0.0
        %4094 = vmatpush1.msra.mxu0 %v4073
        %4095 = vmatprep.subr.mxu0 0.0
        %4096 = vmatpush1.msra.mxu0 %v4074
        %4097 = vmatprep.subr.mxu0 0.0
        %4098 = vmatpush1.msra.mxu0 %v4075
        %4099 = vmatprep.subr.mxu0 0.0
        %4100 = vmatpush1.msra.mxu0 0.0
        %4101 = vmatprep.subr.mxu0 0.0
        %4102 = vmatpush1.msra.mxu0 0.0
        %4103 = vmatprep.subr.mxu0 0.0
        %4104 = vmatpush1.msra.mxu0 0.0
        %4105 = vmatprep.subr.mxu0 0.0
        %4106 = vmatpush1.msra.mxu0 0.0
        %4107 = vmatprep.subr.mxu0 0.0
        %4108 = vmatpush1.msra.mxu0 0.0
        %4109 = vmatprep.subr.mxu0 0.0
        %4110 = vmatpush1.msra.mxu0 0.0
        %4111 = vmatprep.subr.mxu0 0.0
        %4112 = vmatpush1.msra.mxu0 0.0
        %4113 = vmatprep.subr.mxu0 0.0
        %4114 = vmatpush1.msra.mxu0 0.0
        %4115 = vmatprep.subr.mxu0 0.0
        %4116 = vmatpush1.msra.mxu0 0.0
        %4117 = vmatprep.subr.mxu0 0.0
        %4118 = vmatpush1.msra.mxu0 0.0
        %4119 = vmatprep.subr.mxu0 0.0
        %4120 = vmatpush1.msra.mxu0 0.0
        %4121 = vmatprep.subr.mxu0 0.0
        %4122 = vmatpush1.msra.mxu0 0.0
        %4123 = vmatprep.subr.mxu0 0.0
        %4124 = vmatpush1.msra.mxu0 0.0
        %4125 = vmatprep.subr.mxu0 0.0
        %4126 = vmatpush1.msra.mxu0 0.0
        %4127 = vmatprep.subr.mxu0 0.0
        %4128 = vmatpush1.msra.mxu0 0.0
        %4129 = vmatprep.subr.mxu0 0.0
        %4130 = vmatpush1.msra.mxu0 0.0
        %4131 = vmatprep.subr.mxu0 0.0
        %4132 = vmatpush1.msra.mxu0 0.0
        %4133 = vmatprep.subr.mxu0 0.0
        %4134 = vmatpush1.msra.mxu0 0.0
        %4135 = vmatprep.subr.mxu0 0.0
        %4136 = vmatpush1.msra.mxu0 0.0
        %4137 = vmatprep.subr.mxu0 0.0
        %4138 = vmatpush1.msra.mxu0 0.0
        %4139 = vmatprep.subr.mxu0 0.0
        %4140 = vmatpush1.msra.mxu0 0.0
        %4141 = vmatprep.subr.mxu0 0.0
        %4142 = vmatpush1.msra.mxu0 0.0
        %4143 = vmatprep.mubr.f32.mxu0 0.0
        %4144 = vmatmul.mubr.f32.gmra.mrb[0].mxu0 %v4077
        %v4145 = vpop.f32.mrb[0].mxu0
        %v4146 = vadd.f32 0.0, %v4145
        %v4147 = vpop.f32.mrb[0].mxu0
        %4148 = vdwg.mxu0
        %v4149 = vadd.f32 %v4063, %v4146
        %v4150 = vld [vmem:[#allocation3 + $0x4] sm:$0x1]
        %s4151 = scalar_lea.vmem %s13, 320
        %v4152 = vld [vmem:[%s4151] sm:$0xff]
        %v4153 = vld [vmem:[%s4151 + $0x8] sm:$0xff]
        %v4154 = vld [vmem:[%s4151 + $0x10] sm:$0xff]
        %v4155 = vld [vmem:[%s4151 + $0x18] sm:$0xff]
        %v4156 = vld [vmem:[%s4151 + $0x20] sm:$0xff]
        %v4157 = vld [vmem:[%s4151 + $0x28] sm:$0xff]
        %v4158 = vld [vmem:[%s4151 + $0x30] sm:$0xff]
        %v4159 = vld [vmem:[%s4151 + $0x38] sm:$0xff]
        %v4160 = vld [vmem:[%s4151 + $0x40] sm:$0xff]
        %v4161 = vld [vmem:[%s4151 + $0x48] sm:$0xff]
        %v4163 = vsel %vm3831, %v4150, 0
        %4165 = vmatprep.subr.mxu0 0.0
        %4166 = vmatpush1.msra.mxu0 %v4152
        %4167 = vmatprep.subr.mxu0 0.0
        %4168 = vmatpush1.msra.mxu0 %v4153
        %4169 = vmatprep.subr.mxu0 0.0
        %4170 = vmatpush1.msra.mxu0 %v4154
        %4171 = vmatprep.subr.mxu0 0.0
        %4172 = vmatpush1.msra.mxu0 %v4155
        %4173 = vmatprep.subr.mxu0 0.0
        %4174 = vmatpush1.msra.mxu0 %v4156
        %4175 = vmatprep.subr.mxu0 0.0
        %4176 = vmatpush1.msra.mxu0 %v4157
        %4177 = vmatprep.subr.mxu0 0.0
        %4178 = vmatpush1.msra.mxu0 %v4158
        %4179 = vmatprep.subr.mxu0 0.0
        %4180 = vmatpush1.msra.mxu0 %v4159
        %4181 = vmatprep.subr.mxu0 0.0
        %4182 = vmatpush1.msra.mxu0 %v4160
        %4183 = vmatprep.subr.mxu0 0.0
        %4184 = vmatpush1.msra.mxu0 %v4161
        %4185 = vmatprep.subr.mxu0 0.0
        %4186 = vmatpush1.msra.mxu0 0.0
        %4187 = vmatprep.subr.mxu0 0.0
        %4188 = vmatpush1.msra.mxu0 0.0
        %4189 = vmatprep.subr.mxu0 0.0
        %4190 = vmatpush1.msra.mxu0 0.0
        %4191 = vmatprep.subr.mxu0 0.0
        %4192 = vmatpush1.msra.mxu0 0.0
        %4193 = vmatprep.subr.mxu0 0.0
        %4194 = vmatpush1.msra.mxu0 0.0
        %4195 = vmatprep.subr.mxu0 0.0
        %4196 = vmatpush1.msra.mxu0 0.0
        %4197 = vmatprep.subr.mxu0 0.0
        %4198 = vmatpush1.msra.mxu0 0.0
        %4199 = vmatprep.subr.mxu0 0.0
        %4200 = vmatpush1.msra.mxu0 0.0
        %4201 = vmatprep.subr.mxu0 0.0
        %4202 = vmatpush1.msra.mxu0 0.0
        %4203 = vmatprep.subr.mxu0 0.0
        %4204 = vmatpush1.msra.mxu0 0.0
        %4205 = vmatprep.subr.mxu0 0.0
        %4206 = vmatpush1.msra.mxu0 0.0
        %4207 = vmatprep.subr.mxu0 0.0
        %4208 = vmatpush1.msra.mxu0 0.0
        %4209 = vmatprep.subr.mxu0 0.0
        %4210 = vmatpush1.msra.mxu0 0.0
        %4211 = vmatprep.subr.mxu0 0.0
        %4212 = vmatpush1.msra.mxu0 0.0
        %4213 = vmatprep.subr.mxu0 0.0
        %4214 = vmatpush1.msra.mxu0 0.0
        %4215 = vmatprep.subr.mxu0 0.0
        %4216 = vmatpush1.msra.mxu0 0.0
        %4217 = vmatprep.subr.mxu0 0.0
        %4218 = vmatpush1.msra.mxu0 0.0
        %4219 = vmatprep.subr.mxu0 0.0
        %4220 = vmatpush1.msra.mxu0 0.0
        %4221 = vmatprep.subr.mxu0 0.0
        %4222 = vmatpush1.msra.mxu0 0.0
        %4223 = vmatprep.subr.mxu0 0.0
        %4224 = vmatpush1.msra.mxu0 0.0
        %4225 = vmatprep.subr.mxu0 0.0
        %4226 = vmatpush1.msra.mxu0 0.0
        %4227 = vmatprep.subr.mxu0 0.0
        %4228 = vmatpush1.msra.mxu0 0.0
        %4229 = vmatprep.mubr.f32.mxu0 0.0
        %4230 = vmatmul.mubr.f32.gmra.mrb[0].mxu0 %v4163
        %v4231 = vpop.f32.mrb[0].mxu0
        %v4232 = vadd.f32 0.0, %v4231
        %v4233 = vpop.f32.mrb[0].mxu0
        %4234 = vdwg.mxu0
        %v4235 = vadd.f32 %v4149, %v4232
        %v4236 = vld [vmem:[%s14] sm:$0x1]
        %v4237 = vadd.f32 %v4235, %v4236
        %v4238 = vmax.f32 %v4237, 0.0
        %v4239 = vld [vmem:[%s15] sm:$0xff]
        %v4240 = vld [vmem:[%s15 + $0x8] sm:$0xff]
        %v4241 = vld [vmem:[%s15 + $0x10] sm:$0xff]
        %v4242 = vld [vmem:[%s15 + $0x18] sm:$0xff]
        %v4243 = vld [vmem:[%s15 + $0x20] sm:$0xff]
        %v4244 = vld [vmem:[%s15 + $0x28] sm:$0xff]
        %v4245 = vld [vmem:[%s15 + $0x30] sm:$0xff]
        %v4246 = vld [vmem:[%s15 + $0x38] sm:$0xff]
        %v4247 = vld [vmem:[%s15 + $0x40] sm:$0xff]
        %v4248 = vld [vmem:[%s15 + $0x48] sm:$0xff]
        %v4249 = vld [vmem:[%s15 + $0x50] sm:$0xff]
        %v4250 = vld [vmem:[%s15 + $0x58] sm:$0xff]
        %v4251 = vld [vmem:[%s15 + $0x60] sm:$0xff]
        %v4252 = vld [vmem:[%s15 + $0x68] sm:$0xff]
        %v4253 = vld [vmem:[%s15 + $0x70] sm:$0xff]
        %v4254 = vld [vmem:[%s16] sm:$0x1]
        %vm4255 = vcmask 982016
        %v4257 = vsel %vm4255, %v4238, 0
        %4259 = vmatprep.subr.mxu0 0.0
        %4260 = vmatpush1.msra.mxu0 %v4239
        %4261 = vmatprep.subr.mxu0 0.0
        %4262 = vmatpush1.msra.mxu0 %v4240
        %4263 = vmatprep.subr.mxu0 0.0
        %4264 = vmatpush1.msra.mxu0 %v4241
        %4265 = vmatprep.subr.mxu0 0.0
        %4266 = vmatpush1.msra.mxu0 %v4242
        %4267 = vmatprep.subr.mxu0 0.0
        %4268 = vmatpush1.msra.mxu0 %v4243
        %4269 = vmatprep.subr.mxu0 0.0
        %4270 = vmatpush1.msra.mxu0 %v4244
        %4271 = vmatprep.subr.mxu0 0.0
        %4272 = vmatpush1.msra.mxu0 %v4245
        %4273 = vmatprep.subr.mxu0 0.0
        %4274 = vmatpush1.msra.mxu0 %v4246
        %4275 = vmatprep.subr.mxu0 0.0
        %4276 = vmatpush1.msra.mxu0 %v4247
        %4277 = vmatprep.subr.mxu0 0.0
        %4278 = vmatpush1.msra.mxu0 %v4248
        %4279 = vmatprep.subr.mxu0 0.0
        %4280 = vmatpush1.msra.mxu0 %v4249
        %4281 = vmatprep.subr.mxu0 0.0
        %4282 = vmatpush1.msra.mxu0 %v4250
        %4283 = vmatprep.subr.mxu0 0.0
        %4284 = vmatpush1.msra.mxu0 %v4251
        %4285 = vmatprep.subr.mxu0 0.0
        %4286 = vmatpush1.msra.mxu0 %v4252
        %4287 = vmatprep.subr.mxu0 0.0
        %4288 = vmatpush1.msra.mxu0 %v4253
        %4289 = vmatprep.subr.mxu0 0.0
        %4290 = vmatpush1.msra.mxu0 0.0
        %4291 = vmatprep.subr.mxu0 0.0
        %4292 = vmatpush1.msra.mxu0 0.0
        %4293 = vmatprep.subr.mxu0 0.0
        %4294 = vmatpush1.msra.mxu0 0.0
        %4295 = vmatprep.subr.mxu0 0.0
        %4296 = vmatpush1.msra.mxu0 0.0
        %4297 = vmatprep.subr.mxu0 0.0
        %4298 = vmatpush1.msra.mxu0 0.0
        %4299 = vmatprep.subr.mxu0 0.0
        %4300 = vmatpush1.msra.mxu0 0.0
        %4301 = vmatprep.subr.mxu0 0.0
        %4302 = vmatpush1.msra.mxu0 0.0
        %4303 = vmatprep.subr.mxu0 0.0
        %4304 = vmatpush1.msra.mxu0 0.0
        %4305 = vmatprep.subr.mxu0 0.0
        %4306 = vmatpush1.msra.mxu0 0.0
        %4307 = vmatprep.subr.mxu0 0.0
        %4308 = vmatpush1.msra.mxu0 0.0
        %4309 = vmatprep.subr.mxu0 0.0
        %4310 = vmatpush1.msra.mxu0 0.0
        %4311 = vmatprep.subr.mxu0 0.0
        %4312 = vmatpush1.msra.mxu0 0.0
        %4313 = vmatprep.subr.mxu0 0.0
        %4314 = vmatpush1.msra.mxu0 0.0
        %4315 = vmatprep.subr.mxu0 0.0
        %4316 = vmatpush1.msra.mxu0 0.0
        %4317 = vmatprep.subr.mxu0 0.0
        %4318 = vmatpush1.msra.mxu0 0.0
        %4319 = vmatprep.subr.mxu0 0.0
        %4320 = vmatpush1.msra.mxu0 0.0
        %4321 = vmatprep.subr.mxu0 0.0
        %4322 = vmatpush1.msra.mxu0 0.0
        %4323 = vmatprep.mubr.f32.mxu0 0.0
        %4324 = vmatmul.mubr.f32.gmra.mrb[0].mxu0 %v4257
        %v4325 = vpop.f32.mrb[0].mxu0
        %v4326 = vadd.f32 %v4254, %v4325
        %v4327 = vpop.f32.mrb[0].mxu0
        %4328 = vdwg.mxu0
        %v4329 = vmax.f32 %v4326, 0.0
        %v4330 = vld [vmem:[%s17] sm:$0xff]
        %v4331 = vld [vmem:[%s17 + $0x8] sm:$0xff]
        %v4332 = vld [vmem:[%s17 + $0x10] sm:$0xff]
        %v4333 = vld [vmem:[%s17 + $0x18] sm:$0xff]
        %v4334 = vld [vmem:[%s17 + $0x20] sm:$0xff]
        %v4335 = vld [vmem:[%s17 + $0x28] sm:$0xff]
        %v4336 = vld [vmem:[%s17 + $0x30] sm:$0xff]
        %v4337 = vld [vmem:[%s17 + $0x38] sm:$0xff]
        %v4338 = vld [vmem:[%s17 + $0x40] sm:$0xff]
        %v4339 = vld [vmem:[%s17 + $0x48] sm:$0xff]
        %v4340 = vld [vmem:[%s17 + $0x50] sm:$0xf]
        %v4341 = vld [vmem:[%s18] sm:$0x1]
        %v4343 = vsel %vm2857, %v4329, 0
        %v4346 = vsel %vm2483, %v4340, 0
        %4348 = vmatprep.subr.mxu0 0.0
        %4349 = vmatpush1.msra.mxu0 %v4330
        %4350 = vmatprep.subr.mxu0 0.0
        %4351 = vmatpush1.msra.mxu0 %v4331
        %4352 = vmatprep.subr.mxu0 0.0
        %4353 = vmatpush1.msra.mxu0 %v4332
        %4354 = vmatprep.subr.mxu0 0.0
        %4355 = vmatpush1.msra.mxu0 %v4333
        %4356 = vmatprep.subr.mxu0 0.0
        %4357 = vmatpush1.msra.mxu0 %v4334
        %4358 = vmatprep.subr.mxu0 0.0
        %4359 = vmatpush1.msra.mxu0 %v4335
        %4360 = vmatprep.subr.mxu0 0.0
        %4361 = vmatpush1.msra.mxu0 %v4336
        %4362 = vmatprep.subr.mxu0 0.0
        %4363 = vmatpush1.msra.mxu0 %v4337
        %4364 = vmatprep.subr.mxu0 0.0
        %4365 = vmatpush1.msra.mxu0 %v4338
        %4366 = vmatprep.subr.mxu0 0.0
        %4367 = vmatpush1.msra.mxu0 %v4339
        %4368 = vmatprep.subr.mxu0 0.0
        %4369 = vmatpush1.msra.mxu0 %v4346
        %4370 = vmatprep.subr.mxu0 0.0
        %4371 = vmatpush1.msra.mxu0 0.0
        %4372 = vmatprep.subr.mxu0 0.0
        %4373 = vmatpush1.msra.mxu0 0.0
        %4374 = vmatprep.subr.mxu0 0.0
        %4375 = vmatpush1.msra.mxu0 0.0
        %4376 = vmatprep.subr.mxu0 0.0
        %4377 = vmatpush1.msra.mxu0 0.0
        %4378 = vmatprep.subr.mxu0 0.0
        %4379 = vmatpush1.msra.mxu0 0.0
        %4380 = vmatprep.subr.mxu0 0.0
        %4381 = vmatpush1.msra.mxu0 0.0
        %4382 = vmatprep.subr.mxu0 0.0
        %4383 = vmatpush1.msra.mxu0 0.0
        %4384 = vmatprep.subr.mxu0 0.0
        %4385 = vmatpush1.msra.mxu0 0.0
        %4386 = vmatprep.subr.mxu0 0.0
        %4387 = vmatpush1.msra.mxu0 0.0
        %4388 = vmatprep.subr.mxu0 0.0
        %4389 = vmatpush1.msra.mxu0 0.0
        %4390 = vmatprep.subr.mxu0 0.0
        %4391 = vmatpush1.msra.mxu0 0.0
        %4392 = vmatprep.subr.mxu0 0.0
        %4393 = vmatpush1.msra.mxu0 0.0
        %4394 = vmatprep.subr.mxu0 0.0
        %4395 = vmatpush1.msra.mxu0 0.0
        %4396 = vmatprep.subr.mxu0 0.0
        %4397 = vmatpush1.msra.mxu0 0.0
        %4398 = vmatprep.subr.mxu0 0.0
        %4399 = vmatpush1.msra.mxu0 0.0
        %4400 = vmatprep.subr.mxu0 0.0
        %4401 = vmatpush1.msra.mxu0 0.0
        %4402 = vmatprep.subr.mxu0 0.0
        %4403 = vmatpush1.msra.mxu0 0.0
        %4404 = vmatprep.subr.mxu0 0.0
        %4405 = vmatpush1.msra.mxu0 0.0
        %4406 = vmatprep.subr.mxu0 0.0
        %4407 = vmatpush1.msra.mxu0 0.0
        %4408 = vmatprep.subr.mxu0 0.0
        %4409 = vmatpush1.msra.mxu0 0.0
        %4410 = vmatprep.subr.mxu0 0.0
        %4411 = vmatpush1.msra.mxu0 0.0
        %4412 = vmatprep.mubr.f32.mxu0 0.0
        %4413 = vmatmul.mubr.f32.gmra.mrb[0].mxu0 %v4343
        %v4414 = vpop.f32.mrb[0].mxu0
        %v4415 = vadd.f32 %v4341, %v4414
        %v4416 = vpop.f32.mrb[0].mxu0
        %4417 = vdwg.mxu0
        %vm4418 = vcmask 73728
        %4419 = vst.msk [vmem:[%s624] sm:$0x1] %vm4418, %v4415
        %s4420 = sand.u32 %s447, 1
        %s4421 = scalar_lea.sflag [#allocation6], %s4420
        %s4422 = sand.u32 %s447, 1
        %s4423 = scalar_lea.vmem [#allocation9], %s4422
        // Predicated region
        $region105: #{cnn_cifar_forward.1} parent=95 // pred_check
          %p4424 = pneg %p457
        $region106: #{cnn_cifar_forward.1} parent=95 // pred_check_branch
          %4426 = sbr.rel (%p4424) target = $region108
        $region107: #{cnn_cifar_forward.1} parent=95 // pred_region
          %s4428 = ssub.s32 16, 16
          %4429 = vsyncadd %s4421, %s4428
          %s4430 = smul.addr %s35, 16
          %s4431 = scalar_lea.hbm %s19, %s4430
          %s4433 = sshll.u32 %s4423, 4
          %s4434 = int_to_ptr.vmem [resolvable:$true] %s4433
          %4436 = dma.vmem_to_hbm [thread:$0]  %s4434, 16, %s4431, %s4421
        $region108: #{cnn_cifar_forward.1} parent=95 // pred_fallthru
          _
      $region96: #{cnn_cifar_forward.1} parent=5 // pred_fallthru
        _
      %p4437 = scmp.le.s32.totalorder 2, %s30
      // Predicated region
      $region109: #{cnn_cifar_forward.1} parent=5 // pred_check
        %p4438 = pneg %p4437
      $region110: #{cnn_cifar_forward.1} parent=5 // pred_check_branch
        %4440 = sbr.rel (%p4438) target = $region112
      $region111: #{cnn_cifar_forward.1} parent=5 // pred_region
        %s4441 = ssub.s32 %s30, 2
        // Predicated region
        $region113: #{cnn_cifar_forward.1} parent=111 // pred_check
          %p4442 = pneg %p463
        $region114: #{cnn_cifar_forward.1} parent=111 // pred_check_branch
          %4444 = sbr.rel (%p4442) target = $region116
        $region115: #{cnn_cifar_forward.1} parent=111 // pred_region
          %s4445 = sand.u32 %s448, 1
          %s4446 = scalar_lea.sflag [#allocation6], %s4445
          %s4447 = sand.u32 %s448, 1
          %s4448 = scalar_lea.vmem [#allocation9], %s4447
          %4449 = dma.done %s4446, 16
        $region116: #{cnn_cifar_forward.1} parent=111 // pred_fallthru
          _
      $region112: #{cnn_cifar_forward.1} parent=5 // pred_fallthru
        _
    $region6: #{cnn_cifar_forward.1} parent=1 // loop_footer
      %s34 = sadd.s32 1, %s30
    $region7: #{cnn_cifar_forward.1} parent=1 // loop_footer_branch
      %29 = sbr.rel target = $region3
    $region8: #{cnn_cifar_forward.1} parent=1 // loop_exit
      _
    %4450 = vsyncpa [#allocation5], 1
    %s4451 = scalar_lea.sflag [#allocation5], 1
    %4452 = vsyncpa %s4451, 1
    %4453 = vsyncpa [#allocation8], 1
    %4454 = vsyncpa [#allocation6], 1
    %s4455 = scalar_lea.sflag [#allocation6], 1
    %4456 = vsyncpa %s4455, 1

</llo_original>
